<compile_context>
chip_gen: v7x
topology: tpu7x:2x2x1
jax: 0.10.0
libtpu: 0.0.40
codegen_flags: <defaults>
</compile_context>

<pallas_src>
import functools

import numpy as np
import jax
import jax.numpy as jnp
from jax.experimental import pallas as pl
from jax.experimental.pallas import tpu as pltpu


# ----------------------------------------------------------------------------
# Shape helpers
# ----------------------------------------------------------------------------
def _round_up(x, m):
    return (x + m - 1) // m * m


def _conv_out(h, k, s):
    return (h - k) // s + 1


def _trunk_dims(input_shape):
    C, H, W = input_shape
    oh1, ow1 = _conv_out(H, 8, 4), _conv_out(W, 8, 4)
    oh2, ow2 = _conv_out(oh1, 4, 2), _conv_out(ow1, 4, 2)
    oh3, ow3 = _conv_out(oh2, 3, 1), _conv_out(ow2, 3, 1)
    # The stride-free (space-to-depth) formulation needs an even conv1 output,
    # i.e. H, W == 4 (mod 8).  Holds for Atari 84x84 and for the 36x36 test.
    assert oh1 % 2 == 0 and ow1 % 2 == 0, "need H, W == 4 (mod 8) (e.g. 36, 84)"
    assert oh3 >= 1 and ow3 >= 1
    Hp, Wp = _round_up(H, 8), _round_up(W, 8)
    return dict(
        C=C, H=H, W=W, Hp=Hp, Wp=Wp, HB=Hp // 8, WB=Wp // 8, C0=64 * C,
        G1H=oh1 // 2, G1W=ow1 // 2,
        OH2=oh2, OW2=ow2, OH3=oh3, OW3=ow3,
        conv_out=64 * oh3 * ow3,
    )


def _pick_tb(batch):
    """Samples per trunk grid step: amortize step overhead, keep >=2 steps."""
    for t in (4, 2):
        if batch % t == 0 and batch // t >= 2:
            return t
    return 1


def _choose_head_tiling(m):
    """Row tile for the heads: 16-aligned, <=256, >=2 grid steps when possible."""
    if m < 32:
        return m, m                      # single block == full array (legal)
    mp = _round_up(m, 16)
    tm = min(256, mp)
    while mp % tm:
        tm -= 16
    if mp // tm < 2:                     # let ("parallel",) shard across v7x TCs
        tm = max(16, (mp // 2) // 16 * 16)
        while mp % tm:
            tm -= 16
    return mp, tm


# ----------------------------------------------------------------------------
# Fused conv trunk kernel: conv1 + conv2 + conv3, all in VMEM per batch tile.
# ----------------------------------------------------------------------------
def _trunk_kernel(a0_ref, w1_ref, b1_ref, w2_ref, b2_ref, w3_ref, b3_ref,
                  o_ref, p1_ref, p2_ref, p3_ref, *, tb, d):
    C0, G1H, G1W = d["C0"], d["G1H"], d["G1W"]
    OH2, OW2, OH3, OW3 = d["OH2"], d["OW2"], d["OH3"], d["OW3"]

    for s in range(tb):
        # ---- conv1 (8x8, stride 4) == 2x2 stride-1 conv on the s2d(8) input;
        #      output lanes = (2x2 pixel group) x 32 = 128 (lane-dense).
        for gi in range(G1H):
            for a in range(2):
                for b in range(2):
                    k = a * 2 + b
                    p1_ref[gi * G1W:(gi + 1) * G1W, k * C0:(k + 1) * C0] = (
                        a0_ref[s, gi + a, b:b + G1W, :].astype(jnp.float32))
        h1 = jnp.dot(p1_ref[...].astype(jnp.bfloat16), w1_ref[...],
                     preferred_element_type=jnp.float32)
        h1 = jnp.maximum(h1 + b1_ref[...], 0.0)            # (G1H*G1W, 128)

        # ---- conv2 (4x4, stride 2) == 2x2 stride-1 conv over the grouped h1.
        for i in range(OH2):
            for a in range(2):
                for b in range(2):
                    k = a * 2 + b
                    src = h1[(i + a) * G1W + b:(i + a) * G1W + b + OW2, :]
                    p2_ref[i * OW2:(i + 1) * OW2, k * 128:(k + 1) * 128] = src
        h2 = jnp.dot(p2_ref[...].astype(jnp.bfloat16), w2_ref[...],
                     preferred_element_type=jnp.float32)
        h2 = jnp.maximum(h2 + b2_ref[...], 0.0)             # (OH2*OW2, 64)

        # ---- conv3 (3x3, stride 1).
        for i in range(OH3):
            for a in range(3):
                for b in range(3):
                    k = a * 3 + b
                    src = h2[(i + a) * OW2 + b:(i + a) * OW2 + b + OW3, :]
                    p3_ref[i * OW3:(i + 1) * OW3, k * 64:(k + 1) * 64] = src
        h3 = jnp.dot(p3_ref[...].astype(jnp.bfloat16), w3_ref[...],
                     preferred_element_type=jnp.float32)
        h3 = jnp.maximum(h3 + b3_ref[...], 0.0)             # (OH3*OW3, 64)

        o_ref[s, :, :] = h3.astype(o_ref.dtype)


def conv_trunk(a0, tw, d, tb):
    B, HB, WB, C0 = a0.shape
    assert B % tb == 0
    P3 = d["OH3"] * d["OW3"]
    M1, M2 = d["G1H"] * d["G1W"], d["OH2"] * d["OW2"]
    K1, K2, K3 = 4 * C0, 4 * 128, 9 * 64
    flops = 2 * B * (M1 * K1 * 128 + M2 * K2 * 64 + P3 * K3 * 64)
    bytes_accessed = int(a0.size * 2 + B * P3 * 64 * 2
                         + (K1 * 128 + K2 * 64 + K3 * 64) * 2
                         + (128 + 64 + 64) * 4)
    kernel = functools.partial(_trunk_kernel, tb=tb, d=d)
    return pl.pallas_call(
        kernel,
        out_shape=jax.ShapeDtypeStruct((B, P3, 64), jnp.bfloat16),
        grid_spec=pltpu.PrefetchScalarGridSpec(
            num_scalar_prefetch=0,
            grid=(B // tb,),
            in_specs=[
                pl.BlockSpec((tb, HB, WB, C0), lambda i: (i, 0, 0, 0)),
                pl.BlockSpec((K1, 128), lambda i: (0, 0)),
                pl.BlockSpec((1, 128), lambda i: (0, 0)),
                pl.BlockSpec((K2, 64), lambda i: (0, 0)),
                pl.BlockSpec((1, 64), lambda i: (0, 0)),
                pl.BlockSpec((K3, 64), lambda i: (0, 0)),
                pl.BlockSpec((1, 64), lambda i: (0, 0)),
            ],
            out_specs=pl.BlockSpec((tb, P3, 64), lambda i: (i, 0, 0)),
            scratch_shapes=[
                pltpu.VMEM((M1, K1), jnp.float32),
                pltpu.VMEM((M2, K2), jnp.float32),
                pltpu.VMEM((P3, K3), jnp.float32),
            ]),
        compiler_params=pltpu.CompilerParams(
            dimension_semantics=("parallel",),
            vmem_limit_bytes=32 * 1024 * 1024),
        cost_estimate=pl.CostEstimate(
            flops=flops, transcendentals=0, bytes_accessed=bytes_accessed),
    )(a0, tw["c1_w"], tw["c1_b"], tw["c2_w"], tw["c2_b"], tw["c3_w"], tw["c3_b"])


# ----------------------------------------------------------------------------
# Fused policy+value heads: hidden (tm, 1024) stays on chip.
# ----------------------------------------------------------------------------
def _head_kernel(x_ref, w1_ref, b1_ref, w2_ref, b2_ref, o_ref):
    h = jnp.dot(x_ref[...], w1_ref[...], preferred_element_type=jnp.float32)
    h = jnp.maximum(h + b1_ref[...], 0.0)
    o = jnp.dot(h.astype(jnp.bfloat16), w2_ref[...],
                preferred_element_type=jnp.float32)
    o_ref[...] = o + b2_ref[...]


def fused_heads(flat, w1, b1, w2, b2):
    M, K = flat.shape
    H = w1.shape[1]
    NP = w2.shape[1]
    assert w1.shape[0] == K and w2.shape[0] == H and NP % 128 == 0
    mp, tm = _choose_head_tiling(M)
    if mp != M:
        flat = jnp.pad(flat, ((0, mp - M), (0, 0)))
    flops = 2 * mp * (K * H + H * NP)
    bytes_accessed = int(mp * K * 2 + (K * H + H * NP) * 2 + (H + NP) * 4
                         + mp * NP * 4)
    out = pl.pallas_call(
        _head_kernel,
        out_shape=jax.ShapeDtypeStruct((mp, NP), jnp.float32),
        grid_spec=pltpu.PrefetchScalarGridSpec(
            num_scalar_prefetch=0,
            grid=(mp // tm,),
            in_specs=[
                pl.BlockSpec((tm, K), lambda i: (i, 0)),
                pl.BlockSpec((K, H), lambda i: (0, 0)),
                pl.BlockSpec((1, H), lambda i: (0, 0)),
                pl.BlockSpec((H, NP), lambda i: (0, 0)),
                pl.BlockSpec((1, NP), lambda i: (0, 0)),
            ],
            out_specs=pl.BlockSpec((tm, NP), lambda i: (i, 0)),
        ),
        compiler_params=pltpu.CompilerParams(
            dimension_semantics=("parallel",),
            vmem_limit_bytes=32 * 1024 * 1024),
        cost_estimate=pl.CostEstimate(
            flops=flops, transcendentals=0, bytes_accessed=bytes_accessed),
    )(flat, w1, b1, w2, b2)
    return out[:M]


# ----------------------------------------------------------------------------
# Parameter init (PyTorch-like uniform) and one-time device-layout preparation.
# ----------------------------------------------------------------------------
def init_params(key, input_shape, n_actions):
    C, H, W = input_shape
    h1, w1 = _conv_out(H, 8, 4), _conv_out(W, 8, 4)
    h2, w2 = _conv_out(h1, 4, 2), _conv_out(w1, 4, 2)
    h3, w3 = _conv_out(h2, 3, 1), _conv_out(w2, 3, 1)
    conv_out = 64 * h3 * w3
    ks = jax.random.split(key, 14)

    def u(k, shape, fan_in):
        bound = 1.0 / (fan_in ** 0.5)
        return jax.random.uniform(k, shape, jnp.float32, -bound, bound)

    return {
        "c1_w": u(ks[0], (32, C, 8, 8), C * 8 * 8),
        "c1_b": u(ks[1], (32,), C * 8 * 8),
        "c2_w": u(ks[2], (64, 32, 4, 4), 32 * 4 * 4),
        "c2_b": u(ks[3], (64,), 32 * 4 * 4),
        "c3_w": u(ks[4], (64, 64, 3, 3), 64 * 3 * 3),
        "c3_b": u(ks[5], (64,), 64 * 3 * 3),
        "p1_w": u(ks[6], (512, conv_out), conv_out),
        "p1_b": u(ks[7], (512,), conv_out),
        "p2_w": u(ks[8], (n_actions, 512), 512),
        "p2_b": u(ks[9], (n_actions,), 512),
        "v1_w": u(ks[10], (512, conv_out), conv_out),
        "v1_b": u(ks[11], (512,), conv_out),
        "v2_w": u(ks[12], (1, 512), 512),
        "v2_b": u(ks[13], (1,), 512),
    }


def prepare_params(params, input_shape, n_actions):
    """One-time layout/dtype prep (host side): nothing recomputed per forward."""
    d = _trunk_dims(input_shape)
    C, C0 = d["C"], d["C0"]
    oh3, ow3, conv_out = d["OH3"], d["OW3"], d["conv_out"]

    p = {k: np.asarray(jax.device_get(v), np.float32) for k, v in params.items()}

    # conv1: fold x/256 (power of two -> exact); K blocks (a,b) with lane order
    # (ry, rx, c); output lanes (r, q, oc) = the 2x2 pixel group.
    w1 = p["c1_w"] / 256.0
    W1g = np.zeros((2, 2, 8, 8, C, 2, 2, 32), np.float32)
    for a in range(2):
        for b in range(2):
            for r in range(2):
                for q in range(2):
                    for ry in range(8):
                        ki = 8 * a + ry - 4 * r
                        if not 0 <= ki < 8:
                            continue
                        for rx in range(8):
                            kj = 8 * b + rx - 4 * q
                            if not 0 <= kj < 8:
                                continue
                            W1g[a, b, ry, rx, :, r, q, :] = w1[:, :, ki, kj].T
    W1g = W1g.reshape(4 * C0, 128)
    b1g = np.tile(p["c1_b"], 4).reshape(1, 128)

    # conv2: 2x2 stride-1 conv over the grouped h1; K blocks (a,b), lanes (r,q,c).
    W2g = np.zeros((2, 2, 2, 2, 32, 64), np.float32)
    for a in range(2):
        for b in range(2):
            for r in range(2):
                for q in range(2):
                    W2g[a, b, r, q, :, :] = p["c2_w"][:, :, 2 * a + r, 2 * b + q].T
    W2g = W2g.reshape(4 * 128, 64)
    b2g = p["c2_b"].reshape(1, 64)

    # conv3: standard 3x3 stride-1 im2col matrix, K order (ki, kj, c).
    W3m = p["c3_w"].transpose(2, 3, 1, 0).reshape(9 * 64, 64)
    b3g = p["c3_b"].reshape(1, 64)

    # Heads: permute Linear fan-in from torch NCHW flatten to our (h, w, c)
    # flatten, then fuse policy/value layer-1 side by side and layer-2
    # block-diagonally (policy rows 0:512, value rows 512:1024).
    def to_hwc_fanin(w_lin):
        o = w_lin.shape[0]
        return (w_lin.reshape(o, 64, oh3, ow3).transpose(0, 2, 3, 1)
                .reshape(o, conv_out))

    p1 = to_hwc_fanin(p["p1_w"])
    v1 = to_hwc_fanin(p["v1_w"])
    w1h = np.concatenate([p1.T, v1.T], axis=1)                    # (conv_out, 1024)
    b1h = np.concatenate([p["p1_b"], p["v1_b"]]).reshape(1, 1024)

    npad = max(128, _round_up(n_actions + 1, 128))
    w2h = np.zeros((1024, npad), np.float32)
    w2h[:512, :n_actions] = p["p2_w"].T
    w2h[512:, n_actions] = p["v2_w"][0]
    b2h = np.zeros((1, npad), np.float32)
    b2h[0, :n_actions] = p["p2_b"]
    b2h[0, n_actions] = p["v2_b"][0]

    trunk = {
        "c1_w": jnp.asarray(W1g, jnp.bfloat16),
        "c1_b": jnp.asarray(b1g, jnp.float32),
        "c2_w": jnp.asarray(W2g, jnp.bfloat16),
        "c2_b": jnp.asarray(b2g, jnp.float32),
        "c3_w": jnp.asarray(W3m, jnp.bfloat16),
        "c3_b": jnp.asarray(b3g, jnp.float32),
    }
    heads = {
        "w1": jnp.asarray(w1h, jnp.bfloat16),
        "b1": jnp.asarray(b1h, jnp.float32),
        "w2": jnp.asarray(w2h, jnp.bfloat16),
        "b2": jnp.asarray(b2h, jnp.float32),
    }
    return {"trunk": trunk, "heads": heads}


# ----------------------------------------------------------------------------
# Forward pass: (policy_logits, value), matching AtariA2C.forward semantics.
# ----------------------------------------------------------------------------
def atari_a2c_forward(prep, x_u8, *, input_shape, n_actions):
    d = _trunk_dims(input_shape)
    B = x_u8.shape[0]
    # x.float()/256: the /256 is folded into conv1 weights; uint8 is exact in bf16.
    x = jnp.transpose(x_u8, (0, 2, 3, 1)).astype(jnp.bfloat16)    # NCHW -> NHWC once
    x = jnp.pad(x, ((0, 0), (0, d["Hp"] - d["H"]), (0, d["Wp"] - d["W"]), (0, 0)))
    # space-to-depth(8): pure layout (exact); makes every conv stride-1 in-kernel.
    a0 = (x.reshape(B, d["HB"], 8, d["WB"], 8, d["C"])
          .transpose(0, 1, 3, 2, 4, 5)
          .reshape(B, d["HB"], d["WB"], d["C0"]))

    tb = _pick_tb(B)
    h3 = conv_trunk(a0, prep["trunk"], d, tb)                     # (B, OH3*OW3, 64)
    flat = h3.reshape(B, d["conv_out"])                           # row-major == (h,w,c)

    out = fused_heads(flat, prep["heads"]["w1"], prep["heads"]["b1"],
                      prep["heads"]["w2"], prep["heads"]["b2"])   # (B, 128) f32
    logits = out[:, :n_actions]
    value = out[:, n_actions:n_actions + 1]
    return logits, value


if __name__ == "__main__":
    # Small Atari-like input: 4 stacked 36x36 frames (minimum spatial size that
    # survives the 8/4 -> 4/2 -> 3/1 conv chain and satisfies H,W == 4 mod 8),
    # batch=2, 6 actions.  Real Atari (84x84) works with the same code.
    INPUT_SHAPE = (4, 36, 36)
    N_ACTIONS = 6
    BATCH = 2

    root = jax.random.PRNGKey(0)
    k_params, k_x = jax.random.split(root)
    params = init_params(k_params, INPUT_SHAPE, N_ACTIONS)
    prep = prepare_params(params, INPUT_SHAPE, N_ACTIONS)

    x = jax.random.randint(k_x, (BATCH,) + INPUT_SHAPE, 0, 256, dtype=jnp.int32)
    x = x.astype(jnp.uint8)

    fwd = jax.jit(functools.partial(atari_a2c_forward,
                                    input_shape=INPUT_SHAPE, n_actions=N_ACTIONS))
    logits, value = fwd(prep, x)
    jax.block_until_ready((logits, value))

    assert logits.shape == (BATCH, N_ACTIONS) and logits.dtype == jnp.float32
    assert value.shape == (BATCH, 1) and value.dtype == jnp.float32
    print("KERNEL_OK")
</pallas_src>

<mosaic_0001>
module attributes {stable_mosaic.version = 11 : i64} {
  func.func @_head_kernel(%arg0: i32, %arg1: memref<2x64xbf16, #tpu.memory_space<vmem>>, %arg2: memref<64x1024xbf16, #tpu.memory_space<vmem>>, %arg3: memref<1x1024xf32, #tpu.memory_space<vmem>>, %arg4: memref<1024x128xbf16, #tpu.memory_space<vmem>>, %arg5: memref<1x128xf32, #tpu.memory_space<vmem>>, %arg6: memref<2x128xf32, #tpu.memory_space<vmem>>) attributes {dimension_semantics = [#tpu.dimension_semantics<parallel>], iteration_bounds = array<i64: 1>, scalar_prefetch = 0 : i64, scratch_operands = 0 : i64, tpu.core_type = #tpu.core_type<tc>, window_params = [{transform_indices = @transform_0, window_bounds = array<i64: 2, 64>}, {pipeline_mode = #tpu.pipeline_mode<synchronous>, transform_indices = @transform_1, window_bounds = array<i64: 64, 1024>}, {pipeline_mode = #tpu.pipeline_mode<synchronous>, transform_indices = @transform_2, window_bounds = array<i64: 1, 1024>}, {pipeline_mode = #tpu.pipeline_mode<synchronous>, transform_indices = @transform_3, window_bounds = array<i64: 1024, 128>}, {pipeline_mode = #tpu.pipeline_mode<synchronous>, transform_indices = @transform_4, window_bounds = array<i64: 1, 128>}, {transform_indices = @transform_5, window_bounds = array<i64: 2, 128>}]} {
    %c0 = arith.constant 0 : index
    %c0_0 = arith.constant 0 : index
    %0 = vector.load %arg1[%c0, %c0_0] : memref<2x64xbf16, #tpu.memory_space<vmem>>, vector<2x64xbf16>
    %c0_1 = arith.constant 0 : index
    %c0_2 = arith.constant 0 : index
    %1 = vector.load %arg2[%c0_1, %c0_2] : memref<64x1024xbf16, #tpu.memory_space<vmem>>, vector<64x1024xbf16>
    %cst = arith.constant dense<0.000000e+00> : vector<2x1024xf32>
    %2 = tpu.matmul %0, %1, %cst {dimension_numbers = #tpu.dot_dimension_numbers<[1], [0], [0], [1], [0, 0, 1, 1], [], []>} : vector<2x64xbf16>, vector<64x1024xbf16>, vector<2x1024xf32> -> vector<2x1024xf32>
    %c0_3 = arith.constant 0 : index
    %c0_4 = arith.constant 0 : index
    %3 = vector.load %arg3[%c0_3, %c0_4] : memref<1x1024xf32, #tpu.memory_space<vmem>>, vector<1x1024xf32>
    %4 = vector.broadcast %3 : vector<1x1024xf32> to vector<2x1024xf32>
    %5 = arith.addf %2, %4 : vector<2x1024xf32>
    %cst_5 = arith.constant 0.000000e+00 : f32
    %6 = vector.broadcast %cst_5 : f32 to vector<2x1024xf32>
    %7 = arith.maximumf %5, %6 : vector<2x1024xf32>
    %8 = arith.truncf %7 : vector<2x1024xf32> to vector<2x1024xbf16>
    %c0_6 = arith.constant 0 : index
    %c0_7 = arith.constant 0 : index
    %9 = vector.load %arg4[%c0_6, %c0_7] : memref<1024x128xbf16, #tpu.memory_space<vmem>>, vector<1024x128xbf16>
    %cst_8 = arith.constant dense<0.000000e+00> : vector<2x128xf32>
    %10 = tpu.matmul %8, %9, %cst_8 {dimension_numbers = #tpu.dot_dimension_numbers<[1], [0], [0], [1], [0, 0, 1, 1], [], []>} : vector<2x1024xbf16>, vector<1024x128xbf16>, vector<2x128xf32> -> vector<2x128xf32>
    %c0_9 = arith.constant 0 : index
    %c0_10 = arith.constant 0 : index
    %11 = vector.load %arg5[%c0_9, %c0_10] : memref<1x128xf32, #tpu.memory_space<vmem>>, vector<1x128xf32>
    %12 = vector.broadcast %11 : vector<1x128xf32> to vector<2x128xf32>
    %13 = arith.addf %10, %12 : vector<2x128xf32>
    %c0_11 = arith.constant 0 : index
    %c0_12 = arith.constant 0 : index
    %14 = vector.load %arg6[%c0_11, %c0_12] : memref<2x128xf32, #tpu.memory_space<vmem>>, vector<2x128xf32>
    tpu.vector_store %arg6[%c0_11, %c0_12], %13 {strides = array<i32>} : memref<2x128xf32, #tpu.memory_space<vmem>>, vector<2x128xf32>,
    return
  }
  func.func @transform_0(%arg0: i32) -> (i32, i32) {
    %c0_i32 = arith.constant 0 : i32
    %c0_i32_0 = arith.constant 0 : i32
    return %arg0, %c0_i32 : i32, i32
  }
  func.func @transform_1(%arg0: i32) -> (i32, i32) {
    %c0_i32 = arith.constant 0 : i32
    %c0_i32_0 = arith.constant 0 : i32
    %c0_i32_1 = arith.constant 0 : i32
    return %c0_i32, %c0_i32_0 : i32, i32
  }
  func.func @transform_2(%arg0: i32) -> (i32, i32) {
    %c0_i32 = arith.constant 0 : i32
    %c0_i32_0 = arith.constant 0 : i32
    %c0_i32_1 = arith.constant 0 : i32
    return %c0_i32, %c0_i32_0 : i32, i32
  }
  func.func @transform_3(%arg0: i32) -> (i32, i32) {
    %c0_i32 = arith.constant 0 : i32
    %c0_i32_0 = arith.constant 0 : i32
    %c0_i32_1 = arith.constant 0 : i32
    return %c0_i32, %c0_i32_0 : i32, i32
  }
  func.func @transform_4(%arg0: i32) -> (i32, i32) {
    %c0_i32 = arith.constant 0 : i32
    %c0_i32_0 = arith.constant 0 : i32
    %c0_i32_1 = arith.constant 0 : i32
    return %c0_i32, %c0_i32_0 : i32, i32
  }
  func.func @transform_5(%arg0: i32) -> (i32, i32) {
    %c0_i32 = arith.constant 0 : i32
    %c0_i32_0 = arith.constant 0 : i32
    return %arg0, %c0_i32 : i32, i32
  }
}

module attributes {stable_mosaic.version = 11 : i64} {
  func.func @_trunk_kernel(%arg0: i32, %arg1: memref<1x5x5x256xbf16, #tpu.memory_space<vmem>>, %arg2: memref<1024x128xbf16, #tpu.memory_space<vmem>>, %arg3: memref<1x128xf32, #tpu.memory_space<vmem>>, %arg4: memref<512x64xbf16, #tpu.memory_space<vmem>>, %arg5: memref<1x64xf32, #tpu.memory_space<vmem>>, %arg6: memref<576x64xbf16, #tpu.memory_space<vmem>>, %arg7: memref<1x64xf32, #tpu.memory_space<vmem>>, %arg8: memref<1x1x64xbf16, #tpu.memory_space<vmem>>, %arg9: memref<16x1024xf32, #tpu.memory_space<vmem>>, %arg10: memref<9x512xf32, #tpu.memory_space<vmem>>, %arg11: memref<1x576xf32, #tpu.memory_space<vmem>>) attributes {dimension_semantics = [#tpu.dimension_semantics<parallel>], iteration_bounds = array<i64: 2>, scalar_prefetch = 0 : i64, scratch_operands = 3 : i64, tpu.core_type = #tpu.core_type<tc>, window_params = [{transform_indices = @transform_0, window_bounds = array<i64: 1, 5, 5, 256>}, {pipeline_mode = #tpu.pipeline_mode<synchronous>, transform_indices = @transform_1, window_bounds = array<i64: 1024, 128>}, {pipeline_mode = #tpu.pipeline_mode<synchronous>, transform_indices = @transform_2, window_bounds = array<i64: 1, 128>}, {pipeline_mode = #tpu.pipeline_mode<synchronous>, transform_indices = @transform_3, window_bounds = array<i64: 512, 64>}, {pipeline_mode = #tpu.pipeline_mode<synchronous>, transform_indices = @transform_4, window_bounds = array<i64: 1, 64>}, {pipeline_mode = #tpu.pipeline_mode<synchronous>, transform_indices = @transform_5, window_bounds = array<i64: 576, 64>}, {pipeline_mode = #tpu.pipeline_mode<synchronous>, transform_indices = @transform_6, window_bounds = array<i64: 1, 64>}, {transform_indices = @transform_7, window_bounds = array<i64: 1, 1, 64>}]} {
    %c0 = arith.constant 0 : index
    %c0_0 = arith.constant 0 : index
    %c0_1 = arith.constant 0 : index
    %c0_2 = arith.constant 0 : index
    %0 = vector.load %arg1[%c0, %c0_0, %c0_1, %c0_2] : memref<1x5x5x256xbf16, #tpu.memory_space<vmem>>, vector<1x1x4x256xbf16>
    %1 = vector.shape_cast %0 : vector<1x1x4x256xbf16> to vector<4x256xbf16>
    %2 = arith.extf %1 : vector<4x256xbf16> to vector<4x256xf32>
    %c0_3 = arith.constant 0 : index
    %c0_4 = arith.constant 0 : index
    %3 = vector.load %arg9[%c0_3, %c0_4] : memref<16x1024xf32, #tpu.memory_space<vmem>>, vector<4x256xf32>
    tpu.vector_store %arg9[%c0_3, %c0_4], %2 {strides = array<i32>} : memref<16x1024xf32, #tpu.memory_space<vmem>>, vector<4x256xf32>,
    %c0_5 = arith.constant 0 : index
    %c0_6 = arith.constant 0 : index
    %c1 = arith.constant 1 : index
    %c0_7 = arith.constant 0 : index
    %4 = vector.load %arg1[%c0_5, %c0_6, %c1, %c0_7] : memref<1x5x5x256xbf16, #tpu.memory_space<vmem>>, vector<1x1x4x256xbf16>
    %5 = vector.shape_cast %4 : vector<1x1x4x256xbf16> to vector<4x256xbf16>
    %6 = arith.extf %5 : vector<4x256xbf16> to vector<4x256xf32>
    %c0_8 = arith.constant 0 : index
    %c256 = arith.constant 256 : index
    %7 = vector.load %arg9[%c0_8, %c256] : memref<16x1024xf32, #tpu.memory_space<vmem>>, vector<4x256xf32>
    tpu.vector_store %arg9[%c0_8, %c256], %6 {strides = array<i32>} : memref<16x1024xf32, #tpu.memory_space<vmem>>, vector<4x256xf32>,
    %c0_9 = arith.constant 0 : index
    %c1_10 = arith.constant 1 : index
    %c0_11 = arith.constant 0 : index
    %c0_12 = arith.constant 0 : index
    %8 = vector.load %arg1[%c0_9, %c1_10, %c0_11, %c0_12] : memref<1x5x5x256xbf16, #tpu.memory_space<vmem>>, vector<1x1x4x256xbf16>
    %9 = vector.shape_cast %8 : vector<1x1x4x256xbf16> to vector<4x256xbf16>
    %10 = arith.extf %9 : vector<4x256xbf16> to vector<4x256xf32>
    %c0_13 = arith.constant 0 : index
    %c512 = arith.constant 512 : index
    %11 = vector.load %arg9[%c0_13, %c512] : memref<16x1024xf32, #tpu.memory_space<vmem>>, vector<4x256xf32>
    tpu.vector_store %arg9[%c0_13, %c512], %10 {strides = array<i32>} : memref<16x1024xf32, #tpu.memory_space<vmem>>, vector<4x256xf32>,
    %c0_14 = arith.constant 0 : index
    %c1_15 = arith.constant 1 : index
    %c1_16 = arith.constant 1 : index
    %c0_17 = arith.constant 0 : index
    %12 = vector.load %arg1[%c0_14, %c1_15, %c1_16, %c0_17] : memref<1x5x5x256xbf16, #tpu.memory_space<vmem>>, vector<1x1x4x256xbf16>
    %13 = vector.shape_cast %12 : vector<1x1x4x256xbf16> to vector<4x256xbf16>
    %14 = arith.extf %13 : vector<4x256xbf16> to vector<4x256xf32>
    %c0_18 = arith.constant 0 : index
    %c768 = arith.constant 768 : index
    %15 = vector.load %arg9[%c0_18, %c768] : memref<16x1024xf32, #tpu.memory_space<vmem>>, vector<4x256xf32>
    tpu.vector_store %arg9[%c0_18, %c768], %14 {strides = array<i32>} : memref<16x1024xf32, #tpu.memory_space<vmem>>, vector<4x256xf32>,
    %c0_19 = arith.constant 0 : index
    %c1_20 = arith.constant 1 : index
    %c0_21 = arith.constant 0 : index
    %c0_22 = arith.constant 0 : index
    %16 = vector.load %arg1[%c0_19, %c1_20, %c0_21, %c0_22] : memref<1x5x5x256xbf16, #tpu.memory_space<vmem>>, vector<1x1x4x256xbf16>
    %17 = vector.shape_cast %16 : vector<1x1x4x256xbf16> to vector<4x256xbf16>
    %18 = arith.extf %17 : vector<4x256xbf16> to vector<4x256xf32>
    %c4 = arith.constant 4 : index
    %c0_23 = arith.constant 0 : index
    %19 = vector.load %arg9[%c4, %c0_23] : memref<16x1024xf32, #tpu.memory_space<vmem>>, vector<4x256xf32>
    tpu.vector_store %arg9[%c4, %c0_23], %18 {strides = array<i32>} : memref<16x1024xf32, #tpu.memory_space<vmem>>, vector<4x256xf32>,
    %c0_24 = arith.constant 0 : index
    %c1_25 = arith.constant 1 : index
    %c1_26 = arith.constant 1 : index
    %c0_27 = arith.constant 0 : index
    %20 = vector.load %arg1[%c0_24, %c1_25, %c1_26, %c0_27] : memref<1x5x5x256xbf16, #tpu.memory_space<vmem>>, vector<1x1x4x256xbf16>
    %21 = vector.shape_cast %20 : vector<1x1x4x256xbf16> to vector<4x256xbf16>
    %22 = arith.extf %21 : vector<4x256xbf16> to vector<4x256xf32>
    %c4_28 = arith.constant 4 : index
    %c256_29 = arith.constant 256 : index
    %23 = vector.load %arg9[%c4_28, %c256_29] : memref<16x1024xf32, #tpu.memory_space<vmem>>, vector<4x256xf32>
    tpu.vector_store %arg9[%c4_28, %c256_29], %22 {strides = array<i32>} : memref<16x1024xf32, #tpu.memory_space<vmem>>, vector<4x256xf32>,
    %c0_30 = arith.constant 0 : index
    %c2 = arith.constant 2 : index
    %c0_31 = arith.constant 0 : index
    %c0_32 = arith.constant 0 : index
    %24 = vector.load %arg1[%c0_30, %c2, %c0_31, %c0_32] : memref<1x5x5x256xbf16, #tpu.memory_space<vmem>>, vector<1x1x4x256xbf16>
    %25 = vector.shape_cast %24 : vector<1x1x4x256xbf16> to vector<4x256xbf16>
    %26 = arith.extf %25 : vector<4x256xbf16> to vector<4x256xf32>
    %c4_33 = arith.constant 4 : index
    %c512_34 = arith.constant 512 : index
    %27 = vector.load %arg9[%c4_33, %c512_34] : memref<16x1024xf32, #tpu.memory_space<vmem>>, vector<4x256xf32>
    tpu.vector_store %arg9[%c4_33, %c512_34], %26 {strides = array<i32>} : memref<16x1024xf32, #tpu.memory_space<vmem>>, vector<4x256xf32>,
    %c0_35 = arith.constant 0 : index
    %c2_36 = arith.constant 2 : index
    %c1_37 = arith.constant 1 : index
    %c0_38 = arith.constant 0 : index
    %28 = vector.load %arg1[%c0_35, %c2_36, %c1_37, %c0_38] : memref<1x5x5x256xbf16, #tpu.memory_space<vmem>>, vector<1x1x4x256xbf16>
    %29 = vector.shape_cast %28 : vector<1x1x4x256xbf16> to vector<4x256xbf16>
    %30 = arith.extf %29 : vector<4x256xbf16> to vector<4x256xf32>
    %c4_39 = arith.constant 4 : index
    %c768_40 = arith.constant 768 : index
    %31 = vector.load %arg9[%c4_39, %c768_40] : memref<16x1024xf32, #tpu.memory_space<vmem>>, vector<4x256xf32>
    tpu.vector_store %arg9[%c4_39, %c768_40], %30 {strides = array<i32>} : memref<16x1024xf32, #tpu.memory_space<vmem>>, vector<4x256xf32>,
    %c0_41 = arith.constant 0 : index
    %c2_42 = arith.constant 2 : index
    %c0_43 = arith.constant 0 : index
    %c0_44 = arith.constant 0 : index
    %32 = vector.load %arg1[%c0_41, %c2_42, %c0_43, %c0_44] : memref<1x5x5x256xbf16, #tpu.memory_space<vmem>>, vector<1x1x4x256xbf16>
    %33 = vector.shape_cast %32 : vector<1x1x4x256xbf16> to vector<4x256xbf16>
    %34 = arith.extf %33 : vector<4x256xbf16> to vector<4x256xf32>
    %c8 = arith.constant 8 : index
    %c0_45 = arith.constant 0 : index
    %35 = vector.load %arg9[%c8, %c0_45] : memref<16x1024xf32, #tpu.memory_space<vmem>>, vector<4x256xf32>
    tpu.vector_store %arg9[%c8, %c0_45], %34 {strides = array<i32>} : memref<16x1024xf32, #tpu.memory_space<vmem>>, vector<4x256xf32>,
    %c0_46 = arith.constant 0 : index
    %c2_47 = arith.constant 2 : index
    %c1_48 = arith.constant 1 : index
    %c0_49 = arith.constant 0 : index
    %36 = vector.load %arg1[%c0_46, %c2_47, %c1_48, %c0_49] : memref<1x5x5x256xbf16, #tpu.memory_space<vmem>>, vector<1x1x4x256xbf16>
    %37 = vector.shape_cast %36 : vector<1x1x4x256xbf16> to vector<4x256xbf16>
    %38 = arith.extf %37 : vector<4x256xbf16> to vector<4x256xf32>
    %c8_50 = arith.constant 8 : index
    %c256_51 = arith.constant 256 : index
    %39 = vector.load %arg9[%c8_50, %c256_51] : memref<16x1024xf32, #tpu.memory_space<vmem>>, vector<4x256xf32>
    tpu.vector_store %arg9[%c8_50, %c256_51], %38 {strides = array<i32>} : memref<16x1024xf32, #tpu.memory_space<vmem>>, vector<4x256xf32>,
    %c0_52 = arith.constant 0 : index
    %c3 = arith.constant 3 : index
    %c0_53 = arith.constant 0 : index
    %c0_54 = arith.constant 0 : index
    %40 = vector.load %arg1[%c0_52, %c3, %c0_53, %c0_54] : memref<1x5x5x256xbf16, #tpu.memory_space<vmem>>, vector<1x1x4x256xbf16>
    %41 = vector.shape_cast %40 : vector<1x1x4x256xbf16> to vector<4x256xbf16>
    %42 = arith.extf %41 : vector<4x256xbf16> to vector<4x256xf32>
    %c8_55 = arith.constant 8 : index
    %c512_56 = arith.constant 512 : index
    %43 = vector.load %arg9[%c8_55, %c512_56] : memref<16x1024xf32, #tpu.memory_space<vmem>>, vector<4x256xf32>
    tpu.vector_store %arg9[%c8_55, %c512_56], %42 {strides = array<i32>} : memref<16x1024xf32, #tpu.memory_space<vmem>>, vector<4x256xf32>,
    %c0_57 = arith.constant 0 : index
    %c3_58 = arith.constant 3 : index
    %c1_59 = arith.constant 1 : index
    %c0_60 = arith.constant 0 : index
    %44 = vector.load %arg1[%c0_57, %c3_58, %c1_59, %c0_60] : memref<1x5x5x256xbf16, #tpu.memory_space<vmem>>, vector<1x1x4x256xbf16>
    %45 = vector.shape_cast %44 : vector<1x1x4x256xbf16> to vector<4x256xbf16>
    %46 = arith.extf %45 : vector<4x256xbf16> to vector<4x256xf32>
    %c8_61 = arith.constant 8 : index
    %c768_62 = arith.constant 768 : index
    %47 = vector.load %arg9[%c8_61, %c768_62] : memref<16x1024xf32, #tpu.memory_space<vmem>>, vector<4x256xf32>
    tpu.vector_store %arg9[%c8_61, %c768_62], %46 {strides = array<i32>} : memref<16x1024xf32, #tpu.memory_space<vmem>>, vector<4x256xf32>,
    %c0_63 = arith.constant 0 : index
    %c3_64 = arith.constant 3 : index
    %c0_65 = arith.constant 0 : index
    %c0_66 = arith.constant 0 : index
    %48 = vector.load %arg1[%c0_63, %c3_64, %c0_65, %c0_66] : memref<1x5x5x256xbf16, #tpu.memory_space<vmem>>, vector<1x1x4x256xbf16>
    %49 = vector.shape_cast %48 : vector<1x1x4x256xbf16> to vector<4x256xbf16>
    %50 = arith.extf %49 : vector<4x256xbf16> to vector<4x256xf32>
    %c12 = arith.constant 12 : index
    %c0_67 = arith.constant 0 : index
    %51 = vector.load %arg9[%c12, %c0_67] : memref<16x1024xf32, #tpu.memory_space<vmem>>, vector<4x256xf32>
    tpu.vector_store %arg9[%c12, %c0_67], %50 {strides = array<i32>} : memref<16x1024xf32, #tpu.memory_space<vmem>>, vector<4x256xf32>,
    %c0_68 = arith.constant 0 : index
    %c3_69 = arith.constant 3 : index
    %c1_70 = arith.constant 1 : index
    %c0_71 = arith.constant 0 : index
    %52 = vector.load %arg1[%c0_68, %c3_69, %c1_70, %c0_71] : memref<1x5x5x256xbf16, #tpu.memory_space<vmem>>, vector<1x1x4x256xbf16>
    %53 = vector.shape_cast %52 : vector<1x1x4x256xbf16> to vector<4x256xbf16>
    %54 = arith.extf %53 : vector<4x256xbf16> to vector<4x256xf32>
    %c12_72 = arith.constant 12 : index
    %c256_73 = arith.constant 256 : index
    %55 = vector.load %arg9[%c12_72, %c256_73] : memref<16x1024xf32, #tpu.memory_space<vmem>>, vector<4x256xf32>
    tpu.vector_store %arg9[%c12_72, %c256_73], %54 {strides = array<i32>} : memref<16x1024xf32, #tpu.memory_space<vmem>>, vector<4x256xf32>,
    %c0_74 = arith.constant 0 : index
    %c4_75 = arith.constant 4 : index
    %c0_76 = arith.constant 0 : index
    %c0_77 = arith.constant 0 : index
    %56 = vector.load %arg1[%c0_74, %c4_75, %c0_76, %c0_77] : memref<1x5x5x256xbf16, #tpu.memory_space<vmem>>, vector<1x1x4x256xbf16>
    %57 = vector.shape_cast %56 : vector<1x1x4x256xbf16> to vector<4x256xbf16>
    %58 = arith.extf %57 : vector<4x256xbf16> to vector<4x256xf32>
    %c12_78 = arith.constant 12 : index
    %c512_79 = arith.constant 512 : index
    %59 = vector.load %arg9[%c12_78, %c512_79] : memref<16x1024xf32, #tpu.memory_space<vmem>>, vector<4x256xf32>
    tpu.vector_store %arg9[%c12_78, %c512_79], %58 {strides = array<i32>} : memref<16x1024xf32, #tpu.memory_space<vmem>>, vector<4x256xf32>,
    %c0_80 = arith.constant 0 : index
    %c4_81 = arith.constant 4 : index
    %c1_82 = arith.constant 1 : index
    %c0_83 = arith.constant 0 : index
    %60 = vector.load %arg1[%c0_80, %c4_81, %c1_82, %c0_83] : memref<1x5x5x256xbf16, #tpu.memory_space<vmem>>, vector<1x1x4x256xbf16>
    %61 = vector.shape_cast %60 : vector<1x1x4x256xbf16> to vector<4x256xbf16>
    %62 = arith.extf %61 : vector<4x256xbf16> to vector<4x256xf32>
    %c12_84 = arith.constant 12 : index
    %c768_85 = arith.constant 768 : index
    %63 = vector.load %arg9[%c12_84, %c768_85] : memref<16x1024xf32, #tpu.memory_space<vmem>>, vector<4x256xf32>
    tpu.vector_store %arg9[%c12_84, %c768_85], %62 {strides = array<i32>} : memref<16x1024xf32, #tpu.memory_space<vmem>>, vector<4x256xf32>,
    %c0_86 = arith.constant 0 : index
    %c0_87 = arith.constant 0 : index
    %64 = vector.load %arg9[%c0_86, %c0_87] : memref<16x1024xf32, #tpu.memory_space<vmem>>, vector<16x1024xf32>
    %65 = arith.truncf %64 : vector<16x1024xf32> to vector<16x1024xbf16>
    %c0_88 = arith.constant 0 : index
    %c0_89 = arith.constant 0 : index
    %66 = vector.load %arg2[%c0_88, %c0_89] : memref<1024x128xbf16, #tpu.memory_space<vmem>>, vector<1024x128xbf16>
    %cst = arith.constant dense<0.000000e+00> : vector<16x128xf32>
    %67 = tpu.matmul %65, %66, %cst {dimension_numbers = #tpu.dot_dimension_numbers<[1], [0], [0], [1], [0, 0, 1, 1], [], []>} : vector<16x1024xbf16>, vector<1024x128xbf16>, vector<16x128xf32> -> vector<16x128xf32>
    %c0_90 = arith.constant 0 : index
    %c0_91 = arith.constant 0 : index
    %68 = vector.load %arg3[%c0_90, %c0_91] : memref<1x128xf32, #tpu.memory_space<vmem>>, vector<1x128xf32>
    %69 = vector.broadcast %68 : vector<1x128xf32> to vector<16x128xf32>
    %70 = arith.addf %67, %69 : vector<16x128xf32>
    %cst_92 = arith.constant 0.000000e+00 : f32
    %71 = vector.broadcast %cst_92 : f32 to vector<16x128xf32>
    %72 = arith.maximumf %70, %71 : vector<16x128xf32>
    %73 = vector.extract_strided_slice %72 {offsets = [0, 0], sizes = [3, 128], strides = [1, 1]} : vector<16x128xf32> to vector<3x128xf32>
    %c0_93 = arith.constant 0 : index
    %c0_94 = arith.constant 0 : index
    %74 = vector.load %arg10[%c0_93, %c0_94] : memref<9x512xf32, #tpu.memory_space<vmem>>, vector<3x128xf32>
    tpu.vector_store %arg10[%c0_93, %c0_94], %73 {strides = array<i32>} : memref<9x512xf32, #tpu.memory_space<vmem>>, vector<3x128xf32>,
    %75 = vector.extract_strided_slice %72 {offsets = [1, 0], sizes = [3, 128], strides = [1, 1]} : vector<16x128xf32> to vector<3x128xf32>
    %c0_95 = arith.constant 0 : index
    %c128 = arith.constant 128 : index
    %76 = vector.load %arg10[%c0_95, %c128] : memref<9x512xf32, #tpu.memory_space<vmem>>, vector<3x128xf32>
    tpu.vector_store %arg10[%c0_95, %c128], %75 {strides = array<i32>} : memref<9x512xf32, #tpu.memory_space<vmem>>, vector<3x128xf32>,
    %77 = vector.extract_strided_slice %72 {offsets = [4, 0], sizes = [3, 128], strides = [1, 1]} : vector<16x128xf32> to vector<3x128xf32>
    %c0_96 = arith.constant 0 : index
    %c256_97 = arith.constant 256 : index
    %78 = vector.load %arg10[%c0_96, %c256_97] : memref<9x512xf32, #tpu.memory_space<vmem>>, vector<3x128xf32>
    tpu.vector_store %arg10[%c0_96, %c256_97], %77 {strides = array<i32>} : memref<9x512xf32, #tpu.memory_space<vmem>>, vector<3x128xf32>,
    %79 = vector.extract_strided_slice %72 {offsets = [5, 0], sizes = [3, 128], strides = [1, 1]} : vector<16x128xf32> to vector<3x128xf32>
    %c0_98 = arith.constant 0 : index
    %c384 = arith.constant 384 : index
    %80 = vector.load %arg10[%c0_98, %c384] : memref<9x512xf32, #tpu.memory_space<vmem>>, vector<3x128xf32>
    tpu.vector_store %arg10[%c0_98, %c384], %79 {strides = array<i32>} : memref<9x512xf32, #tpu.memory_space<vmem>>, vector<3x128xf32>,
    %81 = vector.extract_strided_slice %72 {offsets = [4, 0], sizes = [3, 128], strides = [1, 1]} : vector<16x128xf32> to vector<3x128xf32>
    %c3_99 = arith.constant 3 : index
    %c0_100 = arith.constant 0 : index
    %82 = vector.load %arg10[%c3_99, %c0_100] : memref<9x512xf32, #tpu.memory_space<vmem>>, vector<3x128xf32>
    tpu.vector_store %arg10[%c3_99, %c0_100], %81 {strides = array<i32>} : memref<9x512xf32, #tpu.memory_space<vmem>>, vector<3x128xf32>,
    %83 = vector.extract_strided_slice %72 {offsets = [5, 0], sizes = [3, 128], strides = [1, 1]} : vector<16x128xf32> to vector<3x128xf32>
    %c3_101 = arith.constant 3 : index
    %c128_102 = arith.constant 128 : index
    %84 = vector.load %arg10[%c3_101, %c128_102] : memref<9x512xf32, #tpu.memory_space<vmem>>, vector<3x128xf32>
    tpu.vector_store %arg10[%c3_101, %c128_102], %83 {strides = array<i32>} : memref<9x512xf32, #tpu.memory_space<vmem>>, vector<3x128xf32>,
    %85 = vector.extract_strided_slice %72 {offsets = [8, 0], sizes = [3, 128], strides = [1, 1]} : vector<16x128xf32> to vector<3x128xf32>
    %c3_103 = arith.constant 3 : index
    %c256_104 = arith.constant 256 : index
    %86 = vector.load %arg10[%c3_103, %c256_104] : memref<9x512xf32, #tpu.memory_space<vmem>>, vector<3x128xf32>
    tpu.vector_store %arg10[%c3_103, %c256_104], %85 {strides = array<i32>} : memref<9x512xf32, #tpu.memory_space<vmem>>, vector<3x128xf32>,
    %87 = vector.extract_strided_slice %72 {offsets = [9, 0], sizes = [3, 128], strides = [1, 1]} : vector<16x128xf32> to vector<3x128xf32>
    %c3_105 = arith.constant 3 : index
    %c384_106 = arith.constant 384 : index
    %88 = vector.load %arg10[%c3_105, %c384_106] : memref<9x512xf32, #tpu.memory_space<vmem>>, vector<3x128xf32>
    tpu.vector_store %arg10[%c3_105, %c384_106], %87 {strides = array<i32>} : memref<9x512xf32, #tpu.memory_space<vmem>>, vector<3x128xf32>,
    %89 = vector.extract_strided_slice %72 {offsets = [8, 0], sizes = [3, 128], strides = [1, 1]} : vector<16x128xf32> to vector<3x128xf32>
    %c6 = arith.constant 6 : index
    %c0_107 = arith.constant 0 : index
    %90 = vector.load %arg10[%c6, %c0_107] : memref<9x512xf32, #tpu.memory_space<vmem>>, vector<3x128xf32>
    tpu.vector_store %arg10[%c6, %c0_107], %89 {strides = array<i32>} : memref<9x512xf32, #tpu.memory_space<vmem>>, vector<3x128xf32>,
    %91 = vector.extract_strided_slice %72 {offsets = [9, 0], sizes = [3, 128], strides = [1, 1]} : vector<16x128xf32> to vector<3x128xf32>
    %c6_108 = arith.constant 6 : index
    %c128_109 = arith.constant 128 : index
    %92 = vector.load %arg10[%c6_108, %c128_109] : memref<9x512xf32, #tpu.memory_space<vmem>>, vector<3x128xf32>
    tpu.vector_store %arg10[%c6_108, %c128_109], %91 {strides = array<i32>} : memref<9x512xf32, #tpu.memory_space<vmem>>, vector<3x128xf32>,
    %93 = vector.extract_strided_slice %72 {offsets = [12, 0], sizes = [3, 128], strides = [1, 1]} : vector<16x128xf32> to vector<3x128xf32>
    %c6_110 = arith.constant 6 : index
    %c256_111 = arith.constant 256 : index
    %94 = vector.load %arg10[%c6_110, %c256_111] : memref<9x512xf32, #tpu.memory_space<vmem>>, vector<3x128xf32>
    tpu.vector_store %arg10[%c6_110, %c256_111], %93 {strides = array<i32>} : memref<9x512xf32, #tpu.memory_space<vmem>>, vector<3x128xf32>,
    %95 = vector.extract_strided_slice %72 {offsets = [13, 0], sizes = [3, 128], strides = [1, 1]} : vector<16x128xf32> to vector<3x128xf32>
    %c6_112 = arith.constant 6 : index
    %c384_113 = arith.constant 384 : index
    %96 = vector.load %arg10[%c6_112, %c384_113] : memref<9x512xf32, #tpu.memory_space<vmem>>, vector<3x128xf32>
    tpu.vector_store %arg10[%c6_112, %c384_113], %95 {strides = array<i32>} : memref<9x512xf32, #tpu.memory_space<vmem>>, vector<3x128xf32>,
    %c0_114 = arith.constant 0 : index
    %c0_115 = arith.constant 0 : index
    %97 = vector.load %arg10[%c0_114, %c0_115] : memref<9x512xf32, #tpu.memory_space<vmem>>, vector<9x512xf32>
    %98 = arith.truncf %97 : vector<9x512xf32> to vector<9x512xbf16>
    %c0_116 = arith.constant 0 : index
    %c0_117 = arith.constant 0 : index
    %99 = vector.load %arg4[%c0_116, %c0_117] : memref<512x64xbf16, #tpu.memory_space<vmem>>, vector<512x64xbf16>
    %cst_118 = arith.constant dense<0.000000e+00> : vector<9x64xf32>
    %100 = tpu.matmul %98, %99, %cst_118 {dimension_numbers = #tpu.dot_dimension_numbers<[1], [0], [0], [1], [0, 0, 1, 1], [], []>} : vector<9x512xbf16>, vector<512x64xbf16>, vector<9x64xf32> -> vector<9x64xf32>
    %c0_119 = arith.constant 0 : index
    %c0_120 = arith.constant 0 : index
    %101 = vector.load %arg5[%c0_119, %c0_120] : memref<1x64xf32, #tpu.memory_space<vmem>>, vector<1x64xf32>
    %102 = vector.broadcast %101 : vector<1x64xf32> to vector<9x64xf32>
    %103 = arith.addf %100, %102 : vector<9x64xf32>
    %cst_121 = arith.constant 0.000000e+00 : f32
    %104 = vector.broadcast %cst_121 : f32 to vector<9x64xf32>
    %105 = arith.maximumf %103, %104 : vector<9x64xf32>
    %106 = vector.extract_strided_slice %105 {offsets = [0, 0], sizes = [1, 64], strides = [1, 1]} : vector<9x64xf32> to vector<1x64xf32>
    %c0_122 = arith.constant 0 : index
    %c0_123 = arith.constant 0 : index
    %107 = vector.load %arg11[%c0_122, %c0_123] : memref<1x576xf32, #tpu.memory_space<vmem>>, vector<1x64xf32>
    tpu.vector_store %arg11[%c0_122, %c0_123], %106 {strides = array<i32>} : memref<1x576xf32, #tpu.memory_space<vmem>>, vector<1x64xf32>,
    %108 = vector.extract_strided_slice %105 {offsets = [1, 0], sizes = [1, 64], strides = [1, 1]} : vector<9x64xf32> to vector<1x64xf32>
    %c0_124 = arith.constant 0 : index
    %c64 = arith.constant 64 : index
    %109 = vector.load %arg11[%c0_124, %c64] : memref<1x576xf32, #tpu.memory_space<vmem>>, vector<1x64xf32>
    tpu.vector_store %arg11[%c0_124, %c64], %108 {strides = array<i32>} : memref<1x576xf32, #tpu.memory_space<vmem>>, vector<1x64xf32>,
    %110 = vector.extract_strided_slice %105 {offsets = [2, 0], sizes = [1, 64], strides = [1, 1]} : vector<9x64xf32> to vector<1x64xf32>
    %c0_125 = arith.constant 0 : index
    %c128_126 = arith.constant 128 : index
    %111 = vector.load %arg11[%c0_125, %c128_126] : memref<1x576xf32, #tpu.memory_space<vmem>>, vector<1x64xf32>
    tpu.vector_store %arg11[%c0_125, %c128_126], %110 {strides = array<i32>} : memref<1x576xf32, #tpu.memory_space<vmem>>, vector<1x64xf32>,
    %112 = vector.extract_strided_slice %105 {offsets = [3, 0], sizes = [1, 64], strides = [1, 1]} : vector<9x64xf32> to vector<1x64xf32>
    %c0_127 = arith.constant 0 : index
    %c192 = arith.constant 192 : index
    %113 = vector.load %arg11[%c0_127, %c192] : memref<1x576xf32, #tpu.memory_space<vmem>>, vector<1x64xf32>
    tpu.vector_store %arg11[%c0_127, %c192], %112 {strides = array<i32>} : memref<1x576xf32, #tpu.memory_space<vmem>>, vector<1x64xf32>,
    %114 = vector.extract_strided_slice %105 {offsets = [4, 0], sizes = [1, 64], strides = [1, 1]} : vector<9x64xf32> to vector<1x64xf32>
    %c0_128 = arith.constant 0 : index
    %c256_129 = arith.constant 256 : index
    %115 = vector.load %arg11[%c0_128, %c256_129] : memref<1x576xf32, #tpu.memory_space<vmem>>, vector<1x64xf32>
    tpu.vector_store %arg11[%c0_128, %c256_129], %114 {strides = array<i32>} : memref<1x576xf32, #tpu.memory_space<vmem>>, vector<1x64xf32>,
    %116 = vector.extract_strided_slice %105 {offsets = [5, 0], sizes = [1, 64], strides = [1, 1]} : vector<9x64xf32> to vector<1x64xf32>
    %c0_130 = arith.constant 0 : index
    %c320 = arith.constant 320 : index
    %117 = vector.load %arg11[%c0_130, %c320] : memref<1x576xf32, #tpu.memory_space<vmem>>, vector<1x64xf32>
    tpu.vector_store %arg11[%c0_130, %c320], %116 {strides = array<i32>} : memref<1x576xf32, #tpu.memory_space<vmem>>, vector<1x64xf32>,
    %118 = vector.extract_strided_slice %105 {offsets = [6, 0], sizes = [1, 64], strides = [1, 1]} : vector<9x64xf32> to vector<1x64xf32>
    %c0_131 = arith.constant 0 : index
    %c384_132 = arith.constant 384 : index
    %119 = vector.load %arg11[%c0_131, %c384_132] : memref<1x576xf32, #tpu.memory_space<vmem>>, vector<1x64xf32>
    tpu.vector_store %arg11[%c0_131, %c384_132], %118 {strides = array<i32>} : memref<1x576xf32, #tpu.memory_space<vmem>>, vector<1x64xf32>,
    %120 = vector.extract_strided_slice %105 {offsets = [7, 0], sizes = [1, 64], strides = [1, 1]} : vector<9x64xf32> to vector<1x64xf32>
    %c0_133 = arith.constant 0 : index
    %c448 = arith.constant 448 : index
    %121 = vector.load %arg11[%c0_133, %c448] : memref<1x576xf32, #tpu.memory_space<vmem>>, vector<1x64xf32>
    tpu.vector_store %arg11[%c0_133, %c448], %120 {strides = array<i32>} : memref<1x576xf32, #tpu.memory_space<vmem>>, vector<1x64xf32>,
    %122 = vector.extract_strided_slice %105 {offsets = [8, 0], sizes = [1, 64], strides = [1, 1]} : vector<9x64xf32> to vector<1x64xf32>
    %c0_134 = arith.constant 0 : index
    %c512_135 = arith.constant 512 : index
    %123 = vector.load %arg11[%c0_134, %c512_135] : memref<1x576xf32, #tpu.memory_space<vmem>>, vector<1x64xf32>
    tpu.vector_store %arg11[%c0_134, %c512_135], %122 {strides = array<i32>} : memref<1x576xf32, #tpu.memory_space<vmem>>, vector<1x64xf32>,
    %c0_136 = arith.constant 0 : index
    %c0_137 = arith.constant 0 : index
    %124 = vector.load %arg11[%c0_136, %c0_137] : memref<1x576xf32, #tpu.memory_space<vmem>>, vector<1x576xf32>
    %125 = arith.truncf %124 : vector<1x576xf32> to vector<1x576xbf16>
    %c0_138 = arith.constant 0 : index
    %c0_139 = arith.constant 0 : index
    %126 = vector.load %arg6[%c0_138, %c0_139] : memref<576x64xbf16, #tpu.memory_space<vmem>>, vector<576x64xbf16>
    %cst_140 = arith.constant dense<0.000000e+00> : vector<1x64xf32>
    %127 = tpu.matmul %125, %126, %cst_140 {dimension_numbers = #tpu.dot_dimension_numbers<[1], [0], [0], [1], [0, 0, 1, 1], [], []>} : vector<1x576xbf16>, vector<576x64xbf16>, vector<1x64xf32> -> vector<1x64xf32>
    %c0_141 = arith.constant 0 : index
    %c0_142 = arith.constant 0 : index
    %128 = vector.load %arg7[%c0_141, %c0_142] : memref<1x64xf32, #tpu.memory_space<vmem>>, vector<1x64xf32>
    %129 = arith.addf %127, %128 : vector<1x64xf32>
    %cst_143 = arith.constant 0.000000e+00 : f32
    %130 = vector.broadcast %cst_143 : f32 to vector<1x64xf32>
    %131 = arith.maximumf %129, %130 : vector<1x64xf32>
    %132 = arith.truncf %131 : vector<1x64xf32> to vector<1x64xbf16>
    %c0_144 = arith.constant 0 : index
    %c0_145 = arith.constant 0 : index
    %c0_146 = arith.constant 0 : index
    %133 = vector.load %arg8[%c0_144, %c0_145, %c0_146] : memref<1x1x64xbf16, #tpu.memory_space<vmem>>, vector<1x1x64xbf16>
    %134 = vector.shape_cast %133 : vector<1x1x64xbf16> to vector<1x64xbf16>
    %135 = vector.shape_cast %132 : vector<1x64xbf16> to vector<1x1x64xbf16>
    tpu.vector_store %arg8[%c0_144, %c0_145, %c0_146], %135 {strides = array<i32>} : memref<1x1x64xbf16, #tpu.memory_space<vmem>>, vector<1x1x64xbf16>,
    return
  }
  func.func @transform_0(%arg0: i32) -> (i32, i32, i32, i32) {
    %c0_i32 = arith.constant 0 : i32
    %c0_i32_0 = arith.constant 0 : i32
    %c0_i32_1 = arith.constant 0 : i32
    %c0_i32_2 = arith.constant 0 : i32
    return %arg0, %c0_i32, %c0_i32_0, %c0_i32_1 : i32, i32, i32, i32
  }
  func.func @transform_1(%arg0: i32) -> (i32, i32) {
    %c0_i32 = arith.constant 0 : i32
    %c0_i32_0 = arith.constant 0 : i32
    %c0_i32_1 = arith.constant 0 : i32
    return %c0_i32, %c0_i32_0 : i32, i32
  }
  func.func @transform_2(%arg0: i32) -> (i32, i32) {
    %c0_i32 = arith.constant 0 : i32
    %c0_i32_0 = arith.constant 0 : i32
    %c0_i32_1 = arith.constant 0 : i32
    return %c0_i32, %c0_i32_0 : i32, i32
  }
  func.func @transform_3(%arg0: i32) -> (i32, i32) {
    %c0_i32 = arith.constant 0 : i32
    %c0_i32_0 = arith.constant 0 : i32
    %c0_i32_1 = arith.constant 0 : i32
    return %c0_i32, %c0_i32_0 : i32, i32
  }
  func.func @transform_4(%arg0: i32) -> (i32, i32) {
    %c0_i32 = arith.constant 0 : i32
    %c0_i32_0 = arith.constant 0 : i32
    %c0_i32_1 = arith.constant 0 : i32
    return %c0_i32, %c0_i32_0 : i32, i32
  }
  func.func @transform_5(%arg0: i32) -> (i32, i32) {
    %c0_i32 = arith.constant 0 : i32
    %c0_i32_0 = arith.constant 0 : i32
    %c0_i32_1 = arith.constant 0 : i32
    return %c0_i32, %c0_i32_0 : i32, i32
  }
  func.func @transform_6(%arg0: i32) -> (i32, i32) {
    %c0_i32 = arith.constant 0 : i32
    %c0_i32_0 = arith.constant 0 : i32
    %c0_i32_1 = arith.constant 0 : i32
    return %c0_i32, %c0_i32_0 : i32, i32
  }
  func.func @transform_7(%arg0: i32) -> (i32, i32, i32) {
    %c0_i32 = arith.constant 0 : i32
    %c0_i32_0 = arith.constant 0 : i32
    %c0_i32_1 = arith.constant 0 : i32
    return %arg0, %c0_i32, %c0_i32_0 : i32, i32, i32
  }
}

</mosaic_0001>

<llo_original>
// kernel: atari_a2c_forward.3
$region0: #{atari_a2c_forward.3}
  #allocation0 [shape = 'u32[]', space=smem, size = 0x4, offset = 0x4, fixed_abs, tag = 'smem constant byte address 0x4 - core index']
  #allocation1 [shape = 'u32[144,128]{1,0:T(1,128)}', space=vmem, size = 0x12000, scoped, tag = 'internal scratch']
  %s0 = inlined_call_operand.vmem [shape: bf16[2,64], index: 0, kind: input, shape index: {}]
  %s1 = inlined_call_operand.vmem [shape: bf16[64,1024], index: 1, kind: input, shape index: {}]
  %s2 = inlined_call_operand.vmem [shape: f32[1,1024], index: 2, kind: input, shape index: {}]
  %s3 = inlined_call_operand.vmem [shape: bf16[1024,128], index: 3, kind: input, shape index: {}]
  %s4 = inlined_call_operand.vmem [shape: f32[1,128], index: 4, kind: input, shape index: {}]
  %s5 = inlined_call_operand.vmem [shape: f32[2,128], index: 5, kind: output, shape index: {}]
  %s6 = sld [smem:[#allocation0]]
  $region30: #{atari_a2c_forward.3} parent=0
    _
  %s8 = ssub.s32 1, %s6
  %s9 = scalar_select 0, %s8, %s6
  // Predicated region
  $region2: #{atari_a2c_forward.3} parent=0 // pred_check
    _
  $region3: #{atari_a2c_forward.3} parent=0 // pred_check_branch
    %11 = sbr.rel (0) target = $region5
  $region4: #{atari_a2c_forward.3} parent=0 // pred_region
    _
  $region5: #{atari_a2c_forward.3} parent=0 // pred_fallthru
    _
  // Predicated region
  $region6: #{atari_a2c_forward.3} parent=0 // pred_check
    _
  $region7: #{atari_a2c_forward.3} parent=0 // pred_check_branch
    %13 = sbr.rel (0) target = $region9
  $region8: #{atari_a2c_forward.3} parent=0 // pred_region
    _
  $region9: #{atari_a2c_forward.3} parent=0 // pred_fallthru
    _
  // Predicated region
  $region10: #{atari_a2c_forward.3} parent=0 // pred_check
    _
  $region11: #{atari_a2c_forward.3} parent=0 // pred_check_branch
    %15 = sbr.rel (0) target = $region13
  $region12: #{atari_a2c_forward.3} parent=0 // pred_region
    _
  $region13: #{atari_a2c_forward.3} parent=0 // pred_fallthru
    _
  // Predicated region
  $region14: #{atari_a2c_forward.3} parent=0 // pred_check
    _
  $region15: #{atari_a2c_forward.3} parent=0 // pred_check_branch
    %17 = sbr.rel (0) target = $region17
  $region16: #{atari_a2c_forward.3} parent=0 // pred_region
    _
  $region17: #{atari_a2c_forward.3} parent=0 // pred_fallthru
    _
  // Predicated region
  $region18: #{atari_a2c_forward.3} parent=0 // pred_check
    _
  $region19: #{atari_a2c_forward.3} parent=0 // pred_check_branch
    %19 = sbr.rel (0) target = $region21
  $region20: #{atari_a2c_forward.3} parent=0 // pred_region
    _
  $region21: #{atari_a2c_forward.3} parent=0 // pred_fallthru
    _
  %v21 = vld [vmem:[%s0] sm:$0x1]
  %v22 = vld [vmem:[%s1] sm:$0xff]
  %v23 = vld [vmem:[%s1 + $0x8] sm:$0xff]
  %v24 = vld [vmem:[%s1 + $0x10] sm:$0xff]
  %v25 = vld [vmem:[%s1 + $0x18] sm:$0xff]
  %v26 = vld [vmem:[%s1 + $0x20] sm:$0xff]
  %v27 = vld [vmem:[%s1 + $0x28] sm:$0xff]
  %v28 = vld [vmem:[%s1 + $0x30] sm:$0xff]
  %v29 = vld [vmem:[%s1 + $0x38] sm:$0xff]
  %v30 = vld [vmem:[%s1 + $0x40] sm:$0xff]
  %v31 = vld [vmem:[%s1 + $0x48] sm:$0xff]
  %v32 = vld [vmem:[%s1 + $0x50] sm:$0xff]
  %v33 = vld [vmem:[%s1 + $0x58] sm:$0xff]
  %v34 = vld [vmem:[%s1 + $0x60] sm:$0xff]
  %v35 = vld [vmem:[%s1 + $0x68] sm:$0xff]
  %v36 = vld [vmem:[%s1 + $0x70] sm:$0xff]
  %v37 = vld [vmem:[%s1 + $0x78] sm:$0xff]
  %v38 = vld [vmem:[%s1 + $0x80] sm:$0xff]
  %v39 = vld [vmem:[%s1 + $0x88] sm:$0xff]
  %v40 = vld [vmem:[%s1 + $0x90] sm:$0xff]
  %v41 = vld [vmem:[%s1 + $0x98] sm:$0xff]
  %v42 = vld [vmem:[%s1 + $0xa0] sm:$0xff]
  %v43 = vld [vmem:[%s1 + $0xa8] sm:$0xff]
  %v44 = vld [vmem:[%s1 + $0xb0] sm:$0xff]
  %v45 = vld [vmem:[%s1 + $0xb8] sm:$0xff]
  %v46 = vld [vmem:[%s1 + $0xc0] sm:$0xff]
  %v47 = vld [vmem:[%s1 + $0xc8] sm:$0xff]
  %v48 = vld [vmem:[%s1 + $0xd0] sm:$0xff]
  %v49 = vld [vmem:[%s1 + $0xd8] sm:$0xff]
  %v50 = vld [vmem:[%s1 + $0xe0] sm:$0xff]
  %v51 = vld [vmem:[%s1 + $0xe8] sm:$0xff]
  %v52 = vld [vmem:[%s1 + $0xf0] sm:$0xff]
  %v53 = vld [vmem:[%s1 + $0xf8] sm:$0xff]
  %v54 = vld [vmem:[%s2] sm:$0xff]
  %v56 = vlaneseq
  %v57 = vshrl.u32 %v56, 7
  %v58 = vsub.s32 0, %v57
  %v59 = vrot.slane %v54, %v58
  %v60 = vlaneseq
  %v61 = vshrl.u32 %v60, 7
  %v62 = vsub.s32 1, %v61
  %v63 = vrot.slane %v54, %v62
  %v64 = vlaneseq
  %v65 = vshrl.u32 %v64, 7
  %v66 = vsub.s32 2, %v65
  %v67 = vrot.slane %v54, %v66
  %v68 = vlaneseq
  %v69 = vshrl.u32 %v68, 7
  %v70 = vsub.s32 3, %v69
  %v71 = vrot.slane %v54, %v70
  %v72 = vlaneseq
  %v73 = vshrl.u32 %v72, 7
  %v74 = vsub.s32 4, %v73
  %v75 = vrot.slane %v54, %v74
  %v76 = vlaneseq
  %v77 = vshrl.u32 %v76, 7
  %v78 = vsub.s32 5, %v77
  %v79 = vrot.slane %v54, %v78
  %v80 = vlaneseq
  %v81 = vshrl.u32 %v80, 7
  %v82 = vsub.s32 6, %v81
  %v83 = vrot.slane %v54, %v82
  %v84 = vlaneseq
  %v85 = vshrl.u32 %v84, 7
  %v86 = vsub.s32 7, %v85
  %v87 = vrot.slane %v54, %v86
  %v128 = vunpack.c.l.b16 %v22
  %v129 = vunpack.c.h.b16 %v22
  %v130 = vunpack.c.l.b16 %v23
  %v131 = vunpack.c.h.b16 %v23
  %v132 = vunpack.c.l.b16 %v24
  %v133 = vunpack.c.h.b16 %v24
  %v134 = vunpack.c.l.b16 %v25
  %v135 = vunpack.c.h.b16 %v25
  %v136 = vunpack.c.l.b16 %v26
  %v137 = vunpack.c.h.b16 %v26
  %v138 = vunpack.c.l.b16 %v27
  %v139 = vunpack.c.h.b16 %v27
  %v140 = vunpack.c.l.b16 %v28
  %v141 = vunpack.c.h.b16 %v28
  %v142 = vunpack.c.l.b16 %v29
  %v143 = vunpack.c.h.b16 %v29
  %v144 = vunpack.c.l.b16 %v30
  %v145 = vunpack.c.h.b16 %v30
  %v146 = vunpack.c.l.b16 %v31
  %v147 = vunpack.c.h.b16 %v31
  %v148 = vunpack.c.l.b16 %v32
  %v149 = vunpack.c.h.b16 %v32
  %v150 = vunpack.c.l.b16 %v33
  %v151 = vunpack.c.h.b16 %v33
  %v152 = vunpack.c.l.b16 %v34
  %v153 = vunpack.c.h.b16 %v34
  %v154 = vunpack.c.l.b16 %v35
  %v155 = vunpack.c.h.b16 %v35
  %v156 = vunpack.c.l.b16 %v36
  %v157 = vunpack.c.h.b16 %v36
  %v158 = vunpack.c.l.b16 %v37
  %v159 = vunpack.c.h.b16 %v37
  %v160 = vunpack.c.l.b16 %v38
  %v161 = vunpack.c.h.b16 %v38
  %v162 = vunpack.c.l.b16 %v39
  %v163 = vunpack.c.h.b16 %v39
  %v164 = vunpack.c.l.b16 %v40
  %v165 = vunpack.c.h.b16 %v40
  %v166 = vunpack.c.l.b16 %v41
  %v167 = vunpack.c.h.b16 %v41
  %v168 = vunpack.c.l.b16 %v42
  %v169 = vunpack.c.h.b16 %v42
  %v170 = vunpack.c.l.b16 %v43
  %v171 = vunpack.c.h.b16 %v43
  %v172 = vunpack.c.l.b16 %v44
  %v173 = vunpack.c.h.b16 %v44
  %v174 = vunpack.c.l.b16 %v45
  %v175 = vunpack.c.h.b16 %v45
  %v176 = vunpack.c.l.b16 %v46
  %v177 = vunpack.c.h.b16 %v46
  %v178 = vunpack.c.l.b16 %v47
  %v179 = vunpack.c.h.b16 %v47
  %v180 = vunpack.c.l.b16 %v48
  %v181 = vunpack.c.h.b16 %v48
  %v182 = vunpack.c.l.b16 %v49
  %v183 = vunpack.c.h.b16 %v49
  %v184 = vunpack.c.l.b16 %v50
  %v185 = vunpack.c.h.b16 %v50
  %v186 = vunpack.c.l.b16 %v51
  %v187 = vunpack.c.h.b16 %v51
  %v188 = vunpack.c.l.b16 %v52
  %v189 = vunpack.c.h.b16 %v52
  %v190 = vunpack.c.l.b16 %v53
  %v191 = vunpack.c.h.b16 %v53
  %v192 = vpack.c.b16 %v136, %v128
  %v193 = vpack.c.b16 %v137, %v129
  %v194 = vpack.c.b16 %v138, %v130
  %v195 = vpack.c.b16 %v139, %v131
  %v196 = vpack.c.b16 %v140, %v132
  %v197 = vpack.c.b16 %v141, %v133
  %v198 = vpack.c.b16 %v142, %v134
  %v199 = vpack.c.b16 %v143, %v135
  %v200 = vpack.c.b16 %v152, %v144
  %v201 = vpack.c.b16 %v153, %v145
  %v202 = vpack.c.b16 %v154, %v146
  %v203 = vpack.c.b16 %v155, %v147
  %v204 = vpack.c.b16 %v156, %v148
  %v205 = vpack.c.b16 %v157, %v149
  %v206 = vpack.c.b16 %v158, %v150
  %v207 = vpack.c.b16 %v159, %v151
  %v208 = vpack.c.b16 %v168, %v160
  %v209 = vpack.c.b16 %v169, %v161
  %v210 = vpack.c.b16 %v170, %v162
  %v211 = vpack.c.b16 %v171, %v163
  %v212 = vpack.c.b16 %v172, %v164
  %v213 = vpack.c.b16 %v173, %v165
  %v214 = vpack.c.b16 %v174, %v166
  %v215 = vpack.c.b16 %v175, %v167
  %v216 = vpack.c.b16 %v184, %v176
  %v217 = vpack.c.b16 %v185, %v177
  %v218 = vpack.c.b16 %v186, %v178
  %v219 = vpack.c.b16 %v187, %v179
  %v220 = vpack.c.b16 %v188, %v180
  %v221 = vpack.c.b16 %v189, %v181
  %v222 = vpack.c.b16 %v190, %v182
  %v223 = vpack.c.b16 %v191, %v183
  %vm256 = vcmask 523264
  %v258 = vsel %vm256, %v21, 0
  %260 = vmatprep.subr.bf16.mxu0 %v193
  %261 = vmatpush1.bf16.msra.mxu0 %v192
  %262 = vmatprep.subr.bf16.mxu0 %v201
  %263 = vmatpush1.bf16.msra.mxu0 %v200
  %264 = vmatprep.subr.bf16.mxu0 %v209
  %265 = vmatpush1.bf16.msra.mxu0 %v208
  %266 = vmatprep.subr.bf16.mxu0 %v217
  %267 = vmatpush1.bf16.msra.mxu0 %v216
  %268 = vmatprep.subr.bf16.mxu0 0
  %269 = vmatpush1.bf16.msra.mxu0 0
  %270 = vmatprep.subr.bf16.mxu0 0
  %271 = vmatpush1.bf16.msra.mxu0 0
  %272 = vmatprep.subr.bf16.mxu0 0
  %273 = vmatpush1.bf16.msra.mxu0 0
  %274 = vmatprep.subr.bf16.mxu0 0
  %275 = vmatpush1.bf16.msra.mxu0 0
  %276 = vmatprep.subr.bf16.mxu0 0
  %277 = vmatpush1.bf16.msra.mxu0 0
  %278 = vmatprep.subr.bf16.mxu0 0
  %279 = vmatpush1.bf16.msra.mxu0 0
  %280 = vmatprep.subr.bf16.mxu0 0
  %281 = vmatpush1.bf16.msra.mxu0 0
  %282 = vmatprep.subr.bf16.mxu0 0
  %283 = vmatpush1.bf16.msra.mxu0 0
  %284 = vmatprep.subr.bf16.mxu0 0
  %285 = vmatpush1.bf16.msra.mxu0 0
  %286 = vmatprep.subr.bf16.mxu0 0
  %287 = vmatpush1.bf16.msra.mxu0 0
  %288 = vmatprep.subr.bf16.mxu0 0
  %289 = vmatpush1.bf16.msra.mxu0 0
  %290 = vmatprep.subr.bf16.mxu0 0
  %291 = vmatpush1.bf16.msra.mxu0 0
  %292 = vmatprep.mubr.bf16.mxu0 0
  %293 = vmatmul.mubr.bf16.gmra.mrb[0].mxu0 %v258
  %v294 = vpop.f32.mrb[0].mxu0
  %v295 = vadd.f32 %v59, %v294
  %v296 = vpop.f32.mrb[0].mxu0
  %v297 = vadd.f32 %v63, %v296
  %v298 = vpop.f32.mrb[0].mxu0
  %v299 = vpop.f32.mrb[0].mxu0
  %300 = vdwg.mxu0
  %301 = vmatprep.subr.bf16.mxu0 %v195
  %302 = vmatpush1.bf16.msra.mxu0 %v194
  %303 = vmatprep.subr.bf16.mxu0 %v203
  %304 = vmatpush1.bf16.msra.mxu0 %v202
  %305 = vmatprep.subr.bf16.mxu0 %v211
  %306 = vmatpush1.bf16.msra.mxu0 %v210
  %307 = vmatprep.subr.bf16.mxu0 %v219
  %308 = vmatpush1.bf16.msra.mxu0 %v218
  %309 = vmatprep.subr.bf16.mxu0 0
  %310 = vmatpush1.bf16.msra.mxu0 0
  %311 = vmatprep.subr.bf16.mxu0 0
  %312 = vmatpush1.bf16.msra.mxu0 0
  %313 = vmatprep.subr.bf16.mxu0 0
  %314 = vmatpush1.bf16.msra.mxu0 0
  %315 = vmatprep.subr.bf16.mxu0 0
  %316 = vmatpush1.bf16.msra.mxu0 0
  %317 = vmatprep.subr.bf16.mxu0 0
  %318 = vmatpush1.bf16.msra.mxu0 0
  %319 = vmatprep.subr.bf16.mxu0 0
  %320 = vmatpush1.bf16.msra.mxu0 0
  %321 = vmatprep.subr.bf16.mxu0 0
  %322 = vmatpush1.bf16.msra.mxu0 0
  %323 = vmatprep.subr.bf16.mxu0 0
  %324 = vmatpush1.bf16.msra.mxu0 0
  %325 = vmatprep.subr.bf16.mxu0 0
  %326 = vmatpush1.bf16.msra.mxu0 0
  %327 = vmatprep.subr.bf16.mxu0 0
  %328 = vmatpush1.bf16.msra.mxu0 0
  %329 = vmatprep.subr.bf16.mxu0 0
  %330 = vmatpush1.bf16.msra.mxu0 0
  %331 = vmatprep.subr.bf16.mxu0 0
  %332 = vmatpush1.bf16.msra.mxu0 0
  %333 = vmatprep.mubr.bf16.mxu0 0
  %334 = vmatmul.mubr.bf16.gmra.mrb[0].mxu0 %v258
  %v335 = vpop.f32.mrb[0].mxu0
  %v336 = vadd.f32 %v67, %v335
  %v337 = vpop.f32.mrb[0].mxu0
  %v338 = vadd.f32 %v71, %v337
  %v339 = vpop.f32.mrb[0].mxu0
  %v340 = vpop.f32.mrb[0].mxu0
  %341 = vdwg.mxu0
  %342 = vmatprep.subr.bf16.mxu0 %v197
  %343 = vmatpush1.bf16.msra.mxu0 %v196
  %344 = vmatprep.subr.bf16.mxu0 %v205
  %345 = vmatpush1.bf16.msra.mxu0 %v204
  %346 = vmatprep.subr.bf16.mxu0 %v213
  %347 = vmatpush1.bf16.msra.mxu0 %v212
  %348 = vmatprep.subr.bf16.mxu0 %v221
  %349 = vmatpush1.bf16.msra.mxu0 %v220
  %350 = vmatprep.subr.bf16.mxu0 0
  %351 = vmatpush1.bf16.msra.mxu0 0
  %352 = vmatprep.subr.bf16.mxu0 0
  %353 = vmatpush1.bf16.msra.mxu0 0
  %354 = vmatprep.subr.bf16.mxu0 0
  %355 = vmatpush1.bf16.msra.mxu0 0
  %356 = vmatprep.subr.bf16.mxu0 0
  %357 = vmatpush1.bf16.msra.mxu0 0
  %358 = vmatprep.subr.bf16.mxu0 0
  %359 = vmatpush1.bf16.msra.mxu0 0
  %360 = vmatprep.subr.bf16.mxu0 0
  %361 = vmatpush1.bf16.msra.mxu0 0
  %362 = vmatprep.subr.bf16.mxu0 0
  %363 = vmatpush1.bf16.msra.mxu0 0
  %364 = vmatprep.subr.bf16.mxu0 0
  %365 = vmatpush1.bf16.msra.mxu0 0
  %366 = vmatprep.subr.bf16.mxu0 0
  %367 = vmatpush1.bf16.msra.mxu0 0
  %368 = vmatprep.subr.bf16.mxu0 0
  %369 = vmatpush1.bf16.msra.mxu0 0
  %370 = vmatprep.subr.bf16.mxu0 0
  %371 = vmatpush1.bf16.msra.mxu0 0
  %372 = vmatprep.subr.bf16.mxu0 0
  %373 = vmatpush1.bf16.msra.mxu0 0
  %374 = vmatprep.mubr.bf16.mxu0 0
  %375 = vmatmul.mubr.bf16.gmra.mrb[0].mxu0 %v258
  %v376 = vpop.f32.mrb[0].mxu0
  %v377 = vadd.f32 %v75, %v376
  %v378 = vpop.f32.mrb[0].mxu0
  %v379 = vadd.f32 %v79, %v378
  %v380 = vpop.f32.mrb[0].mxu0
  %v381 = vpop.f32.mrb[0].mxu0
  %382 = vdwg.mxu0
  %383 = vmatprep.subr.bf16.mxu0 %v199
  %384 = vmatpush1.bf16.msra.mxu0 %v198
  %385 = vmatprep.subr.bf16.mxu0 %v207
  %386 = vmatpush1.bf16.msra.mxu0 %v206
  %387 = vmatprep.subr.bf16.mxu0 %v215
  %388 = vmatpush1.bf16.msra.mxu0 %v214
  %389 = vmatprep.subr.bf16.mxu0 %v223
  %390 = vmatpush1.bf16.msra.mxu0 %v222
  %391 = vmatprep.subr.bf16.mxu0 0
  %392 = vmatpush1.bf16.msra.mxu0 0
  %393 = vmatprep.subr.bf16.mxu0 0
  %394 = vmatpush1.bf16.msra.mxu0 0
  %395 = vmatprep.subr.bf16.mxu0 0
  %396 = vmatpush1.bf16.msra.mxu0 0
  %397 = vmatprep.subr.bf16.mxu0 0
  %398 = vmatpush1.bf16.msra.mxu0 0
  %399 = vmatprep.subr.bf16.mxu0 0
  %400 = vmatpush1.bf16.msra.mxu0 0
  %401 = vmatprep.subr.bf16.mxu0 0
  %402 = vmatpush1.bf16.msra.mxu0 0
  %403 = vmatprep.subr.bf16.mxu0 0
  %404 = vmatpush1.bf16.msra.mxu0 0
  %405 = vmatprep.subr.bf16.mxu0 0
  %406 = vmatpush1.bf16.msra.mxu0 0
  %407 = vmatprep.subr.bf16.mxu0 0
  %408 = vmatpush1.bf16.msra.mxu0 0
  %409 = vmatprep.subr.bf16.mxu0 0
  %410 = vmatpush1.bf16.msra.mxu0 0
  %411 = vmatprep.subr.bf16.mxu0 0
  %412 = vmatpush1.bf16.msra.mxu0 0
  %413 = vmatprep.subr.bf16.mxu0 0
  %414 = vmatpush1.bf16.msra.mxu0 0
  %415 = vmatprep.mubr.bf16.mxu0 0
  %416 = vmatmul.mubr.bf16.gmra.mrb[0].mxu0 %v258
  %v417 = vpop.f32.mrb[0].mxu0
  %v418 = vadd.f32 %v83, %v417
  %v419 = vpop.f32.mrb[0].mxu0
  %v420 = vadd.f32 %v87, %v419
  %v421 = vpop.f32.mrb[0].mxu0
  %v422 = vpop.f32.mrb[0].mxu0
  %423 = vdwg.mxu0
  %v424 = vmax.f32 %v295, 0.0
  %v425 = vmax.f32 %v297, 0.0
  %v426 = vmax.f32 %v336, 0.0
  %v427 = vmax.f32 %v338, 0.0
  %v428 = vmax.f32 %v377, 0.0
  %v429 = vmax.f32 %v379, 0.0
  %v430 = vmax.f32 %v418, 0.0
  %v431 = vmax.f32 %v420, 0.0
  %v432 = vpack.c.bf16 %v424, %v424
  %v433 = vpack.c.bf16 %v425, %v425
  %v434 = vpack.c.bf16 %v426, %v426
  %v435 = vpack.c.bf16 %v427, %v427
  %v436 = vpack.c.bf16 %v428, %v428
  %v437 = vpack.c.bf16 %v429, %v429
  %v438 = vpack.c.bf16 %v430, %v430
  %v439 = vpack.c.bf16 %v431, %v431
  %v440 = vld [vmem:[%s3] sm:$0xf]
  %v441 = vld [vmem:[%s3 + $0x4] sm:$0xf]
  %v442 = vld [vmem:[%s3 + $0x8] sm:$0xf]
  %v443 = vld [vmem:[%s3 + $0xc] sm:$0xf]
  %v444 = vld [vmem:[%s3 + $0x10] sm:$0xf]
  %v445 = vld [vmem:[%s3 + $0x14] sm:$0xf]
  %v446 = vld [vmem:[%s3 + $0x18] sm:$0xf]
  %v447 = vld [vmem:[%s3 + $0x1c] sm:$0xf]
  %v448 = vld [vmem:[%s3 + $0x20] sm:$0xf]
  %v449 = vld [vmem:[%s3 + $0x24] sm:$0xf]
  %v450 = vld [vmem:[%s3 + $0x28] sm:$0xf]
  %v451 = vld [vmem:[%s3 + $0x2c] sm:$0xf]
  %v452 = vld [vmem:[%s3 + $0x30] sm:$0xf]
  %v453 = vld [vmem:[%s3 + $0x34] sm:$0xf]
  %v454 = vld [vmem:[%s3 + $0x38] sm:$0xf]
  %v455 = vld [vmem:[%s3 + $0x3c] sm:$0xf]
  %v456 = vld [vmem:[%s3 + $0x40] sm:$0xf]
  %v457 = vld [vmem:[%s3 + $0x44] sm:$0xf]
  %v458 = vld [vmem:[%s3 + $0x48] sm:$0xf]
  %v459 = vld [vmem:[%s3 + $0x4c] sm:$0xf]
  %v460 = vld [vmem:[%s3 + $0x50] sm:$0xf]
  %v461 = vld [vmem:[%s3 + $0x54] sm:$0xf]
  %v462 = vld [vmem:[%s3 + $0x58] sm:$0xf]
  %v463 = vld [vmem:[%s3 + $0x5c] sm:$0xf]
  %v464 = vld [vmem:[%s3 + $0x60] sm:$0xf]
  %v465 = vld [vmem:[%s3 + $0x64] sm:$0xf]
  %v466 = vld [vmem:[%s3 + $0x68] sm:$0xf]
  %v467 = vld [vmem:[%s3 + $0x6c] sm:$0xf]
  %v468 = vld [vmem:[%s3 + $0x70] sm:$0xf]
  %v469 = vld [vmem:[%s3 + $0x74] sm:$0xf]
  %v470 = vld [vmem:[%s3 + $0x78] sm:$0xf]
  %v471 = vld [vmem:[%s3 + $0x7c] sm:$0xf]
  %v472 = vld [vmem:[%s3 + $0x80] sm:$0xf]
  %v473 = vld [vmem:[%s3 + $0x84] sm:$0xf]
  %v474 = vld [vmem:[%s3 + $0x88] sm:$0xf]
  %v475 = vld [vmem:[%s3 + $0x8c] sm:$0xf]
  %v476 = vld [vmem:[%s3 + $0x90] sm:$0xf]
  %v477 = vld [vmem:[%s3 + $0x94] sm:$0xf]
  %v478 = vld [vmem:[%s3 + $0x98] sm:$0xf]
  %v479 = vld [vmem:[%s3 + $0x9c] sm:$0xf]
  %v480 = vld [vmem:[%s3 + $0xa0] sm:$0xf]
  %v481 = vld [vmem:[%s3 + $0xa4] sm:$0xf]
  %v482 = vld [vmem:[%s3 + $0xa8] sm:$0xf]
  %v483 = vld [vmem:[%s3 + $0xac] sm:$0xf]
  %v484 = vld [vmem:[%s3 + $0xb0] sm:$0xf]
  %v485 = vld [vmem:[%s3 + $0xb4] sm:$0xf]
  %v486 = vld [vmem:[%s3 + $0xb8] sm:$0xf]
  %v487 = vld [vmem:[%s3 + $0xbc] sm:$0xf]
  %v488 = vld [vmem:[%s3 + $0xc0] sm:$0xf]
  %v489 = vld [vmem:[%s3 + $0xc4] sm:$0xf]
  %v490 = vld [vmem:[%s3 + $0xc8] sm:$0xf]
  %v491 = vld [vmem:[%s3 + $0xcc] sm:$0xf]
  %v492 = vld [vmem:[%s3 + $0xd0] sm:$0xf]
  %v493 = vld [vmem:[%s3 + $0xd4] sm:$0xf]
  %v494 = vld [vmem:[%s3 + $0xd8] sm:$0xf]
  %v495 = vld [vmem:[%s3 + $0xdc] sm:$0xf]
  %v496 = vld [vmem:[%s3 + $0xe0] sm:$0xf]
  %v497 = vld [vmem:[%s3 + $0xe4] sm:$0xf]
  %v498 = vld [vmem:[%s3 + $0xe8] sm:$0xf]
  %v499 = vld [vmem:[%s3 + $0xec] sm:$0xf]
  %v500 = vld [vmem:[%s3 + $0xf0] sm:$0xf]
  %v501 = vld [vmem:[%s3 + $0xf4] sm:$0xf]
  %v502 = vld [vmem:[%s3 + $0xf8] sm:$0xf]
  %v503 = vld [vmem:[%s3 + $0xfc] sm:$0xf]
  %v504 = vld [vmem:[%s3 + $0x100] sm:$0xf]
  %v505 = vld [vmem:[%s3 + $0x104] sm:$0xf]
  %v506 = vld [vmem:[%s3 + $0x108] sm:$0xf]
  %v507 = vld [vmem:[%s3 + $0x10c] sm:$0xf]
  %v508 = vld [vmem:[%s3 + $0x110] sm:$0xf]
  %v509 = vld [vmem:[%s3 + $0x114] sm:$0xf]
  %v510 = vld [vmem:[%s3 + $0x118] sm:$0xf]
  %v511 = vld [vmem:[%s3 + $0x11c] sm:$0xf]
  %v512 = vld [vmem:[%s3 + $0x120] sm:$0xf]
  %v513 = vld [vmem:[%s3 + $0x124] sm:$0xf]
  %v514 = vld [vmem:[%s3 + $0x128] sm:$0xf]
  %v515 = vld [vmem:[%s3 + $0x12c] sm:$0xf]
  %v516 = vld [vmem:[%s3 + $0x130] sm:$0xf]
  %v517 = vld [vmem:[%s3 + $0x134] sm:$0xf]
  %v518 = vld [vmem:[%s3 + $0x138] sm:$0xf]
  %v519 = vld [vmem:[%s3 + $0x13c] sm:$0xf]
  %v520 = vld [vmem:[%s3 + $0x140] sm:$0xf]
  %v521 = vld [vmem:[%s3 + $0x144] sm:$0xf]
  %v522 = vld [vmem:[%s3 + $0x148] sm:$0xf]
  %v523 = vld [vmem:[%s3 + $0x14c] sm:$0xf]
  %v524 = vld [vmem:[%s3 + $0x150] sm:$0xf]
  %v525 = vld [vmem:[%s3 + $0x154] sm:$0xf]
  %v526 = vld [vmem:[%s3 + $0x158] sm:$0xf]
  %v527 = vld [vmem:[%s3 + $0x15c] sm:$0xf]
  %v528 = vld [vmem:[%s3 + $0x160] sm:$0xf]
  %v529 = vld [vmem:[%s3 + $0x164] sm:$0xf]
  %v530 = vld [vmem:[%s3 + $0x168] sm:$0xf]
  %v531 = vld [vmem:[%s3 + $0x16c] sm:$0xf]
  %v532 = vld [vmem:[%s3 + $0x170] sm:$0xf]
  %v533 = vld [vmem:[%s3 + $0x174] sm:$0xf]
  %v534 = vld [vmem:[%s3 + $0x178] sm:$0xf]
  %v535 = vld [vmem:[%s3 + $0x17c] sm:$0xf]
  %v536 = vld [vmem:[%s3 + $0x180] sm:$0xf]
  %v537 = vld [vmem:[%s3 + $0x184] sm:$0xf]
  %v538 = vld [vmem:[%s3 + $0x188] sm:$0xf]
  %v539 = vld [vmem:[%s3 + $0x18c] sm:$0xf]
  %v540 = vld [vmem:[%s3 + $0x190] sm:$0xf]
  %v541 = vld [vmem:[%s3 + $0x194] sm:$0xf]
  %v542 = vld [vmem:[%s3 + $0x198] sm:$0xf]
  %v543 = vld [vmem:[%s3 + $0x19c] sm:$0xf]
  %v544 = vld [vmem:[%s3 + $0x1a0] sm:$0xf]
  %v545 = vld [vmem:[%s3 + $0x1a4] sm:$0xf]
  %v546 = vld [vmem:[%s3 + $0x1a8] sm:$0xf]
  %v547 = vld [vmem:[%s3 + $0x1ac] sm:$0xf]
  %v548 = vld [vmem:[%s3 + $0x1b0] sm:$0xf]
  %v549 = vld [vmem:[%s3 + $0x1b4] sm:$0xf]
  %v550 = vld [vmem:[%s3 + $0x1b8] sm:$0xf]
  %v551 = vld [vmem:[%s3 + $0x1bc] sm:$0xf]
  %v552 = vld [vmem:[%s3 + $0x1c0] sm:$0xf]
  %v553 = vld [vmem:[%s3 + $0x1c4] sm:$0xf]
  %v554 = vld [vmem:[%s3 + $0x1c8] sm:$0xf]
  %v555 = vld [vmem:[%s3 + $0x1cc] sm:$0xf]
  %v556 = vld [vmem:[%s3 + $0x1d0] sm:$0xf]
  %v557 = vld [vmem:[%s3 + $0x1d4] sm:$0xf]
  %v558 = vld [vmem:[%s3 + $0x1d8] sm:$0xf]
  %v559 = vld [vmem:[%s3 + $0x1dc] sm:$0xf]
  %v560 = vld [vmem:[%s3 + $0x1e0] sm:$0xf]
  %v561 = vld [vmem:[%s3 + $0x1e4] sm:$0xf]
  %v562 = vld [vmem:[%s3 + $0x1e8] sm:$0xf]
  %v563 = vld [vmem:[%s3 + $0x1ec] sm:$0xf]
  %v564 = vld [vmem:[%s3 + $0x1f0] sm:$0xf]
  %v565 = vld [vmem:[%s3 + $0x1f4] sm:$0xf]
  %v566 = vld [vmem:[%s3 + $0x1f8] sm:$0xf]
  %v567 = vld [vmem:[%s3 + $0x1fc] sm:$0xf]
  %v568 = vld [vmem:[%s4] sm:$0x1]
  %v570 = vlaneseq
  %v571 = vshrl.u32 %v570, 7
  %v572 = vsub.s32 0, %v571
  %v573 = vrot.slane %v568, %v572
  %v703 = vunpack.c.l.b16 %v440
  %v704 = vunpack.c.l.b16 %v441
  %v705 = vunpack.c.l.b16 %v442
  %v706 = vunpack.c.l.b16 %v443
  %v707 = vunpack.c.l.b16 %v444
  %v708 = vunpack.c.l.b16 %v445
  %v709 = vunpack.c.l.b16 %v446
  %v710 = vunpack.c.l.b16 %v447
  %v711 = vunpack.c.l.b16 %v448
  %v712 = vunpack.c.l.b16 %v449
  %v713 = vunpack.c.l.b16 %v450
  %v714 = vunpack.c.l.b16 %v451
  %v715 = vunpack.c.l.b16 %v452
  %v716 = vunpack.c.l.b16 %v453
  %v717 = vunpack.c.l.b16 %v454
  %v718 = vunpack.c.l.b16 %v455
  %v719 = vunpack.c.l.b16 %v456
  %v720 = vunpack.c.l.b16 %v457
  %v721 = vunpack.c.l.b16 %v458
  %v722 = vunpack.c.l.b16 %v459
  %v723 = vunpack.c.l.b16 %v460
  %v724 = vunpack.c.l.b16 %v461
  %v725 = vunpack.c.l.b16 %v462
  %v726 = vunpack.c.l.b16 %v463
  %v727 = vunpack.c.l.b16 %v464
  %v728 = vunpack.c.l.b16 %v465
  %v729 = vunpack.c.l.b16 %v466
  %v730 = vunpack.c.l.b16 %v467
  %v731 = vunpack.c.l.b16 %v468
  %v732 = vunpack.c.l.b16 %v469
  %v733 = vunpack.c.l.b16 %v470
  %v734 = vunpack.c.l.b16 %v471
  %v735 = vunpack.c.l.b16 %v472
  %v736 = vunpack.c.l.b16 %v473
  %v737 = vunpack.c.l.b16 %v474
  %v738 = vunpack.c.l.b16 %v475
  %v739 = vunpack.c.l.b16 %v476
  %v740 = vunpack.c.l.b16 %v477
  %v741 = vunpack.c.l.b16 %v478
  %v742 = vunpack.c.l.b16 %v479
  %v743 = vunpack.c.l.b16 %v480
  %v744 = vunpack.c.l.b16 %v481
  %v745 = vunpack.c.l.b16 %v482
  %v746 = vunpack.c.l.b16 %v483
  %v747 = vunpack.c.l.b16 %v484
  %v748 = vunpack.c.l.b16 %v485
  %v749 = vunpack.c.l.b16 %v486
  %v750 = vunpack.c.l.b16 %v487
  %v751 = vunpack.c.l.b16 %v488
  %v752 = vunpack.c.l.b16 %v489
  %v753 = vunpack.c.l.b16 %v490
  %v754 = vunpack.c.l.b16 %v491
  %v755 = vunpack.c.l.b16 %v492
  %v756 = vunpack.c.l.b16 %v493
  %v757 = vunpack.c.l.b16 %v494
  %v758 = vunpack.c.l.b16 %v495
  %v759 = vunpack.c.l.b16 %v496
  %v760 = vunpack.c.l.b16 %v497
  %v761 = vunpack.c.l.b16 %v498
  %v762 = vunpack.c.l.b16 %v499
  %v763 = vunpack.c.l.b16 %v500
  %v764 = vunpack.c.l.b16 %v501
  %v765 = vunpack.c.l.b16 %v502
  %v766 = vunpack.c.l.b16 %v503
  %v767 = vunpack.c.l.b16 %v504
  %v768 = vunpack.c.l.b16 %v505
  %v769 = vunpack.c.l.b16 %v506
  %v770 = vunpack.c.l.b16 %v507
  %v771 = vunpack.c.l.b16 %v508
  %v772 = vunpack.c.l.b16 %v509
  %v773 = vunpack.c.l.b16 %v510
  %v774 = vunpack.c.l.b16 %v511
  %v775 = vunpack.c.l.b16 %v512
  %v776 = vunpack.c.l.b16 %v513
  %v777 = vunpack.c.l.b16 %v514
  %v778 = vunpack.c.l.b16 %v515
  %v779 = vunpack.c.l.b16 %v516
  %v780 = vunpack.c.l.b16 %v517
  %v781 = vunpack.c.l.b16 %v518
  %v782 = vunpack.c.l.b16 %v519
  %v783 = vunpack.c.l.b16 %v520
  %v784 = vunpack.c.l.b16 %v521
  %v785 = vunpack.c.l.b16 %v522
  %v786 = vunpack.c.l.b16 %v523
  %v787 = vunpack.c.l.b16 %v524
  %v788 = vunpack.c.l.b16 %v525
  %v789 = vunpack.c.l.b16 %v526
  %v790 = vunpack.c.l.b16 %v527
  %v791 = vunpack.c.l.b16 %v528
  %v792 = vunpack.c.l.b16 %v529
  %v793 = vunpack.c.l.b16 %v530
  %v794 = vunpack.c.l.b16 %v531
  %v795 = vunpack.c.l.b16 %v532
  %v796 = vunpack.c.l.b16 %v533
  %v797 = vunpack.c.l.b16 %v534
  %v798 = vunpack.c.l.b16 %v535
  %v799 = vunpack.c.l.b16 %v536
  %v800 = vunpack.c.l.b16 %v537
  %v801 = vunpack.c.l.b16 %v538
  %v802 = vunpack.c.l.b16 %v539
  %v803 = vunpack.c.l.b16 %v540
  %v804 = vunpack.c.l.b16 %v541
  %v805 = vunpack.c.l.b16 %v542
  %v806 = vunpack.c.l.b16 %v543
  %v807 = vunpack.c.l.b16 %v544
  %v808 = vunpack.c.l.b16 %v545
  %v809 = vunpack.c.l.b16 %v546
  %v810 = vunpack.c.l.b16 %v547
  %v811 = vunpack.c.l.b16 %v548
  %v812 = vunpack.c.l.b16 %v549
  %v813 = vunpack.c.l.b16 %v550
  %v814 = vunpack.c.l.b16 %v551
  %v815 = vunpack.c.l.b16 %v552
  %v816 = vunpack.c.l.b16 %v553
  %v817 = vunpack.c.l.b16 %v554
  %v818 = vunpack.c.l.b16 %v555
  %v819 = vunpack.c.l.b16 %v556
  %v820 = vunpack.c.l.b16 %v557
  %v821 = vunpack.c.l.b16 %v558
  %v822 = vunpack.c.l.b16 %v559
  %v823 = vunpack.c.l.b16 %v560
  %v824 = vunpack.c.l.b16 %v561
  %v825 = vunpack.c.l.b16 %v562
  %v826 = vunpack.c.l.b16 %v563
  %v827 = vunpack.c.l.b16 %v564
  %v828 = vunpack.c.l.b16 %v565
  %v829 = vunpack.c.l.b16 %v566
  %v830 = vunpack.c.l.b16 %v567
  %v831 = vpack.c.b16 %v704, %v703
  %v832 = vpack.c.b16 %v706, %v705
  %v833 = vpack.c.b16 %v708, %v707
  %v834 = vpack.c.b16 %v710, %v709
  %v835 = vpack.c.b16 %v712, %v711
  %v836 = vpack.c.b16 %v714, %v713
  %v837 = vpack.c.b16 %v716, %v715
  %v838 = vpack.c.b16 %v718, %v717
  %v839 = vpack.c.b16 %v720, %v719
  %v840 = vpack.c.b16 %v722, %v721
  %v841 = vpack.c.b16 %v724, %v723
  %v842 = vpack.c.b16 %v726, %v725
  %v843 = vpack.c.b16 %v728, %v727
  %v844 = vpack.c.b16 %v730, %v729
  %v845 = vpack.c.b16 %v732, %v731
  %v846 = vpack.c.b16 %v734, %v733
  %v847 = vpack.c.b16 %v736, %v735
  %v848 = vpack.c.b16 %v738, %v737
  %v849 = vpack.c.b16 %v740, %v739
  %v850 = vpack.c.b16 %v742, %v741
  %v851 = vpack.c.b16 %v744, %v743
  %v852 = vpack.c.b16 %v746, %v745
  %v853 = vpack.c.b16 %v748, %v747
  %v854 = vpack.c.b16 %v750, %v749
  %v855 = vpack.c.b16 %v752, %v751
  %v856 = vpack.c.b16 %v754, %v753
  %v857 = vpack.c.b16 %v756, %v755
  %v858 = vpack.c.b16 %v758, %v757
  %v859 = vpack.c.b16 %v760, %v759
  %v860 = vpack.c.b16 %v762, %v761
  %v861 = vpack.c.b16 %v764, %v763
  %v862 = vpack.c.b16 %v766, %v765
  %v863 = vpack.c.b16 %v768, %v767
  %v864 = vpack.c.b16 %v770, %v769
  %v865 = vpack.c.b16 %v772, %v771
  %v866 = vpack.c.b16 %v774, %v773
  %v867 = vpack.c.b16 %v776, %v775
  %v868 = vpack.c.b16 %v778, %v777
  %v869 = vpack.c.b16 %v780, %v779
  %v870 = vpack.c.b16 %v782, %v781
  %v871 = vpack.c.b16 %v784, %v783
  %v872 = vpack.c.b16 %v786, %v785
  %v873 = vpack.c.b16 %v788, %v787
  %v874 = vpack.c.b16 %v790, %v789
  %v875 = vpack.c.b16 %v792, %v791
  %v876 = vpack.c.b16 %v794, %v793
  %v877 = vpack.c.b16 %v796, %v795
  %v878 = vpack.c.b16 %v798, %v797
  %v879 = vpack.c.b16 %v800, %v799
  %v880 = vpack.c.b16 %v802, %v801
  %v881 = vpack.c.b16 %v804, %v803
  %v882 = vpack.c.b16 %v806, %v805
  %v883 = vpack.c.b16 %v808, %v807
  %v884 = vpack.c.b16 %v810, %v809
  %v885 = vpack.c.b16 %v812, %v811
  %v886 = vpack.c.b16 %v814, %v813
  %v887 = vpack.c.b16 %v816, %v815
  %v888 = vpack.c.b16 %v818, %v817
  %v889 = vpack.c.b16 %v820, %v819
  %v890 = vpack.c.b16 %v822, %v821
  %v891 = vpack.c.b16 %v824, %v823
  %v892 = vpack.c.b16 %v826, %v825
  %v893 = vpack.c.b16 %v828, %v827
  %v894 = vpack.c.b16 %v830, %v829
  %959 = vmatprep.subr.bf16.mxu0 0
  %960 = vmatpush1.bf16.msra.mxu0 %v831
  %961 = vmatprep.subr.bf16.mxu0 0
  %962 = vmatpush1.bf16.msra.mxu0 %v832
  %963 = vmatprep.subr.bf16.mxu0 0
  %964 = vmatpush1.bf16.msra.mxu0 %v833
  %965 = vmatprep.subr.bf16.mxu0 0
  %966 = vmatpush1.bf16.msra.mxu0 %v834
  %967 = vmatprep.subr.bf16.mxu0 0
  %968 = vmatpush1.bf16.msra.mxu0 %v835
  %969 = vmatprep.subr.bf16.mxu0 0
  %970 = vmatpush1.bf16.msra.mxu0 %v836
  %971 = vmatprep.subr.bf16.mxu0 0
  %972 = vmatpush1.bf16.msra.mxu0 %v837
  %973 = vmatprep.subr.bf16.mxu0 0
  %974 = vmatpush1.bf16.msra.mxu0 %v838
  %975 = vmatprep.subr.bf16.mxu0 0
  %976 = vmatpush1.bf16.msra.mxu0 %v839
  %977 = vmatprep.subr.bf16.mxu0 0
  %978 = vmatpush1.bf16.msra.mxu0 %v840
  %979 = vmatprep.subr.bf16.mxu0 0
  %980 = vmatpush1.bf16.msra.mxu0 %v841
  %981 = vmatprep.subr.bf16.mxu0 0
  %982 = vmatpush1.bf16.msra.mxu0 %v842
  %983 = vmatprep.subr.bf16.mxu0 0
  %984 = vmatpush1.bf16.msra.mxu0 %v843
  %985 = vmatprep.subr.bf16.mxu0 0
  %986 = vmatpush1.bf16.msra.mxu0 %v844
  %987 = vmatprep.subr.bf16.mxu0 0
  %988 = vmatpush1.bf16.msra.mxu0 %v845
  %989 = vmatprep.subr.bf16.mxu0 0
  %990 = vmatpush1.bf16.msra.mxu0 %v846
  %991 = vmatprep.mubr.bf16.mxu0 %v433
  %992 = vmatmul.mubr.bf16.gmra.mrb[0].mxu0 %v432
  %v993 = vpop.f32.mrb[0].mxu0
  %v994 = vadd.f32 %v573, %v993
  %v995 = vpop.f32.mrb[0].mxu0
  %v996 = vpop.f32.mrb[0].mxu0
  %v997 = vpop.f32.mrb[0].mxu0
  %998 = vdwg.mxu0
  %999 = vmatprep.subr.bf16.mxu0 0
  %1000 = vmatpush1.bf16.msra.mxu0 %v847
  %1001 = vmatprep.subr.bf16.mxu0 0
  %1002 = vmatpush1.bf16.msra.mxu0 %v848
  %1003 = vmatprep.subr.bf16.mxu0 0
  %1004 = vmatpush1.bf16.msra.mxu0 %v849
  %1005 = vmatprep.subr.bf16.mxu0 0
  %1006 = vmatpush1.bf16.msra.mxu0 %v850
  %1007 = vmatprep.subr.bf16.mxu0 0
  %1008 = vmatpush1.bf16.msra.mxu0 %v851
  %1009 = vmatprep.subr.bf16.mxu0 0
  %1010 = vmatpush1.bf16.msra.mxu0 %v852
  %1011 = vmatprep.subr.bf16.mxu0 0
  %1012 = vmatpush1.bf16.msra.mxu0 %v853
  %1013 = vmatprep.subr.bf16.mxu0 0
  %1014 = vmatpush1.bf16.msra.mxu0 %v854
  %1015 = vmatprep.subr.bf16.mxu0 0
  %1016 = vmatpush1.bf16.msra.mxu0 %v855
  %1017 = vmatprep.subr.bf16.mxu0 0
  %1018 = vmatpush1.bf16.msra.mxu0 %v856
  %1019 = vmatprep.subr.bf16.mxu0 0
  %1020 = vmatpush1.bf16.msra.mxu0 %v857
  %1021 = vmatprep.subr.bf16.mxu0 0
  %1022 = vmatpush1.bf16.msra.mxu0 %v858
  %1023 = vmatprep.subr.bf16.mxu0 0
  %1024 = vmatpush1.bf16.msra.mxu0 %v859
  %1025 = vmatprep.subr.bf16.mxu0 0
  %1026 = vmatpush1.bf16.msra.mxu0 %v860
  %1027 = vmatprep.subr.bf16.mxu0 0
  %1028 = vmatpush1.bf16.msra.mxu0 %v861
  %1029 = vmatprep.subr.bf16.mxu0 0
  %1030 = vmatpush1.bf16.msra.mxu0 %v862
  %1031 = vmatprep.mubr.bf16.mxu0 %v435
  %1032 = vmatmul.mubr.bf16.gmra.mrb[0].mxu0 %v434
  %v1033 = vpop.f32.mrb[0].mxu0
  %v1034 = vadd.f32 %v994, %v1033
  %v1035 = vpop.f32.mrb[0].mxu0
  %v1036 = vpop.f32.mrb[0].mxu0
  %v1037 = vpop.f32.mrb[0].mxu0
  %1038 = vdwg.mxu0
  %1039 = vmatprep.subr.bf16.mxu0 0
  %1040 = vmatpush1.bf16.msra.mxu0 %v863
  %1041 = vmatprep.subr.bf16.mxu0 0
  %1042 = vmatpush1.bf16.msra.mxu0 %v864
  %1043 = vmatprep.subr.bf16.mxu0 0
  %1044 = vmatpush1.bf16.msra.mxu0 %v865
  %1045 = vmatprep.subr.bf16.mxu0 0
  %1046 = vmatpush1.bf16.msra.mxu0 %v866
  %1047 = vmatprep.subr.bf16.mxu0 0
  %1048 = vmatpush1.bf16.msra.mxu0 %v867
  %1049 = vmatprep.subr.bf16.mxu0 0
  %1050 = vmatpush1.bf16.msra.mxu0 %v868
  %1051 = vmatprep.subr.bf16.mxu0 0
  %1052 = vmatpush1.bf16.msra.mxu0 %v869
  %1053 = vmatprep.subr.bf16.mxu0 0
  %1054 = vmatpush1.bf16.msra.mxu0 %v870
  %1055 = vmatprep.subr.bf16.mxu0 0
  %1056 = vmatpush1.bf16.msra.mxu0 %v871
  %1057 = vmatprep.subr.bf16.mxu0 0
  %1058 = vmatpush1.bf16.msra.mxu0 %v872
  %1059 = vmatprep.subr.bf16.mxu0 0
  %1060 = vmatpush1.bf16.msra.mxu0 %v873
  %1061 = vmatprep.subr.bf16.mxu0 0
  %1062 = vmatpush1.bf16.msra.mxu0 %v874
  %1063 = vmatprep.subr.bf16.mxu0 0
  %1064 = vmatpush1.bf16.msra.mxu0 %v875
  %1065 = vmatprep.subr.bf16.mxu0 0
  %1066 = vmatpush1.bf16.msra.mxu0 %v876
  %1067 = vmatprep.subr.bf16.mxu0 0
  %1068 = vmatpush1.bf16.msra.mxu0 %v877
  %1069 = vmatprep.subr.bf16.mxu0 0
  %1070 = vmatpush1.bf16.msra.mxu0 %v878
  %1071 = vmatprep.mubr.bf16.mxu0 %v437
  %1072 = vmatmul.mubr.bf16.gmra.mrb[0].mxu0 %v436
  %v1073 = vpop.f32.mrb[0].mxu0
  %v1074 = vadd.f32 %v1034, %v1073
  %v1075 = vpop.f32.mrb[0].mxu0
  %v1076 = vpop.f32.mrb[0].mxu0
  %v1077 = vpop.f32.mrb[0].mxu0
  %1078 = vdwg.mxu0
  %1079 = vmatprep.subr.bf16.mxu0 0
  %1080 = vmatpush1.bf16.msra.mxu0 %v879
  %1081 = vmatprep.subr.bf16.mxu0 0
  %1082 = vmatpush1.bf16.msra.mxu0 %v880
  %1083 = vmatprep.subr.bf16.mxu0 0
  %1084 = vmatpush1.bf16.msra.mxu0 %v881
  %1085 = vmatprep.subr.bf16.mxu0 0
  %1086 = vmatpush1.bf16.msra.mxu0 %v882
  %1087 = vmatprep.subr.bf16.mxu0 0
  %1088 = vmatpush1.bf16.msra.mxu0 %v883
  %1089 = vmatprep.subr.bf16.mxu0 0
  %1090 = vmatpush1.bf16.msra.mxu0 %v884
  %1091 = vmatprep.subr.bf16.mxu0 0
  %1092 = vmatpush1.bf16.msra.mxu0 %v885
  %1093 = vmatprep.subr.bf16.mxu0 0
  %1094 = vmatpush1.bf16.msra.mxu0 %v886
  %1095 = vmatprep.subr.bf16.mxu0 0
  %1096 = vmatpush1.bf16.msra.mxu0 %v887
  %1097 = vmatprep.subr.bf16.mxu0 0
  %1098 = vmatpush1.bf16.msra.mxu0 %v888
  %1099 = vmatprep.subr.bf16.mxu0 0
  %1100 = vmatpush1.bf16.msra.mxu0 %v889
  %1101 = vmatprep.subr.bf16.mxu0 0
  %1102 = vmatpush1.bf16.msra.mxu0 %v890
  %1103 = vmatprep.subr.bf16.mxu0 0
  %1104 = vmatpush1.bf16.msra.mxu0 %v891
  %1105 = vmatprep.subr.bf16.mxu0 0
  %1106 = vmatpush1.bf16.msra.mxu0 %v892
  %1107 = vmatprep.subr.bf16.mxu0 0
  %1108 = vmatpush1.bf16.msra.mxu0 %v893
  %1109 = vmatprep.subr.bf16.mxu0 0
  %1110 = vmatpush1.bf16.msra.mxu0 %v894
  %1111 = vmatprep.mubr.bf16.mxu0 %v439
  %1112 = vmatmul.mubr.bf16.gmra.mrb[0].mxu0 %v438
  %v1113 = vpop.f32.mrb[0].mxu0
  %v1114 = vadd.f32 %v1074, %v1113
  %v1115 = vpop.f32.mrb[0].mxu0
  %v1116 = vpop.f32.mrb[0].mxu0
  %v1117 = vpop.f32.mrb[0].mxu0
  %1118 = vdwg.mxu0
  %1119 = vst [vmem:[%s5] sm:$0x3] %v1114
  // Predicated region
  $region22: #{atari_a2c_forward.3} parent=0 // pred_check
    _
  $region23: #{atari_a2c_forward.3} parent=0 // pred_check_branch
    %1121 = sbr.rel (0) target = $region25
  $region24: #{atari_a2c_forward.3} parent=0 // pred_region
    _
  $region25: #{atari_a2c_forward.3} parent=0 // pred_fallthru
    _
  // Predicated region
  $region26: #{atari_a2c_forward.3} parent=0 // pred_check
    _
  $region27: #{atari_a2c_forward.3} parent=0 // pred_check_branch
    %1123 = sbr.rel (0) target = $region29
  $region28: #{atari_a2c_forward.3} parent=0 // pred_region
    _
  $region29: #{atari_a2c_forward.3} parent=0 // pred_fallthru
    _

// kernel: atari_a2c_forward.2
$region0: #{atari_a2c_forward.2}
  #allocation0 [shape = 'u32[]', space=smem, size = 0x4, offset = 0x4, fixed_abs, tag = 'smem constant byte address 0x4 - core index']
  #allocation1 [shape = 'u32[144,128]{1,0:T(1,128)}', space=vmem, size = 0x12000, scoped, tag = 'internal scratch']
  #allocation2 [shape = 'f32[16,1024]{1,0:T(8,128)}', space=vmem, size = 0x10000, scoped, tag = 'scratch operand']
  #allocation3 [shape = 'f32[9,512]{1,0:T(8,128)}', space=vmem, size = 0x8000, scoped, tag = 'scratch operand']
  #allocation4 [shape = 'f32[1,576]{1,0:T(1,128)}', space=vmem, size = 0xa00, scoped, tag = 'scratch operand']
  %s0 = inlined_call_operand.vmem [shape: bf16[2,5,5,256], index: 0, kind: input, shape index: {}]
  %s1 = inlined_call_operand.vmem [shape: bf16[1024,128], index: 1, kind: input, shape index: {}]
  %s2 = inlined_call_operand.vmem [shape: f32[1,128], index: 2, kind: input, shape index: {}]
  %s3 = inlined_call_operand.vmem [shape: bf16[512,64], index: 3, kind: input, shape index: {}]
  %s4 = inlined_call_operand.vmem [shape: f32[1,64], index: 4, kind: input, shape index: {}]
  %s5 = inlined_call_operand.vmem [shape: bf16[576,64], index: 5, kind: input, shape index: {}]
  %s6 = inlined_call_operand.vmem [shape: f32[1,64], index: 6, kind: input, shape index: {}]
  %s7 = inlined_call_operand.vmem [shape: bf16[2,1,64], index: 7, kind: output, shape index: {}]
  %s8 = sld [smem:[#allocation0]]
  $region61: #{atari_a2c_forward.2} parent=0
    _
  %s10 = ssub.s32 1, %s8
  %s11 = scalar_select 0, %s10, %s8
  loop: start=0, step=1, limit=4
  $region2: #{atari_a2c_forward.2} parent=0 // loop_pre_header
    _
  $region3: #{atari_a2c_forward.2} parent=0 // loop_header
    %s13 = sphi 0, %s17
    %p14 = scmp.ge.s32.totalorder %s13, 4
    %s23 = sphi 0, %s25
    %s26 = sphi 0, %s23
    %s27 = sphi 0, %s26
    %s43 = sphi 0, %s27
    %s47 = sphi 0, %s47
    %s49 = sphi 0, %s47
    %s50 = sphi 0, %s49
    %s64 = sphi 0, %s50
    %s68 = sphi 0, %s68
    %s70 = sphi 0, %s68
    %s71 = sphi 0, %s70
    %s85 = sphi 0, %s71
    %s89 = sphi 0, %s89
    %s91 = sphi 0, %s89
    %s92 = sphi 0, %s91
    %s106 = sphi 0, %s92
    %s110 = sphi 0, %s110
    %s112 = sphi 0, %s110
    %s113 = sphi 0, %s112
    %s127 = sphi 0, %s113
    %s131 = sphi 0, %s131
    %s133 = sphi 0, %s131
    %s134 = sphi 0, %s133
    %s148 = sphi 0, %s134
    %s152 = sphi 0, %s152
    %s154 = sphi 0, %s152
    %s155 = sphi 0, %s154
    %s169 = sphi 0, %s155
    %s175 = sphi 0, %s177
    %s178 = sphi 0, %s175
    %s179 = sphi 0, %s178
    %s195 = sphi 0, %s179
  $region4: #{atari_a2c_forward.2} parent=0 // loop_header_branch
    %16 = sbr.rel (%p14) target = $region8
  $region5: #{atari_a2c_forward.2} parent=0 // loop_body
    %s18 = ssub.s32 %s13, 1
    %s19 = ssub.s32 %s13, 2
    %s20 = sadd.s32 %s13, 1
    %s21 = ssub.s32 %s13, %s20
    %p22 = scmp.eq.s32.totalorder %s21, 0
    %s24 = sadd.s32 %s23, 1
    %s25 = scalar_select %p22, %s23, %s24
    %p28 = pneg %p22
    %p29 = scmp.eq.s32.totalorder %s13, 1
    %p30 = por %p28, %p29
    %p31 = scmp.ne.s32.totalorder %s23, %s26
    %p32 = scmp.eq.s32.totalorder %s13, 0
    %p33 = por %p31, %p32
    %p34 = scmp.ne.s32.totalorder %s23, %s26
    %p35 = scmp.eq.s32.totalorder %s18, 1
    %p36 = por %p34, %p35
    %p37 = scmp.ne.s32.totalorder %s26, %s27
    %p38 = scmp.eq.s32.totalorder %s18, 0
    %p39 = por %p37, %p38
    %p40 = scmp.ne.s32.totalorder %s26, %s27
    %p41 = scmp.eq.s32.totalorder %s19, 1
    %p42 = por %p40, %p41
    %p44 = scmp.ne.s32.totalorder %s27, %s43
    %p45 = scmp.eq.s32.totalorder %s19, 0
    %p46 = por %p44, %p45
    %s48 = sadd.s32 %s47, 1
    %p51 = scmp.eq.s32.totalorder %s13, 1
    %p52 = scmp.ne.s32.totalorder %s47, %s49
    %p53 = scmp.eq.s32.totalorder %s13, 0
    %p54 = por %p52, %p53
    %p55 = scmp.ne.s32.totalorder %s47, %s49
    %p56 = scmp.eq.s32.totalorder %s18, 1
    %p57 = por %p55, %p56
    %p58 = scmp.ne.s32.totalorder %s49, %s50
    %p59 = scmp.eq.s32.totalorder %s18, 0
    %p60 = por %p58, %p59
    %p61 = scmp.ne.s32.totalorder %s49, %s50
    %p62 = scmp.eq.s32.totalorder %s19, 1
    %p63 = por %p61, %p62
    %p65 = scmp.ne.s32.totalorder %s50, %s64
    %p66 = scmp.eq.s32.totalorder %s19, 0
    %p67 = por %p65, %p66
    %s69 = sadd.s32 %s68, 1
    %p72 = scmp.eq.s32.totalorder %s13, 1
    %p73 = scmp.ne.s32.totalorder %s68, %s70
    %p74 = scmp.eq.s32.totalorder %s13, 0
    %p75 = por %p73, %p74
    %p76 = scmp.ne.s32.totalorder %s68, %s70
    %p77 = scmp.eq.s32.totalorder %s18, 1
    %p78 = por %p76, %p77
    %p79 = scmp.ne.s32.totalorder %s70, %s71
    %p80 = scmp.eq.s32.totalorder %s18, 0
    %p81 = por %p79, %p80
    %p82 = scmp.ne.s32.totalorder %s70, %s71
    %p83 = scmp.eq.s32.totalorder %s19, 1
    %p84 = por %p82, %p83
    %p86 = scmp.ne.s32.totalorder %s71, %s85
    %p87 = scmp.eq.s32.totalorder %s19, 0
    %p88 = por %p86, %p87
    %s90 = sadd.s32 %s89, 1
    %p93 = scmp.eq.s32.totalorder %s13, 1
    %p94 = scmp.ne.s32.totalorder %s89, %s91
    %p95 = scmp.eq.s32.totalorder %s13, 0
    %p96 = por %p94, %p95
    %p97 = scmp.ne.s32.totalorder %s89, %s91
    %p98 = scmp.eq.s32.totalorder %s18, 1
    %p99 = por %p97, %p98
    %p100 = scmp.ne.s32.totalorder %s91, %s92
    %p101 = scmp.eq.s32.totalorder %s18, 0
    %p102 = por %p100, %p101
    %p103 = scmp.ne.s32.totalorder %s91, %s92
    %p104 = scmp.eq.s32.totalorder %s19, 1
    %p105 = por %p103, %p104
    %p107 = scmp.ne.s32.totalorder %s92, %s106
    %p108 = scmp.eq.s32.totalorder %s19, 0
    %p109 = por %p107, %p108
    %s111 = sadd.s32 %s110, 1
    %p114 = scmp.eq.s32.totalorder %s13, 1
    %p115 = scmp.ne.s32.totalorder %s110, %s112
    %p116 = scmp.eq.s32.totalorder %s13, 0
    %p117 = por %p115, %p116
    %p118 = scmp.ne.s32.totalorder %s110, %s112
    %p119 = scmp.eq.s32.totalorder %s18, 1
    %p120 = por %p118, %p119
    %p121 = scmp.ne.s32.totalorder %s112, %s113
    %p122 = scmp.eq.s32.totalorder %s18, 0
    %p123 = por %p121, %p122
    %p124 = scmp.ne.s32.totalorder %s112, %s113
    %p125 = scmp.eq.s32.totalorder %s19, 1
    %p126 = por %p124, %p125
    %p128 = scmp.ne.s32.totalorder %s113, %s127
    %p129 = scmp.eq.s32.totalorder %s19, 0
    %p130 = por %p128, %p129
    %s132 = sadd.s32 %s131, 1
    %p135 = scmp.eq.s32.totalorder %s13, 1
    %p136 = scmp.ne.s32.totalorder %s131, %s133
    %p137 = scmp.eq.s32.totalorder %s13, 0
    %p138 = por %p136, %p137
    %p139 = scmp.ne.s32.totalorder %s131, %s133
    %p140 = scmp.eq.s32.totalorder %s18, 1
    %p141 = por %p139, %p140
    %p142 = scmp.ne.s32.totalorder %s133, %s134
    %p143 = scmp.eq.s32.totalorder %s18, 0
    %p144 = por %p142, %p143
    %p145 = scmp.ne.s32.totalorder %s133, %s134
    %p146 = scmp.eq.s32.totalorder %s19, 1
    %p147 = por %p145, %p146
    %p149 = scmp.ne.s32.totalorder %s134, %s148
    %p150 = scmp.eq.s32.totalorder %s19, 0
    %p151 = por %p149, %p150
    %s153 = sadd.s32 %s152, 1
    %p156 = scmp.eq.s32.totalorder %s13, 1
    %p157 = scmp.ne.s32.totalorder %s152, %s154
    %p158 = scmp.eq.s32.totalorder %s13, 0
    %p159 = por %p157, %p158
    %p160 = scmp.ne.s32.totalorder %s152, %s154
    %p161 = scmp.eq.s32.totalorder %s18, 1
    %p162 = por %p160, %p161
    %p163 = scmp.ne.s32.totalorder %s154, %s155
    %p164 = scmp.eq.s32.totalorder %s18, 0
    %p165 = por %p163, %p164
    %p166 = scmp.ne.s32.totalorder %s154, %s155
    %p167 = scmp.eq.s32.totalorder %s19, 1
    %p168 = por %p166, %p167
    %p170 = scmp.ne.s32.totalorder %s155, %s169
    %p171 = scmp.eq.s32.totalorder %s19, 0
    %p172 = por %p170, %p171
    %s173 = ssub.s32 %s13, %s20
    %p174 = scmp.eq.s32.totalorder %s173, 0
    %s176 = sadd.s32 %s175, 1
    %s177 = scalar_select %p174, %s175, %s176
    %p180 = pneg %p174
    %p181 = scmp.eq.s32.totalorder %s13, 1
    %p182 = por %p180, %p181
    %p183 = scmp.ne.s32.totalorder %s175, %s178
    %p184 = scmp.eq.s32.totalorder %s13, 0
    %p185 = por %p183, %p184
    %p186 = scmp.ne.s32.totalorder %s175, %s178
    %p187 = scmp.eq.s32.totalorder %s18, 1
    %p188 = por %p186, %p187
    %p189 = scmp.ne.s32.totalorder %s178, %s179
    %p190 = scmp.eq.s32.totalorder %s18, 0
    %p191 = por %p189, %p190
    %p192 = scmp.ne.s32.totalorder %s178, %s179
    %p193 = scmp.eq.s32.totalorder %s19, 1
    %p194 = por %p192, %p193
    %p196 = scmp.ne.s32.totalorder %s179, %s195
    %p197 = scmp.eq.s32.totalorder %s19, 0
    %p198 = por %p196, %p197
    %p199 = scmp.le.s32.totalorder 1, %s13
    %p200 = scmp.lt.s32.totalorder %s13, 3
    %p201 = pnand %p199, %p200
    %p202 = pneg %p201
    // Predicated region
    $region9: #{atari_a2c_forward.2} parent=5 // pred_check
      _
    $region10: #{atari_a2c_forward.2} parent=5 // pred_check_branch
      %204 = sbr.rel (%p201) target = $region12
    $region11: #{atari_a2c_forward.2} parent=5 // pred_region
      %s205 = ssub.s32 %s13, 1
      // Predicated region
      $region13: #{atari_a2c_forward.2} parent=11 // pred_check
        %p206 = pneg %p60
      $region14: #{atari_a2c_forward.2} parent=11 // pred_check_branch
        %208 = sbr.rel (%p206) target = $region16
      $region15: #{atari_a2c_forward.2} parent=11 // pred_region
        _
      $region16: #{atari_a2c_forward.2} parent=11 // pred_fallthru
        _
      // Predicated region
      $region17: #{atari_a2c_forward.2} parent=11 // pred_check
        %p209 = pneg %p81
      $region18: #{atari_a2c_forward.2} parent=11 // pred_check_branch
        %211 = sbr.rel (%p209) target = $region20
      $region19: #{atari_a2c_forward.2} parent=11 // pred_region
        _
      $region20: #{atari_a2c_forward.2} parent=11 // pred_fallthru
        _
      // Predicated region
      $region21: #{atari_a2c_forward.2} parent=11 // pred_check
        %p212 = pneg %p102
      $region22: #{atari_a2c_forward.2} parent=11 // pred_check_branch
        %214 = sbr.rel (%p212) target = $region24
      $region23: #{atari_a2c_forward.2} parent=11 // pred_region
        _
      $region24: #{atari_a2c_forward.2} parent=11 // pred_fallthru
        _
      // Predicated region
      $region25: #{atari_a2c_forward.2} parent=11 // pred_check
        %p215 = pneg %p123
      $region26: #{atari_a2c_forward.2} parent=11 // pred_check_branch
        %217 = sbr.rel (%p215) target = $region28
      $region27: #{atari_a2c_forward.2} parent=11 // pred_region
        _
      $region28: #{atari_a2c_forward.2} parent=11 // pred_fallthru
        _
      // Predicated region
      $region29: #{atari_a2c_forward.2} parent=11 // pred_check
        %p218 = pneg %p144
      $region30: #{atari_a2c_forward.2} parent=11 // pred_check_branch
        %220 = sbr.rel (%p218) target = $region32
      $region31: #{atari_a2c_forward.2} parent=11 // pred_region
        _
      $region32: #{atari_a2c_forward.2} parent=11 // pred_fallthru
        _
      // Predicated region
      $region33: #{atari_a2c_forward.2} parent=11 // pred_check
        %p221 = pneg %p165
      $region34: #{atari_a2c_forward.2} parent=11 // pred_check_branch
        %223 = sbr.rel (%p221) target = $region36
      $region35: #{atari_a2c_forward.2} parent=11 // pred_region
        _
      $region36: #{atari_a2c_forward.2} parent=11 // pred_fallthru
        _
    $region12: #{atari_a2c_forward.2} parent=5 // pred_fallthru
      _
    %p224 = scmp.lt.s32.totalorder %s13, 2
    // Predicated region
    $region37: #{atari_a2c_forward.2} parent=5 // pred_check
      %p225 = pneg %p224
    $region38: #{atari_a2c_forward.2} parent=5 // pred_check_branch
      %227 = sbr.rel (%p225) target = $region40
    $region39: #{atari_a2c_forward.2} parent=5 // pred_region
      // Predicated region
      $region41: #{atari_a2c_forward.2} parent=39 // pred_check
        %p228 = pneg %p33
      $region42: #{atari_a2c_forward.2} parent=39 // pred_check_branch
        %230 = sbr.rel (%p228) target = $region44
      $region43: #{atari_a2c_forward.2} parent=39 // pred_region
        %p231 = scmp.lt.s32.totalorder %s13, 1
        %s232 = scalar_select %p231, %s13, 1
        %s233 = smul.addr %s232, 10
        %s234 = smul.addr %s233, 4
        %s235 = scalar_lea.vmem %s0, %s234
      $region44: #{atari_a2c_forward.2} parent=39 // pred_fallthru
        _
    $region40: #{atari_a2c_forward.2} parent=5 // pred_fallthru
      _
    %p236 = scmp.le.s32.totalorder 1, %s13
    %p237 = scmp.lt.s32.totalorder %s13, 3
    %p238 = pnand %p236, %p237
    %p239 = pneg %p238
    // Predicated region
    $region45: #{atari_a2c_forward.2} parent=5 // pred_check
      _
    $region46: #{atari_a2c_forward.2} parent=5 // pred_check_branch
      %241 = sbr.rel (%p238) target = $region48
    $region47: #{atari_a2c_forward.2} parent=5 // pred_region
      %s242 = ssub.s32 %s13, 1
      %p243 = scmp.lt.s32.totalorder %s18, 1
      %s244 = scalar_select %p243, %s18, 1
      %s245 = smul.addr %s244, 10
      %s246 = smul.addr %s245, 4
      %s247 = scalar_lea.vmem %s0, %s246
      %p248 = pneg %p39
      %p249 = pneg %p36
      %p250 = pneg %p60
      %p251 = pneg %p57
      %p252 = pneg %p81
      %p253 = pneg %p78
      %p254 = pneg %p102
      %p255 = pneg %p99
      %p256 = pneg %p123
      %p257 = pneg %p120
      %p258 = pneg %p144
      %p259 = pneg %p141
      %p260 = pneg %p165
      %p261 = pneg %p162
      %p262 = pneg %p191
      %p263 = pneg %p188
      %p264 = scmp.lt.s32.totalorder %s18, 1
      %s265 = scalar_select %p264, %s18, 1
      %s266 = scalar_lea.vmem %s7, %s265
      %p267 = scmp.lt.s32.totalorder %s18, 1
      %s268 = scalar_select %p267, %s18, 1
      %s269 = smul.addr %s268, 10
      %s270 = smul.addr %s269, 4
      %s271 = scalar_lea.vmem %s0, %s270
      %p272 = scmp.lt.s32.totalorder %s18, 1
      %s273 = scalar_select %p272, %s18, 1
      %s274 = scalar_lea.vmem %s7, %s273
      %v276 = vld [vmem:[%s271] sm:$0x33]
      %v277 = vunpack.c.l.bf16 %v276
      %v278 = vunpack.c.h.bf16 %v276
      %279 = vst [vmem:[#allocation2] sm:$0xf] %v277
      %280 = vst [vmem:[#allocation2 + $0x8] sm:$0xf] %v278
      %v281 = vld [vmem:[%s271] sm:$0x77]
      %v282 = vunpack.c.l.bf16 %v281
      %v283 = vunpack.c.h.bf16 %v281
      %v286 = vrot.slane %v282, 1
      %v287 = vrot.slane %v283, 1
      %290 = vst [vmem:[#allocation2 + $0x10] sm:$0xf] %v286
      %291 = vst [vmem:[#allocation2 + $0x18] sm:$0xf] %v287
      %s292 = scalar_lea.vmem %s271, 8
      %v293 = vld [vmem:[%s292] sm:$0x33]
      %v294 = vunpack.c.l.bf16 %v293
      %v295 = vunpack.c.h.bf16 %v293
      %296 = vst [vmem:[#allocation2 + $0x20] sm:$0xf] %v294
      %297 = vst [vmem:[#allocation2 + $0x28] sm:$0xf] %v295
      %v298 = vld [vmem:[%s292] sm:$0x77]
      %v299 = vunpack.c.l.bf16 %v298
      %v300 = vunpack.c.h.bf16 %v298
      %v303 = vrot.slane %v299, 1
      %v304 = vrot.slane %v300, 1
      %307 = vst [vmem:[#allocation2 + $0x30] sm:$0xf] %v303
      %308 = vst [vmem:[#allocation2 + $0x38] sm:$0xf] %v304
      %v309 = vld [vmem:[%s292] sm:$0x33]
      %v310 = vunpack.c.l.bf16 %v309
      %v311 = vunpack.c.h.bf16 %v309
      %v314 = vrot.slane %v310, 4
      %v315 = vrot.slane %v311, 4
      %318 = vst [vmem:[#allocation2] sm:$0xf0] %v314
      %319 = vst [vmem:[#allocation2 + $0x8] sm:$0xf0] %v315
      %v320 = vld [vmem:[%s292] sm:$0x77]
      %v321 = vunpack.c.l.bf16 %v320
      %v322 = vunpack.c.h.bf16 %v320
      %v325 = vrot.slane %v321, 5
      %v326 = vrot.slane %v322, 5
      %329 = vst [vmem:[#allocation2 + $0x10] sm:$0xf0] %v325
      %330 = vst [vmem:[#allocation2 + $0x18] sm:$0xf0] %v326
      %s331 = scalar_lea.vmem %s271, 16
      %v332 = vld [vmem:[%s331] sm:$0x33]
      %v333 = vunpack.c.l.bf16 %v332
      %v334 = vunpack.c.h.bf16 %v332
      %v337 = vrot.slane %v333, 4
      %v338 = vrot.slane %v334, 4
      %341 = vst [vmem:[#allocation2 + $0x20] sm:$0xf0] %v337
      %342 = vst [vmem:[#allocation2 + $0x28] sm:$0xf0] %v338
      %v343 = vld [vmem:[%s331] sm:$0x77]
      %v344 = vunpack.c.l.bf16 %v343
      %v345 = vunpack.c.h.bf16 %v343
      %v348 = vrot.slane %v344, 5
      %v349 = vrot.slane %v345, 5
      %352 = vst [vmem:[#allocation2 + $0x30] sm:$0xf0] %v348
      %353 = vst [vmem:[#allocation2 + $0x38] sm:$0xf0] %v349
      %v354 = vld [vmem:[%s331] sm:$0x33]
      %v355 = vunpack.c.l.bf16 %v354
      %v356 = vunpack.c.h.bf16 %v354
      %357 = vst [vmem:[#allocation2 + $0x40] sm:$0xf] %v355
      %358 = vst [vmem:[#allocation2 + $0x48] sm:$0xf] %v356
      %v359 = vld [vmem:[%s331] sm:$0x77]
      %v360 = vunpack.c.l.bf16 %v359
      %v361 = vunpack.c.h.bf16 %v359
      %v364 = vrot.slane %v360, 1
      %v365 = vrot.slane %v361, 1
      %368 = vst [vmem:[#allocation2 + $0x50] sm:$0xf] %v364
      %369 = vst [vmem:[#allocation2 + $0x58] sm:$0xf] %v365
      %s370 = scalar_lea.vmem %s271, 24
      %v371 = vld [vmem:[%s370] sm:$0x33]
      %v372 = vunpack.c.l.bf16 %v371
      %v373 = vunpack.c.h.bf16 %v371
      %374 = vst [vmem:[#allocation2 + $0x60] sm:$0xf] %v372
      %375 = vst [vmem:[#allocation2 + $0x68] sm:$0xf] %v373
      %v376 = vld [vmem:[%s370] sm:$0x77]
      %v377 = vunpack.c.l.bf16 %v376
      %v378 = vunpack.c.h.bf16 %v376
      %v381 = vrot.slane %v377, 1
      %v382 = vrot.slane %v378, 1
      %385 = vst [vmem:[#allocation2 + $0x70] sm:$0xf] %v381
      %386 = vst [vmem:[#allocation2 + $0x78] sm:$0xf] %v382
      %v387 = vld [vmem:[%s370] sm:$0x33]
      %v388 = vunpack.c.l.bf16 %v387
      %v389 = vunpack.c.h.bf16 %v387
      %v392 = vrot.slane %v388, 4
      %v393 = vrot.slane %v389, 4
      %396 = vst [vmem:[#allocation2 + $0x40] sm:$0xf0] %v392
      %397 = vst [vmem:[#allocation2 + $0x48] sm:$0xf0] %v393
      %v398 = vld [vmem:[%s370] sm:$0x77]
      %v399 = vunpack.c.l.bf16 %v398
      %v400 = vunpack.c.h.bf16 %v398
      %v403 = vrot.slane %v399, 5
      %v404 = vrot.slane %v400, 5
      %407 = vst [vmem:[#allocation2 + $0x50] sm:$0xf0] %v403
      %408 = vst [vmem:[#allocation2 + $0x58] sm:$0xf0] %v404
      %s409 = scalar_lea.vmem %s271, 32
      %v410 = vld [vmem:[%s409] sm:$0x33]
      %v411 = vunpack.c.l.bf16 %v410
      %v412 = vunpack.c.h.bf16 %v410
      %v415 = vrot.slane %v411, 4
      %v416 = vrot.slane %v412, 4
      %419 = vst [vmem:[#allocation2 + $0x60] sm:$0xf0] %v415
      %420 = vst [vmem:[#allocation2 + $0x68] sm:$0xf0] %v416
      %v421 = vld [vmem:[%s409] sm:$0x77]
      %v422 = vunpack.c.l.bf16 %v421
      %v423 = vunpack.c.h.bf16 %v421
      %v426 = vrot.slane %v422, 5
      %v427 = vrot.slane %v423, 5
      %430 = vst [vmem:[#allocation2 + $0x70] sm:$0xf0] %v426
      %431 = vst [vmem:[#allocation2 + $0x78] sm:$0xf0] %v427
      %v432 = vld [vmem:[#allocation2] sm:$0xff]
      %v433 = vld [vmem:[#allocation2 + $0x8] sm:$0xff]
      %v434 = vld [vmem:[#allocation2 + $0x10] sm:$0xff]
      %v435 = vld [vmem:[#allocation2 + $0x18] sm:$0xff]
      %v436 = vld [vmem:[#allocation2 + $0x20] sm:$0xff]
      %v437 = vld [vmem:[#allocation2 + $0x28] sm:$0xff]
      %v438 = vld [vmem:[#allocation2 + $0x30] sm:$0xff]
      %v439 = vld [vmem:[#allocation2 + $0x38] sm:$0xff]
      %v440 = vld [vmem:[#allocation2 + $0x40] sm:$0xff]
      %v441 = vld [vmem:[#allocation2 + $0x48] sm:$0xff]
      %v442 = vld [vmem:[#allocation2 + $0x50] sm:$0xff]
      %v443 = vld [vmem:[#allocation2 + $0x58] sm:$0xff]
      %v444 = vld [vmem:[#allocation2 + $0x60] sm:$0xff]
      %v445 = vld [vmem:[#allocation2 + $0x68] sm:$0xff]
      %v446 = vld [vmem:[#allocation2 + $0x70] sm:$0xff]
      %v447 = vld [vmem:[#allocation2 + $0x78] sm:$0xff]
      %v448 = vpack.c.bf16 %v440, %v432
      %v449 = vpack.c.bf16 %v441, %v433
      %v450 = vpack.c.bf16 %v442, %v434
      %v451 = vpack.c.bf16 %v443, %v435
      %v452 = vpack.c.bf16 %v444, %v436
      %v453 = vpack.c.bf16 %v445, %v437
      %v454 = vpack.c.bf16 %v446, %v438
      %v455 = vpack.c.bf16 %v447, %v439
      %v456 = vld [vmem:[%s1] sm:$0xf]
      %v457 = vld [vmem:[%s1 + $0x4] sm:$0xf]
      %v458 = vld [vmem:[%s1 + $0x8] sm:$0xf]
      %v459 = vld [vmem:[%s1 + $0xc] sm:$0xf]
      %v460 = vld [vmem:[%s1 + $0x10] sm:$0xf]
      %v461 = vld [vmem:[%s1 + $0x14] sm:$0xf]
      %v462 = vld [vmem:[%s1 + $0x18] sm:$0xf]
      %v463 = vld [vmem:[%s1 + $0x1c] sm:$0xf]
      %v464 = vld [vmem:[%s1 + $0x20] sm:$0xf]
      %v465 = vld [vmem:[%s1 + $0x24] sm:$0xf]
      %v466 = vld [vmem:[%s1 + $0x28] sm:$0xf]
      %v467 = vld [vmem:[%s1 + $0x2c] sm:$0xf]
      %v468 = vld [vmem:[%s1 + $0x30] sm:$0xf]
      %v469 = vld [vmem:[%s1 + $0x34] sm:$0xf]
      %v470 = vld [vmem:[%s1 + $0x38] sm:$0xf]
      %v471 = vld [vmem:[%s1 + $0x3c] sm:$0xf]
      %v472 = vld [vmem:[%s1 + $0x40] sm:$0xf]
      %v473 = vld [vmem:[%s1 + $0x44] sm:$0xf]
      %v474 = vld [vmem:[%s1 + $0x48] sm:$0xf]
      %v475 = vld [vmem:[%s1 + $0x4c] sm:$0xf]
      %v476 = vld [vmem:[%s1 + $0x50] sm:$0xf]
      %v477 = vld [vmem:[%s1 + $0x54] sm:$0xf]
      %v478 = vld [vmem:[%s1 + $0x58] sm:$0xf]
      %v479 = vld [vmem:[%s1 + $0x5c] sm:$0xf]
      %v480 = vld [vmem:[%s1 + $0x60] sm:$0xf]
      %v481 = vld [vmem:[%s1 + $0x64] sm:$0xf]
      %v482 = vld [vmem:[%s1 + $0x68] sm:$0xf]
      %v483 = vld [vmem:[%s1 + $0x6c] sm:$0xf]
      %v484 = vld [vmem:[%s1 + $0x70] sm:$0xf]
      %v485 = vld [vmem:[%s1 + $0x74] sm:$0xf]
      %v486 = vld [vmem:[%s1 + $0x78] sm:$0xf]
      %v487 = vld [vmem:[%s1 + $0x7c] sm:$0xf]
      %v488 = vld [vmem:[%s1 + $0x80] sm:$0xf]
      %v489 = vld [vmem:[%s1 + $0x84] sm:$0xf]
      %v490 = vld [vmem:[%s1 + $0x88] sm:$0xf]
      %v491 = vld [vmem:[%s1 + $0x8c] sm:$0xf]
      %v492 = vld [vmem:[%s1 + $0x90] sm:$0xf]
      %v493 = vld [vmem:[%s1 + $0x94] sm:$0xf]
      %v494 = vld [vmem:[%s1 + $0x98] sm:$0xf]
      %v495 = vld [vmem:[%s1 + $0x9c] sm:$0xf]
      %v496 = vld [vmem:[%s1 + $0xa0] sm:$0xf]
      %v497 = vld [vmem:[%s1 + $0xa4] sm:$0xf]
      %v498 = vld [vmem:[%s1 + $0xa8] sm:$0xf]
      %v499 = vld [vmem:[%s1 + $0xac] sm:$0xf]
      %v500 = vld [vmem:[%s1 + $0xb0] sm:$0xf]
      %v501 = vld [vmem:[%s1 + $0xb4] sm:$0xf]
      %v502 = vld [vmem:[%s1 + $0xb8] sm:$0xf]
      %v503 = vld [vmem:[%s1 + $0xbc] sm:$0xf]
      %v504 = vld [vmem:[%s1 + $0xc0] sm:$0xf]
      %v505 = vld [vmem:[%s1 + $0xc4] sm:$0xf]
      %v506 = vld [vmem:[%s1 + $0xc8] sm:$0xf]
      %v507 = vld [vmem:[%s1 + $0xcc] sm:$0xf]
      %v508 = vld [vmem:[%s1 + $0xd0] sm:$0xf]
      %v509 = vld [vmem:[%s1 + $0xd4] sm:$0xf]
      %v510 = vld [vmem:[%s1 + $0xd8] sm:$0xf]
      %v511 = vld [vmem:[%s1 + $0xdc] sm:$0xf]
      %v512 = vld [vmem:[%s1 + $0xe0] sm:$0xf]
      %v513 = vld [vmem:[%s1 + $0xe4] sm:$0xf]
      %v514 = vld [vmem:[%s1 + $0xe8] sm:$0xf]
      %v515 = vld [vmem:[%s1 + $0xec] sm:$0xf]
      %v516 = vld [vmem:[%s1 + $0xf0] sm:$0xf]
      %v517 = vld [vmem:[%s1 + $0xf4] sm:$0xf]
      %v518 = vld [vmem:[%s1 + $0xf8] sm:$0xf]
      %v519 = vld [vmem:[%s1 + $0xfc] sm:$0xf]
      %v520 = vld [vmem:[%s1 + $0x100] sm:$0xf]
      %v521 = vld [vmem:[%s1 + $0x104] sm:$0xf]
      %v522 = vld [vmem:[%s1 + $0x108] sm:$0xf]
      %v523 = vld [vmem:[%s1 + $0x10c] sm:$0xf]
      %v524 = vld [vmem:[%s1 + $0x110] sm:$0xf]
      %v525 = vld [vmem:[%s1 + $0x114] sm:$0xf]
      %v526 = vld [vmem:[%s1 + $0x118] sm:$0xf]
      %v527 = vld [vmem:[%s1 + $0x11c] sm:$0xf]
      %v528 = vld [vmem:[%s1 + $0x120] sm:$0xf]
      %v529 = vld [vmem:[%s1 + $0x124] sm:$0xf]
      %v530 = vld [vmem:[%s1 + $0x128] sm:$0xf]
      %v531 = vld [vmem:[%s1 + $0x12c] sm:$0xf]
      %v532 = vld [vmem:[%s1 + $0x130] sm:$0xf]
      %v533 = vld [vmem:[%s1 + $0x134] sm:$0xf]
      %v534 = vld [vmem:[%s1 + $0x138] sm:$0xf]
      %v535 = vld [vmem:[%s1 + $0x13c] sm:$0xf]
      %v536 = vld [vmem:[%s1 + $0x140] sm:$0xf]
      %v537 = vld [vmem:[%s1 + $0x144] sm:$0xf]
      %v538 = vld [vmem:[%s1 + $0x148] sm:$0xf]
      %v539 = vld [vmem:[%s1 + $0x14c] sm:$0xf]
      %v540 = vld [vmem:[%s1 + $0x150] sm:$0xf]
      %v541 = vld [vmem:[%s1 + $0x154] sm:$0xf]
      %v542 = vld [vmem:[%s1 + $0x158] sm:$0xf]
      %v543 = vld [vmem:[%s1 + $0x15c] sm:$0xf]
      %v544 = vld [vmem:[%s1 + $0x160] sm:$0xf]
      %v545 = vld [vmem:[%s1 + $0x164] sm:$0xf]
      %v546 = vld [vmem:[%s1 + $0x168] sm:$0xf]
      %v547 = vld [vmem:[%s1 + $0x16c] sm:$0xf]
      %v548 = vld [vmem:[%s1 + $0x170] sm:$0xf]
      %v549 = vld [vmem:[%s1 + $0x174] sm:$0xf]
      %v550 = vld [vmem:[%s1 + $0x178] sm:$0xf]
      %v551 = vld [vmem:[%s1 + $0x17c] sm:$0xf]
      %v552 = vld [vmem:[%s1 + $0x180] sm:$0xf]
      %v553 = vld [vmem:[%s1 + $0x184] sm:$0xf]
      %v554 = vld [vmem:[%s1 + $0x188] sm:$0xf]
      %v555 = vld [vmem:[%s1 + $0x18c] sm:$0xf]
      %v556 = vld [vmem:[%s1 + $0x190] sm:$0xf]
      %v557 = vld [vmem:[%s1 + $0x194] sm:$0xf]
      %v558 = vld [vmem:[%s1 + $0x198] sm:$0xf]
      %v559 = vld [vmem:[%s1 + $0x19c] sm:$0xf]
      %v560 = vld [vmem:[%s1 + $0x1a0] sm:$0xf]
      %v561 = vld [vmem:[%s1 + $0x1a4] sm:$0xf]
      %v562 = vld [vmem:[%s1 + $0x1a8] sm:$0xf]
      %v563 = vld [vmem:[%s1 + $0x1ac] sm:$0xf]
      %v564 = vld [vmem:[%s1 + $0x1b0] sm:$0xf]
      %v565 = vld [vmem:[%s1 + $0x1b4] sm:$0xf]
      %v566 = vld [vmem:[%s1 + $0x1b8] sm:$0xf]
      %v567 = vld [vmem:[%s1 + $0x1bc] sm:$0xf]
      %v568 = vld [vmem:[%s1 + $0x1c0] sm:$0xf]
      %v569 = vld [vmem:[%s1 + $0x1c4] sm:$0xf]
      %v570 = vld [vmem:[%s1 + $0x1c8] sm:$0xf]
      %v571 = vld [vmem:[%s1 + $0x1cc] sm:$0xf]
      %v572 = vld [vmem:[%s1 + $0x1d0] sm:$0xf]
      %v573 = vld [vmem:[%s1 + $0x1d4] sm:$0xf]
      %v574 = vld [vmem:[%s1 + $0x1d8] sm:$0xf]
      %v575 = vld [vmem:[%s1 + $0x1dc] sm:$0xf]
      %v576 = vld [vmem:[%s1 + $0x1e0] sm:$0xf]
      %v577 = vld [vmem:[%s1 + $0x1e4] sm:$0xf]
      %v578 = vld [vmem:[%s1 + $0x1e8] sm:$0xf]
      %v579 = vld [vmem:[%s1 + $0x1ec] sm:$0xf]
      %v580 = vld [vmem:[%s1 + $0x1f0] sm:$0xf]
      %v581 = vld [vmem:[%s1 + $0x1f4] sm:$0xf]
      %v582 = vld [vmem:[%s1 + $0x1f8] sm:$0xf]
      %v583 = vld [vmem:[%s1 + $0x1fc] sm:$0xf]
      %v584 = vld [vmem:[%s2] sm:$0x1]
      %v586 = vlaneseq
      %v587 = vshrl.u32 %v586, 7
      %v588 = vsub.s32 0, %v587
      %v589 = vrot.slane %v584, %v588
      %v719 = vunpack.c.l.b16 %v456
      %v720 = vunpack.c.l.b16 %v457
      %v721 = vunpack.c.l.b16 %v458
      %v722 = vunpack.c.l.b16 %v459
      %v723 = vunpack.c.l.b16 %v460
      %v724 = vunpack.c.l.b16 %v461
      %v725 = vunpack.c.l.b16 %v462
      %v726 = vunpack.c.l.b16 %v463
      %v727 = vunpack.c.l.b16 %v464
      %v728 = vunpack.c.l.b16 %v465
      %v729 = vunpack.c.l.b16 %v466
      %v730 = vunpack.c.l.b16 %v467
      %v731 = vunpack.c.l.b16 %v468
      %v732 = vunpack.c.l.b16 %v469
      %v733 = vunpack.c.l.b16 %v470
      %v734 = vunpack.c.l.b16 %v471
      %v735 = vunpack.c.l.b16 %v472
      %v736 = vunpack.c.l.b16 %v473
      %v737 = vunpack.c.l.b16 %v474
      %v738 = vunpack.c.l.b16 %v475
      %v739 = vunpack.c.l.b16 %v476
      %v740 = vunpack.c.l.b16 %v477
      %v741 = vunpack.c.l.b16 %v478
      %v742 = vunpack.c.l.b16 %v479
      %v743 = vunpack.c.l.b16 %v480
      %v744 = vunpack.c.l.b16 %v481
      %v745 = vunpack.c.l.b16 %v482
      %v746 = vunpack.c.l.b16 %v483
      %v747 = vunpack.c.l.b16 %v484
      %v748 = vunpack.c.l.b16 %v485
      %v749 = vunpack.c.l.b16 %v486
      %v750 = vunpack.c.l.b16 %v487
      %v751 = vunpack.c.l.b16 %v488
      %v752 = vunpack.c.l.b16 %v489
      %v753 = vunpack.c.l.b16 %v490
      %v754 = vunpack.c.l.b16 %v491
      %v755 = vunpack.c.l.b16 %v492
      %v756 = vunpack.c.l.b16 %v493
      %v757 = vunpack.c.l.b16 %v494
      %v758 = vunpack.c.l.b16 %v495
      %v759 = vunpack.c.l.b16 %v496
      %v760 = vunpack.c.l.b16 %v497
      %v761 = vunpack.c.l.b16 %v498
      %v762 = vunpack.c.l.b16 %v499
      %v763 = vunpack.c.l.b16 %v500
      %v764 = vunpack.c.l.b16 %v501
      %v765 = vunpack.c.l.b16 %v502
      %v766 = vunpack.c.l.b16 %v503
      %v767 = vunpack.c.l.b16 %v504
      %v768 = vunpack.c.l.b16 %v505
      %v769 = vunpack.c.l.b16 %v506
      %v770 = vunpack.c.l.b16 %v507
      %v771 = vunpack.c.l.b16 %v508
      %v772 = vunpack.c.l.b16 %v509
      %v773 = vunpack.c.l.b16 %v510
      %v774 = vunpack.c.l.b16 %v511
      %v775 = vunpack.c.l.b16 %v512
      %v776 = vunpack.c.l.b16 %v513
      %v777 = vunpack.c.l.b16 %v514
      %v778 = vunpack.c.l.b16 %v515
      %v779 = vunpack.c.l.b16 %v516
      %v780 = vunpack.c.l.b16 %v517
      %v781 = vunpack.c.l.b16 %v518
      %v782 = vunpack.c.l.b16 %v519
      %v783 = vunpack.c.l.b16 %v520
      %v784 = vunpack.c.l.b16 %v521
      %v785 = vunpack.c.l.b16 %v522
      %v786 = vunpack.c.l.b16 %v523
      %v787 = vunpack.c.l.b16 %v524
      %v788 = vunpack.c.l.b16 %v525
      %v789 = vunpack.c.l.b16 %v526
      %v790 = vunpack.c.l.b16 %v527
      %v791 = vunpack.c.l.b16 %v528
      %v792 = vunpack.c.l.b16 %v529
      %v793 = vunpack.c.l.b16 %v530
      %v794 = vunpack.c.l.b16 %v531
      %v795 = vunpack.c.l.b16 %v532
      %v796 = vunpack.c.l.b16 %v533
      %v797 = vunpack.c.l.b16 %v534
      %v798 = vunpack.c.l.b16 %v535
      %v799 = vunpack.c.l.b16 %v536
      %v800 = vunpack.c.l.b16 %v537
      %v801 = vunpack.c.l.b16 %v538
      %v802 = vunpack.c.l.b16 %v539
      %v803 = vunpack.c.l.b16 %v540
      %v804 = vunpack.c.l.b16 %v541
      %v805 = vunpack.c.l.b16 %v542
      %v806 = vunpack.c.l.b16 %v543
      %v807 = vunpack.c.l.b16 %v544
      %v808 = vunpack.c.l.b16 %v545
      %v809 = vunpack.c.l.b16 %v546
      %v810 = vunpack.c.l.b16 %v547
      %v811 = vunpack.c.l.b16 %v548
      %v812 = vunpack.c.l.b16 %v549
      %v813 = vunpack.c.l.b16 %v550
      %v814 = vunpack.c.l.b16 %v551
      %v815 = vunpack.c.l.b16 %v552
      %v816 = vunpack.c.l.b16 %v553
      %v817 = vunpack.c.l.b16 %v554
      %v818 = vunpack.c.l.b16 %v555
      %v819 = vunpack.c.l.b16 %v556
      %v820 = vunpack.c.l.b16 %v557
      %v821 = vunpack.c.l.b16 %v558
      %v822 = vunpack.c.l.b16 %v559
      %v823 = vunpack.c.l.b16 %v560
      %v824 = vunpack.c.l.b16 %v561
      %v825 = vunpack.c.l.b16 %v562
      %v826 = vunpack.c.l.b16 %v563
      %v827 = vunpack.c.l.b16 %v564
      %v828 = vunpack.c.l.b16 %v565
      %v829 = vunpack.c.l.b16 %v566
      %v830 = vunpack.c.l.b16 %v567
      %v831 = vunpack.c.l.b16 %v568
      %v832 = vunpack.c.l.b16 %v569
      %v833 = vunpack.c.l.b16 %v570
      %v834 = vunpack.c.l.b16 %v571
      %v835 = vunpack.c.l.b16 %v572
      %v836 = vunpack.c.l.b16 %v573
      %v837 = vunpack.c.l.b16 %v574
      %v838 = vunpack.c.l.b16 %v575
      %v839 = vunpack.c.l.b16 %v576
      %v840 = vunpack.c.l.b16 %v577
      %v841 = vunpack.c.l.b16 %v578
      %v842 = vunpack.c.l.b16 %v579
      %v843 = vunpack.c.l.b16 %v580
      %v844 = vunpack.c.l.b16 %v581
      %v845 = vunpack.c.l.b16 %v582
      %v846 = vunpack.c.l.b16 %v583
      %v847 = vpack.c.b16 %v720, %v719
      %v848 = vpack.c.b16 %v722, %v721
      %v849 = vpack.c.b16 %v724, %v723
      %v850 = vpack.c.b16 %v726, %v725
      %v851 = vpack.c.b16 %v728, %v727
      %v852 = vpack.c.b16 %v730, %v729
      %v853 = vpack.c.b16 %v732, %v731
      %v854 = vpack.c.b16 %v734, %v733
      %v855 = vpack.c.b16 %v736, %v735
      %v856 = vpack.c.b16 %v738, %v737
      %v857 = vpack.c.b16 %v740, %v739
      %v858 = vpack.c.b16 %v742, %v741
      %v859 = vpack.c.b16 %v744, %v743
      %v860 = vpack.c.b16 %v746, %v745
      %v861 = vpack.c.b16 %v748, %v747
      %v862 = vpack.c.b16 %v750, %v749
      %v863 = vpack.c.b16 %v752, %v751
      %v864 = vpack.c.b16 %v754, %v753
      %v865 = vpack.c.b16 %v756, %v755
      %v866 = vpack.c.b16 %v758, %v757
      %v867 = vpack.c.b16 %v760, %v759
      %v868 = vpack.c.b16 %v762, %v761
      %v869 = vpack.c.b16 %v764, %v763
      %v870 = vpack.c.b16 %v766, %v765
      %v871 = vpack.c.b16 %v768, %v767
      %v872 = vpack.c.b16 %v770, %v769
      %v873 = vpack.c.b16 %v772, %v771
      %v874 = vpack.c.b16 %v774, %v773
      %v875 = vpack.c.b16 %v776, %v775
      %v876 = vpack.c.b16 %v778, %v777
      %v877 = vpack.c.b16 %v780, %v779
      %v878 = vpack.c.b16 %v782, %v781
      %v879 = vpack.c.b16 %v784, %v783
      %v880 = vpack.c.b16 %v786, %v785
      %v881 = vpack.c.b16 %v788, %v787
      %v882 = vpack.c.b16 %v790, %v789
      %v883 = vpack.c.b16 %v792, %v791
      %v884 = vpack.c.b16 %v794, %v793
      %v885 = vpack.c.b16 %v796, %v795
      %v886 = vpack.c.b16 %v798, %v797
      %v887 = vpack.c.b16 %v800, %v799
      %v888 = vpack.c.b16 %v802, %v801
      %v889 = vpack.c.b16 %v804, %v803
      %v890 = vpack.c.b16 %v806, %v805
      %v891 = vpack.c.b16 %v808, %v807
      %v892 = vpack.c.b16 %v810, %v809
      %v893 = vpack.c.b16 %v812, %v811
      %v894 = vpack.c.b16 %v814, %v813
      %v895 = vpack.c.b16 %v816, %v815
      %v896 = vpack.c.b16 %v818, %v817
      %v897 = vpack.c.b16 %v820, %v819
      %v898 = vpack.c.b16 %v822, %v821
      %v899 = vpack.c.b16 %v824, %v823
      %v900 = vpack.c.b16 %v826, %v825
      %v901 = vpack.c.b16 %v828, %v827
      %v902 = vpack.c.b16 %v830, %v829
      %v903 = vpack.c.b16 %v832, %v831
      %v904 = vpack.c.b16 %v834, %v833
      %v905 = vpack.c.b16 %v836, %v835
      %v906 = vpack.c.b16 %v838, %v837
      %v907 = vpack.c.b16 %v840, %v839
      %v908 = vpack.c.b16 %v842, %v841
      %v909 = vpack.c.b16 %v844, %v843
      %v910 = vpack.c.b16 %v846, %v845
      %975 = vmatprep.subr.bf16.mxu0 0
      %976 = vmatpush1.bf16.msra.mxu0 %v847
      %977 = vmatprep.subr.bf16.mxu0 0
      %978 = vmatpush1.bf16.msra.mxu0 %v848
      %979 = vmatprep.subr.bf16.mxu0 0
      %980 = vmatpush1.bf16.msra.mxu0 %v849
      %981 = vmatprep.subr.bf16.mxu0 0
      %982 = vmatpush1.bf16.msra.mxu0 %v850
      %983 = vmatprep.subr.bf16.mxu0 0
      %984 = vmatpush1.bf16.msra.mxu0 %v851
      %985 = vmatprep.subr.bf16.mxu0 0
      %986 = vmatpush1.bf16.msra.mxu0 %v852
      %987 = vmatprep.subr.bf16.mxu0 0
      %988 = vmatpush1.bf16.msra.mxu0 %v853
      %989 = vmatprep.subr.bf16.mxu0 0
      %990 = vmatpush1.bf16.msra.mxu0 %v854
      %991 = vmatprep.subr.bf16.mxu0 0
      %992 = vmatpush1.bf16.msra.mxu0 %v855
      %993 = vmatprep.subr.bf16.mxu0 0
      %994 = vmatpush1.bf16.msra.mxu0 %v856
      %995 = vmatprep.subr.bf16.mxu0 0
      %996 = vmatpush1.bf16.msra.mxu0 %v857
      %997 = vmatprep.subr.bf16.mxu0 0
      %998 = vmatpush1.bf16.msra.mxu0 %v858
      %999 = vmatprep.subr.bf16.mxu0 0
      %1000 = vmatpush1.bf16.msra.mxu0 %v859
      %1001 = vmatprep.subr.bf16.mxu0 0
      %1002 = vmatpush1.bf16.msra.mxu0 %v860
      %1003 = vmatprep.subr.bf16.mxu0 0
      %1004 = vmatpush1.bf16.msra.mxu0 %v861
      %1005 = vmatprep.subr.bf16.mxu0 0
      %1006 = vmatpush1.bf16.msra.mxu0 %v862
      %1007 = vmatprep.mubr.bf16.mxu0 %v449
      %1008 = vmatmul.mubr.bf16.gmra.mrb[0].mxu0 %v448
      %v1009 = vpop.f32.mrb[0].mxu0
      %v1010 = vadd.f32 %v589, %v1009
      %v1011 = vpop.f32.mrb[0].mxu0
      %v1012 = vpop.f32.mrb[0].mxu0
      %v1013 = vadd.f32 %v589, %v1012
      %v1014 = vpop.f32.mrb[0].mxu0
      %1015 = vdwg.mxu0
      %1016 = vmatprep.subr.bf16.mxu0 0
      %1017 = vmatpush1.bf16.msra.mxu0 %v863
      %1018 = vmatprep.subr.bf16.mxu0 0
      %1019 = vmatpush1.bf16.msra.mxu0 %v864
      %1020 = vmatprep.subr.bf16.mxu0 0
      %1021 = vmatpush1.bf16.msra.mxu0 %v865
      %1022 = vmatprep.subr.bf16.mxu0 0
      %1023 = vmatpush1.bf16.msra.mxu0 %v866
      %1024 = vmatprep.subr.bf16.mxu0 0
      %1025 = vmatpush1.bf16.msra.mxu0 %v867
      %1026 = vmatprep.subr.bf16.mxu0 0
      %1027 = vmatpush1.bf16.msra.mxu0 %v868
      %1028 = vmatprep.subr.bf16.mxu0 0
      %1029 = vmatpush1.bf16.msra.mxu0 %v869
      %1030 = vmatprep.subr.bf16.mxu0 0
      %1031 = vmatpush1.bf16.msra.mxu0 %v870
      %1032 = vmatprep.subr.bf16.mxu0 0
      %1033 = vmatpush1.bf16.msra.mxu0 %v871
      %1034 = vmatprep.subr.bf16.mxu0 0
      %1035 = vmatpush1.bf16.msra.mxu0 %v872
      %1036 = vmatprep.subr.bf16.mxu0 0
      %1037 = vmatpush1.bf16.msra.mxu0 %v873
      %1038 = vmatprep.subr.bf16.mxu0 0
      %1039 = vmatpush1.bf16.msra.mxu0 %v874
      %1040 = vmatprep.subr.bf16.mxu0 0
      %1041 = vmatpush1.bf16.msra.mxu0 %v875
      %1042 = vmatprep.subr.bf16.mxu0 0
      %1043 = vmatpush1.bf16.msra.mxu0 %v876
      %1044 = vmatprep.subr.bf16.mxu0 0
      %1045 = vmatpush1.bf16.msra.mxu0 %v877
      %1046 = vmatprep.subr.bf16.mxu0 0
      %1047 = vmatpush1.bf16.msra.mxu0 %v878
      %1048 = vmatprep.mubr.bf16.mxu0 %v451
      %1049 = vmatmul.mubr.bf16.gmra.mrb[0].mxu0 %v450
      %v1050 = vpop.f32.mrb[0].mxu0
      %v1051 = vadd.f32 %v1010, %v1050
      %v1052 = vpop.f32.mrb[0].mxu0
      %v1053 = vpop.f32.mrb[0].mxu0
      %v1054 = vadd.f32 %v1013, %v1053
      %v1055 = vpop.f32.mrb[0].mxu0
      %1056 = vdwg.mxu0
      %1057 = vmatprep.subr.bf16.mxu0 0
      %1058 = vmatpush1.bf16.msra.mxu0 %v879
      %1059 = vmatprep.subr.bf16.mxu0 0
      %1060 = vmatpush1.bf16.msra.mxu0 %v880
      %1061 = vmatprep.subr.bf16.mxu0 0
      %1062 = vmatpush1.bf16.msra.mxu0 %v881
      %1063 = vmatprep.subr.bf16.mxu0 0
      %1064 = vmatpush1.bf16.msra.mxu0 %v882
      %1065 = vmatprep.subr.bf16.mxu0 0
      %1066 = vmatpush1.bf16.msra.mxu0 %v883
      %1067 = vmatprep.subr.bf16.mxu0 0
      %1068 = vmatpush1.bf16.msra.mxu0 %v884
      %1069 = vmatprep.subr.bf16.mxu0 0
      %1070 = vmatpush1.bf16.msra.mxu0 %v885
      %1071 = vmatprep.subr.bf16.mxu0 0
      %1072 = vmatpush1.bf16.msra.mxu0 %v886
      %1073 = vmatprep.subr.bf16.mxu0 0
      %1074 = vmatpush1.bf16.msra.mxu0 %v887
      %1075 = vmatprep.subr.bf16.mxu0 0
      %1076 = vmatpush1.bf16.msra.mxu0 %v888
      %1077 = vmatprep.subr.bf16.mxu0 0
      %1078 = vmatpush1.bf16.msra.mxu0 %v889
      %1079 = vmatprep.subr.bf16.mxu0 0
      %1080 = vmatpush1.bf16.msra.mxu0 %v890
      %1081 = vmatprep.subr.bf16.mxu0 0
      %1082 = vmatpush1.bf16.msra.mxu0 %v891
      %1083 = vmatprep.subr.bf16.mxu0 0
      %1084 = vmatpush1.bf16.msra.mxu0 %v892
      %1085 = vmatprep.subr.bf16.mxu0 0
      %1086 = vmatpush1.bf16.msra.mxu0 %v893
      %1087 = vmatprep.subr.bf16.mxu0 0
      %1088 = vmatpush1.bf16.msra.mxu0 %v894
      %1089 = vmatprep.mubr.bf16.mxu0 %v453
      %1090 = vmatmul.mubr.bf16.gmra.mrb[0].mxu0 %v452
      %v1091 = vpop.f32.mrb[0].mxu0
      %v1092 = vadd.f32 %v1051, %v1091
      %v1093 = vpop.f32.mrb[0].mxu0
      %v1094 = vpop.f32.mrb[0].mxu0
      %v1095 = vadd.f32 %v1054, %v1094
      %v1096 = vpop.f32.mrb[0].mxu0
      %1097 = vdwg.mxu0
      %1098 = vmatprep.subr.bf16.mxu0 0
      %1099 = vmatpush1.bf16.msra.mxu0 %v895
      %1100 = vmatprep.subr.bf16.mxu0 0
      %1101 = vmatpush1.bf16.msra.mxu0 %v896
      %1102 = vmatprep.subr.bf16.mxu0 0
      %1103 = vmatpush1.bf16.msra.mxu0 %v897
      %1104 = vmatprep.subr.bf16.mxu0 0
      %1105 = vmatpush1.bf16.msra.mxu0 %v898
      %1106 = vmatprep.subr.bf16.mxu0 0
      %1107 = vmatpush1.bf16.msra.mxu0 %v899
      %1108 = vmatprep.subr.bf16.mxu0 0
      %1109 = vmatpush1.bf16.msra.mxu0 %v900
      %1110 = vmatprep.subr.bf16.mxu0 0
      %1111 = vmatpush1.bf16.msra.mxu0 %v901
      %1112 = vmatprep.subr.bf16.mxu0 0
      %1113 = vmatpush1.bf16.msra.mxu0 %v902
      %1114 = vmatprep.subr.bf16.mxu0 0
      %1115 = vmatpush1.bf16.msra.mxu0 %v903
      %1116 = vmatprep.subr.bf16.mxu0 0
      %1117 = vmatpush1.bf16.msra.mxu0 %v904
      %1118 = vmatprep.subr.bf16.mxu0 0
      %1119 = vmatpush1.bf16.msra.mxu0 %v905
      %1120 = vmatprep.subr.bf16.mxu0 0
      %1121 = vmatpush1.bf16.msra.mxu0 %v906
      %1122 = vmatprep.subr.bf16.mxu0 0
      %1123 = vmatpush1.bf16.msra.mxu0 %v907
      %1124 = vmatprep.subr.bf16.mxu0 0
      %1125 = vmatpush1.bf16.msra.mxu0 %v908
      %1126 = vmatprep.subr.bf16.mxu0 0
      %1127 = vmatpush1.bf16.msra.mxu0 %v909
      %1128 = vmatprep.subr.bf16.mxu0 0
      %1129 = vmatpush1.bf16.msra.mxu0 %v910
      %1130 = vmatprep.mubr.bf16.mxu0 %v455
      %1131 = vmatmul.mubr.bf16.gmra.mrb[0].mxu0 %v454
      %v1132 = vpop.f32.mrb[0].mxu0
      %v1133 = vadd.f32 %v1092, %v1132
      %v1134 = vpop.f32.mrb[0].mxu0
      %v1135 = vpop.f32.mrb[0].mxu0
      %v1136 = vadd.f32 %v1095, %v1135
      %v1137 = vpop.f32.mrb[0].mxu0
      %1138 = vdwg.mxu0
      %v1139 = vmax.f32 %v1133, 0.0
      %v1140 = vmax.f32 %v1136, 0.0
      %1141 = vst [vmem:[#allocation3] sm:$0x7] %v1139
      %v1143 = vrot.slane %v1139, 1
      %1145 = vst [vmem:[#allocation3 + $0x8] sm:$0x7] %v1143
      %v1146 = vrot.slane %v1139, 4
      %1148 = vst [vmem:[#allocation3 + $0x10] sm:$0x7] %v1146
      %v1149 = vrot.slane %v1139, 5
      %1151 = vst [vmem:[#allocation3 + $0x18] sm:$0x7] %v1149
      %1152 = vst [vmem:[#allocation3] sm:$0x38] %v1143
      %v1153 = vrot.slane %v1139, 2
      %1155 = vst [vmem:[#allocation3 + $0x8] sm:$0x38] %v1153
      %v1157 = vrot.slane %v1140, 5
      %1159 = vst [vmem:[#allocation3 + $0x10] sm:$0x38] %v1157
      %v1160 = vrot.slane %v1140, 6
      %1162 = vst [vmem:[#allocation3 + $0x18] sm:$0x38] %v1160
      %v1163 = vrot.slane %v1140, 2
      %1165 = vst [vmem:[#allocation3] sm:$0xc0] %v1163
      %1166 = vst [vmem:[#allocation3 + $0x20] sm:$0x1] %v1163
      %v1167 = vrot.slane %v1140, 3
      %1169 = vst [vmem:[#allocation3 + $0x8] sm:$0xc0] %v1167
      %1170 = vst [vmem:[#allocation3 + $0x28] sm:$0x1] %v1167
      %1171 = vst [vmem:[#allocation3 + $0x10] sm:$0xc0] %v1160
      %1172 = vst [vmem:[#allocation3 + $0x30] sm:$0x1] %v1160
      %v1173 = vrot.slane %v1140, 7
      %1175 = vst [vmem:[#allocation3 + $0x18] sm:$0xc0] %v1173
      %1176 = vst [vmem:[#allocation3 + $0x38] sm:$0x1] %v1173
      %v1177 = vld [vmem:[#allocation3] sm:$0xff]
      %v1178 = vld [vmem:[#allocation3 + $0x8] sm:$0xff]
      %v1179 = vld [vmem:[#allocation3 + $0x10] sm:$0xff]
      %v1180 = vld [vmem:[#allocation3 + $0x18] sm:$0xff]
      %v1181 = vld [vmem:[#allocation3 + $0x20] sm:$0x1]
      %v1182 = vld [vmem:[#allocation3 + $0x28] sm:$0x1]
      %v1183 = vld [vmem:[#allocation3 + $0x30] sm:$0x1]
      %v1184 = vld [vmem:[#allocation3 + $0x38] sm:$0x1]
      %v1185 = vpack.c.bf16 %v1181, %v1177
      %v1186 = vpack.c.bf16 %v1182, %v1178
      %v1187 = vpack.c.bf16 %v1183, %v1179
      %v1188 = vpack.c.bf16 %v1184, %v1180
      %v1189 = vld [vmem:[%s3] sm:$0xf]
      %v1190 = vld [vmem:[%s3 + $0x4] sm:$0xf]
      %v1191 = vld [vmem:[%s3 + $0x8] sm:$0xf]
      %v1192 = vld [vmem:[%s3 + $0xc] sm:$0xf]
      %v1193 = vld [vmem:[%s3 + $0x10] sm:$0xf]
      %v1194 = vld [vmem:[%s3 + $0x14] sm:$0xf]
      %v1195 = vld [vmem:[%s3 + $0x18] sm:$0xf]
      %v1196 = vld [vmem:[%s3 + $0x1c] sm:$0xf]
      %v1197 = vld [vmem:[%s3 + $0x20] sm:$0xf]
      %v1198 = vld [vmem:[%s3 + $0x24] sm:$0xf]
      %v1199 = vld [vmem:[%s3 + $0x28] sm:$0xf]
      %v1200 = vld [vmem:[%s3 + $0x2c] sm:$0xf]
      %v1201 = vld [vmem:[%s3 + $0x30] sm:$0xf]
      %v1202 = vld [vmem:[%s3 + $0x34] sm:$0xf]
      %v1203 = vld [vmem:[%s3 + $0x38] sm:$0xf]
      %v1204 = vld [vmem:[%s3 + $0x3c] sm:$0xf]
      %v1205 = vld [vmem:[%s3 + $0x40] sm:$0xf]
      %v1206 = vld [vmem:[%s3 + $0x44] sm:$0xf]
      %v1207 = vld [vmem:[%s3 + $0x48] sm:$0xf]
      %v1208 = vld [vmem:[%s3 + $0x4c] sm:$0xf]
      %v1209 = vld [vmem:[%s3 + $0x50] sm:$0xf]
      %v1210 = vld [vmem:[%s3 + $0x54] sm:$0xf]
      %v1211 = vld [vmem:[%s3 + $0x58] sm:$0xf]
      %v1212 = vld [vmem:[%s3 + $0x5c] sm:$0xf]
      %v1213 = vld [vmem:[%s3 + $0x60] sm:$0xf]
      %v1214 = vld [vmem:[%s3 + $0x64] sm:$0xf]
      %v1215 = vld [vmem:[%s3 + $0x68] sm:$0xf]
      %v1216 = vld [vmem:[%s3 + $0x6c] sm:$0xf]
      %v1217 = vld [vmem:[%s3 + $0x70] sm:$0xf]
      %v1218 = vld [vmem:[%s3 + $0x74] sm:$0xf]
      %v1219 = vld [vmem:[%s3 + $0x78] sm:$0xf]
      %v1220 = vld [vmem:[%s3 + $0x7c] sm:$0xf]
      %v1221 = vld [vmem:[%s3 + $0x80] sm:$0xf]
      %v1222 = vld [vmem:[%s3 + $0x84] sm:$0xf]
      %v1223 = vld [vmem:[%s3 + $0x88] sm:$0xf]
      %v1224 = vld [vmem:[%s3 + $0x8c] sm:$0xf]
      %v1225 = vld [vmem:[%s3 + $0x90] sm:$0xf]
      %v1226 = vld [vmem:[%s3 + $0x94] sm:$0xf]
      %v1227 = vld [vmem:[%s3 + $0x98] sm:$0xf]
      %v1228 = vld [vmem:[%s3 + $0x9c] sm:$0xf]
      %v1229 = vld [vmem:[%s3 + $0xa0] sm:$0xf]
      %v1230 = vld [vmem:[%s3 + $0xa4] sm:$0xf]
      %v1231 = vld [vmem:[%s3 + $0xa8] sm:$0xf]
      %v1232 = vld [vmem:[%s3 + $0xac] sm:$0xf]
      %v1233 = vld [vmem:[%s3 + $0xb0] sm:$0xf]
      %v1234 = vld [vmem:[%s3 + $0xb4] sm:$0xf]
      %v1235 = vld [vmem:[%s3 + $0xb8] sm:$0xf]
      %v1236 = vld [vmem:[%s3 + $0xbc] sm:$0xf]
      %v1237 = vld [vmem:[%s3 + $0xc0] sm:$0xf]
      %v1238 = vld [vmem:[%s3 + $0xc4] sm:$0xf]
      %v1239 = vld [vmem:[%s3 + $0xc8] sm:$0xf]
      %v1240 = vld [vmem:[%s3 + $0xcc] sm:$0xf]
      %v1241 = vld [vmem:[%s3 + $0xd0] sm:$0xf]
      %v1242 = vld [vmem:[%s3 + $0xd4] sm:$0xf]
      %v1243 = vld [vmem:[%s3 + $0xd8] sm:$0xf]
      %v1244 = vld [vmem:[%s3 + $0xdc] sm:$0xf]
      %v1245 = vld [vmem:[%s3 + $0xe0] sm:$0xf]
      %v1246 = vld [vmem:[%s3 + $0xe4] sm:$0xf]
      %v1247 = vld [vmem:[%s3 + $0xe8] sm:$0xf]
      %v1248 = vld [vmem:[%s3 + $0xec] sm:$0xf]
      %v1249 = vld [vmem:[%s3 + $0xf0] sm:$0xf]
      %v1250 = vld [vmem:[%s3 + $0xf4] sm:$0xf]
      %v1251 = vld [vmem:[%s3 + $0xf8] sm:$0xf]
      %v1252 = vld [vmem:[%s3 + $0xfc] sm:$0xf]
      %v1253 = vld [vmem:[%s4] sm:$0x1]
      %v1255 = vlaneseq
      %v1256 = vshrl.u32 %v1255, 7
      %v1257 = vsub.s32 0, %v1256
      %v1258 = vrot.slane %v1253, %v1257
      %v1324 = vunpack.c.l.b16 %v1189
      %v1325 = vunpack.c.l.b16 %v1190
      %v1326 = vunpack.c.l.b16 %v1191
      %v1327 = vunpack.c.l.b16 %v1192
      %v1328 = vunpack.c.l.b16 %v1193
      %v1329 = vunpack.c.l.b16 %v1194
      %v1330 = vunpack.c.l.b16 %v1195
      %v1331 = vunpack.c.l.b16 %v1196
      %v1332 = vunpack.c.l.b16 %v1197
      %v1333 = vunpack.c.l.b16 %v1198
      %v1334 = vunpack.c.l.b16 %v1199
      %v1335 = vunpack.c.l.b16 %v1200
      %v1336 = vunpack.c.l.b16 %v1201
      %v1337 = vunpack.c.l.b16 %v1202
      %v1338 = vunpack.c.l.b16 %v1203
      %v1339 = vunpack.c.l.b16 %v1204
      %v1340 = vunpack.c.l.b16 %v1205
      %v1341 = vunpack.c.l.b16 %v1206
      %v1342 = vunpack.c.l.b16 %v1207
      %v1343 = vunpack.c.l.b16 %v1208
      %v1344 = vunpack.c.l.b16 %v1209
      %v1345 = vunpack.c.l.b16 %v1210
      %v1346 = vunpack.c.l.b16 %v1211
      %v1347 = vunpack.c.l.b16 %v1212
      %v1348 = vunpack.c.l.b16 %v1213
      %v1349 = vunpack.c.l.b16 %v1214
      %v1350 = vunpack.c.l.b16 %v1215
      %v1351 = vunpack.c.l.b16 %v1216
      %v1352 = vunpack.c.l.b16 %v1217
      %v1353 = vunpack.c.l.b16 %v1218
      %v1354 = vunpack.c.l.b16 %v1219
      %v1355 = vunpack.c.l.b16 %v1220
      %v1356 = vunpack.c.l.b16 %v1221
      %v1357 = vunpack.c.l.b16 %v1222
      %v1358 = vunpack.c.l.b16 %v1223
      %v1359 = vunpack.c.l.b16 %v1224
      %v1360 = vunpack.c.l.b16 %v1225
      %v1361 = vunpack.c.l.b16 %v1226
      %v1362 = vunpack.c.l.b16 %v1227
      %v1363 = vunpack.c.l.b16 %v1228
      %v1364 = vunpack.c.l.b16 %v1229
      %v1365 = vunpack.c.l.b16 %v1230
      %v1366 = vunpack.c.l.b16 %v1231
      %v1367 = vunpack.c.l.b16 %v1232
      %v1368 = vunpack.c.l.b16 %v1233
      %v1369 = vunpack.c.l.b16 %v1234
      %v1370 = vunpack.c.l.b16 %v1235
      %v1371 = vunpack.c.l.b16 %v1236
      %v1372 = vunpack.c.l.b16 %v1237
      %v1373 = vunpack.c.l.b16 %v1238
      %v1374 = vunpack.c.l.b16 %v1239
      %v1375 = vunpack.c.l.b16 %v1240
      %v1376 = vunpack.c.l.b16 %v1241
      %v1377 = vunpack.c.l.b16 %v1242
      %v1378 = vunpack.c.l.b16 %v1243
      %v1379 = vunpack.c.l.b16 %v1244
      %v1380 = vunpack.c.l.b16 %v1245
      %v1381 = vunpack.c.l.b16 %v1246
      %v1382 = vunpack.c.l.b16 %v1247
      %v1383 = vunpack.c.l.b16 %v1248
      %v1384 = vunpack.c.l.b16 %v1249
      %v1385 = vunpack.c.l.b16 %v1250
      %v1386 = vunpack.c.l.b16 %v1251
      %v1387 = vunpack.c.l.b16 %v1252
      %v1388 = vpack.c.b16 %v1325, %v1324
      %v1389 = vpack.c.b16 %v1327, %v1326
      %v1390 = vpack.c.b16 %v1329, %v1328
      %v1391 = vpack.c.b16 %v1331, %v1330
      %v1392 = vpack.c.b16 %v1333, %v1332
      %v1393 = vpack.c.b16 %v1335, %v1334
      %v1394 = vpack.c.b16 %v1337, %v1336
      %v1395 = vpack.c.b16 %v1339, %v1338
      %v1396 = vpack.c.b16 %v1341, %v1340
      %v1397 = vpack.c.b16 %v1343, %v1342
      %v1398 = vpack.c.b16 %v1345, %v1344
      %v1399 = vpack.c.b16 %v1347, %v1346
      %v1400 = vpack.c.b16 %v1349, %v1348
      %v1401 = vpack.c.b16 %v1351, %v1350
      %v1402 = vpack.c.b16 %v1353, %v1352
      %v1403 = vpack.c.b16 %v1355, %v1354
      %v1404 = vpack.c.b16 %v1357, %v1356
      %v1405 = vpack.c.b16 %v1359, %v1358
      %v1406 = vpack.c.b16 %v1361, %v1360
      %v1407 = vpack.c.b16 %v1363, %v1362
      %v1408 = vpack.c.b16 %v1365, %v1364
      %v1409 = vpack.c.b16 %v1367, %v1366
      %v1410 = vpack.c.b16 %v1369, %v1368
      %v1411 = vpack.c.b16 %v1371, %v1370
      %v1412 = vpack.c.b16 %v1373, %v1372
      %v1413 = vpack.c.b16 %v1375, %v1374
      %v1414 = vpack.c.b16 %v1377, %v1376
      %v1415 = vpack.c.b16 %v1379, %v1378
      %v1416 = vpack.c.b16 %v1381, %v1380
      %v1417 = vpack.c.b16 %v1383, %v1382
      %v1418 = vpack.c.b16 %v1385, %v1384
      %v1419 = vpack.c.b16 %v1387, %v1386
      %1452 = vmatprep.subr.bf16.mxu0 0
      %1453 = vmatpush1.bf16.msra.mxu0 %v1388
      %1454 = vmatprep.subr.bf16.mxu0 0
      %1455 = vmatpush1.bf16.msra.mxu0 %v1389
      %1456 = vmatprep.subr.bf16.mxu0 0
      %1457 = vmatpush1.bf16.msra.mxu0 %v1390
      %1458 = vmatprep.subr.bf16.mxu0 0
      %1459 = vmatpush1.bf16.msra.mxu0 %v1391
      %1460 = vmatprep.subr.bf16.mxu0 0
      %1461 = vmatpush1.bf16.msra.mxu0 %v1392
      %1462 = vmatprep.subr.bf16.mxu0 0
      %1463 = vmatpush1.bf16.msra.mxu0 %v1393
      %1464 = vmatprep.subr.bf16.mxu0 0
      %1465 = vmatpush1.bf16.msra.mxu0 %v1394
      %1466 = vmatprep.subr.bf16.mxu0 0
      %1467 = vmatpush1.bf16.msra.mxu0 %v1395
      %1468 = vmatprep.subr.bf16.mxu0 0
      %1469 = vmatpush1.bf16.msra.mxu0 %v1396
      %1470 = vmatprep.subr.bf16.mxu0 0
      %1471 = vmatpush1.bf16.msra.mxu0 %v1397
      %1472 = vmatprep.subr.bf16.mxu0 0
      %1473 = vmatpush1.bf16.msra.mxu0 %v1398
      %1474 = vmatprep.subr.bf16.mxu0 0
      %1475 = vmatpush1.bf16.msra.mxu0 %v1399
      %1476 = vmatprep.subr.bf16.mxu0 0
      %1477 = vmatpush1.bf16.msra.mxu0 %v1400
      %1478 = vmatprep.subr.bf16.mxu0 0
      %1479 = vmatpush1.bf16.msra.mxu0 %v1401
      %1480 = vmatprep.subr.bf16.mxu0 0
      %1481 = vmatpush1.bf16.msra.mxu0 %v1402
      %1482 = vmatprep.subr.bf16.mxu0 0
      %1483 = vmatpush1.bf16.msra.mxu0 %v1403
      %1484 = vmatprep.mubr.bf16.mxu0 %v1186
      %1485 = vmatmul.mubr.bf16.gmra.mrb[0].mxu0 %v1185
      %v1486 = vpop.f32.mrb[0].mxu0
      %v1487 = vadd.f32 %v1258, %v1486
      %v1488 = vpop.f32.mrb[0].mxu0
      %v1489 = vpop.f32.mrb[0].mxu0
      %v1490 = vadd.f32 %v1258, %v1489
      %v1491 = vpop.f32.mrb[0].mxu0
      %1492 = vdwg.mxu0
      %1493 = vmatprep.subr.bf16.mxu0 0
      %1494 = vmatpush1.bf16.msra.mxu0 %v1404
      %1495 = vmatprep.subr.bf16.mxu0 0
      %1496 = vmatpush1.bf16.msra.mxu0 %v1405
      %1497 = vmatprep.subr.bf16.mxu0 0
      %1498 = vmatpush1.bf16.msra.mxu0 %v1406
      %1499 = vmatprep.subr.bf16.mxu0 0
      %1500 = vmatpush1.bf16.msra.mxu0 %v1407
      %1501 = vmatprep.subr.bf16.mxu0 0
      %1502 = vmatpush1.bf16.msra.mxu0 %v1408
      %1503 = vmatprep.subr.bf16.mxu0 0
      %1504 = vmatpush1.bf16.msra.mxu0 %v1409
      %1505 = vmatprep.subr.bf16.mxu0 0
      %1506 = vmatpush1.bf16.msra.mxu0 %v1410
      %1507 = vmatprep.subr.bf16.mxu0 0
      %1508 = vmatpush1.bf16.msra.mxu0 %v1411
      %1509 = vmatprep.subr.bf16.mxu0 0
      %1510 = vmatpush1.bf16.msra.mxu0 %v1412
      %1511 = vmatprep.subr.bf16.mxu0 0
      %1512 = vmatpush1.bf16.msra.mxu0 %v1413
      %1513 = vmatprep.subr.bf16.mxu0 0
      %1514 = vmatpush1.bf16.msra.mxu0 %v1414
      %1515 = vmatprep.subr.bf16.mxu0 0
      %1516 = vmatpush1.bf16.msra.mxu0 %v1415
      %1517 = vmatprep.subr.bf16.mxu0 0
      %1518 = vmatpush1.bf16.msra.mxu0 %v1416
      %1519 = vmatprep.subr.bf16.mxu0 0
      %1520 = vmatpush1.bf16.msra.mxu0 %v1417
      %1521 = vmatprep.subr.bf16.mxu0 0
      %1522 = vmatpush1.bf16.msra.mxu0 %v1418
      %1523 = vmatprep.subr.bf16.mxu0 0
      %1524 = vmatpush1.bf16.msra.mxu0 %v1419
      %1525 = vmatprep.mubr.bf16.mxu0 %v1188
      %1526 = vmatmul.mubr.bf16.gmra.mrb[0].mxu0 %v1187
      %v1527 = vpop.f32.mrb[0].mxu0
      %v1528 = vadd.f32 %v1487, %v1527
      %v1529 = vpop.f32.mrb[0].mxu0
      %v1530 = vpop.f32.mrb[0].mxu0
      %v1531 = vadd.f32 %v1490, %v1530
      %v1532 = vpop.f32.mrb[0].mxu0
      %1533 = vdwg.mxu0
      %v1534 = vmax.f32 %v1528, 0.0
      %v1535 = vmax.f32 %v1531, 0.0
      %v1536 = vlaneseq
      %vm1537 = vcmp.ge.s32.totalorder %v1536, 0
      %vm1538 = vcmp.lt.s32.totalorder %v1536, 64
      %vm1539 = vmand %vm1537, %vm1538
      %1540 = vst.msk [vmem:[#allocation4] sm:$0x1] %vm1539, %v1534
      %v1543 = vunpack.c.l.s4 1966171168
      %v1544 = vunpack.c.0.s8 %v1543
      %v1545 = vlaneseq
      %v1546 = vshrl.u32 %v1545, 7
      %v1547 = vsub.s32 %v1544, %v1546
      %v1548 = vrot.slane %v1534, %v1547
      %v1549 = vcombine.high %v1548, %v1548
      %v1551 = vunpack.c.l.s4 1966171168
      %v1552 = vunpack.c.0.s8 %v1551
      %v1553 = vlaneseq
      %v1554 = vshrl.u32 %v1553, 7
      %v1555 = vsub.s32 %v1552, %v1554
      %v1556 = vrot.slane %v1548, %v1555
      %v1558 = vunpack.c.l.s4 1966171168
      %v1559 = vunpack.c.0.s8 %v1558
      %v1560 = vlaneseq
      %v1561 = vshrl.u32 %v1560, 7
      %v1562 = vsub.s32 %v1559, %v1561
      %v1563 = vrot.slane %v1549, %v1562
      %1564 = vrot.lane.b32.xlu0 %v1563, 64
      %v1565 = vpop.permute.xlu0 %1564
      %vm1567 = vcmp.ge.s32.totalorder %v1536, 64
      %vm1568 = vcmp.lt.s32.totalorder %v1536, 128
      %vm1569 = vmand %vm1567, %vm1568
      %1570 = vst.msk [vmem:[#allocation4] sm:$0x1] %vm1569, %v1565
      %v1571 = vcombine.high %v1556, %v1556
      %1573 = vst.msk [vmem:[#allocation4 + $0x1] sm:$0x1] %vm1539, %v1571
      %v1574 = vcombine.high %v1563, %v1563
      %1575 = vrot.lane.b32.xlu0 %v1574, 64
      %v1576 = vpop.permute.xlu0 %1575
      %1578 = vst.msk [vmem:[#allocation4 + $0x1] sm:$0x1] %vm1569, %v1576
      %v1579 = vcombine.high %v1534, %v1534
      %v1581 = vunpack.c.l.s4 1966171168
      %v1582 = vunpack.c.0.s8 %v1581
      %v1583 = vlaneseq
      %v1584 = vshrl.u32 %v1583, 7
      %v1585 = vsub.s32 %v1582, %v1584
      %v1586 = vrot.slane %v1579, %v1585
      %v1588 = vunpack.c.l.s4 1966171168
      %v1589 = vunpack.c.0.s8 %v1588
      %v1590 = vlaneseq
      %v1591 = vshrl.u32 %v1590, 7
      %v1592 = vsub.s32 %v1589, %v1591
      %v1593 = vrot.slane %v1586, %v1592
      %1595 = vst.msk [vmem:[#allocation4 + $0x2] sm:$0x1] %vm1539, %v1593
      %v1596 = vcombine.high %v1586, %v1586
      %v1598 = vunpack.c.l.s4 1966171168
      %v1599 = vunpack.c.0.s8 %v1598
      %v1600 = vlaneseq
      %v1601 = vshrl.u32 %v1600, 7
      %v1602 = vsub.s32 %v1599, %v1601
      %v1603 = vrot.slane %v1596, %v1602
      %1604 = vrot.lane.b32.xlu0 %v1603, 64
      %v1605 = vpop.permute.xlu0 %1604
      %1607 = vst.msk [vmem:[#allocation4 + $0x2] sm:$0x1] %vm1569, %v1605
      %v1608 = vcombine.high %v1593, %v1593
      %1610 = vst.msk [vmem:[#allocation4 + $0x3] sm:$0x1] %vm1539, %v1608
      %v1611 = vcombine.high %v1603, %v1603
      %1612 = vrot.lane.b32.xlu0 %v1611, 64
      %v1613 = vpop.permute.xlu0 %1612
      %1615 = vst.msk [vmem:[#allocation4 + $0x3] sm:$0x1] %vm1569, %v1613
      %1616 = vst.msk [vmem:[#allocation4 + $0x4] sm:$0x1] %vm1539, %v1535
      %v1617 = vld [vmem:[#allocation4] sm:$0x1f]
      %v1619 = vlaneseq
      %v1620 = vshrl.u32 %v1619, 7
      %v1621 = vsub.s32 0, %v1620
      %v1622 = vrot.slane %v1617, %v1621
      %v1623 = vlaneseq
      %v1624 = vshrl.u32 %v1623, 7
      %v1625 = vsub.s32 1, %v1624
      %v1626 = vrot.slane %v1617, %v1625
      %v1627 = vlaneseq
      %v1628 = vshrl.u32 %v1627, 7
      %v1629 = vsub.s32 2, %v1628
      %v1630 = vrot.slane %v1617, %v1629
      %v1631 = vlaneseq
      %v1632 = vshrl.u32 %v1631, 7
      %v1633 = vsub.s32 3, %v1632
      %v1634 = vrot.slane %v1617, %v1633
      %v1635 = vlaneseq
      %v1636 = vshrl.u32 %v1635, 7
      %v1637 = vsub.s32 4, %v1636
      %v1638 = vrot.slane %v1617, %v1637
      %v1644 = vpack.c.bf16 %v1622, %v1622
      %v1645 = vpack.c.bf16 %v1626, %v1626
      %v1646 = vpack.c.bf16 %v1630, %v1630
      %v1647 = vpack.c.bf16 %v1634, %v1634
      %v1648 = vpack.c.bf16 %v1638, %v1638
      %v1649 = vld [vmem:[%s5] sm:$0xf]
      %v1650 = vld [vmem:[%s5 + $0x4] sm:$0xf]
      %v1651 = vld [vmem:[%s5 + $0x8] sm:$0xf]
      %v1652 = vld [vmem:[%s5 + $0xc] sm:$0xf]
      %v1653 = vld [vmem:[%s5 + $0x10] sm:$0xf]
      %v1654 = vld [vmem:[%s5 + $0x14] sm:$0xf]
      %v1655 = vld [vmem:[%s5 + $0x18] sm:$0xf]
      %v1656 = vld [vmem:[%s5 + $0x1c] sm:$0xf]
      %v1657 = vld [vmem:[%s5 + $0x20] sm:$0xf]
      %v1658 = vld [vmem:[%s5 + $0x24] sm:$0xf]
      %v1659 = vld [vmem:[%s5 + $0x28] sm:$0xf]
      %v1660 = vld [vmem:[%s5 + $0x2c] sm:$0xf]
      %v1661 = vld [vmem:[%s5 + $0x30] sm:$0xf]
      %v1662 = vld [vmem:[%s5 + $0x34] sm:$0xf]
      %v1663 = vld [vmem:[%s5 + $0x38] sm:$0xf]
      %v1664 = vld [vmem:[%s5 + $0x3c] sm:$0xf]
      %v1665 = vld [vmem:[%s5 + $0x40] sm:$0xf]
      %v1666 = vld [vmem:[%s5 + $0x44] sm:$0xf]
      %v1667 = vld [vmem:[%s5 + $0x48] sm:$0xf]
      %v1668 = vld [vmem:[%s5 + $0x4c] sm:$0xf]
      %v1669 = vld [vmem:[%s5 + $0x50] sm:$0xf]
      %v1670 = vld [vmem:[%s5 + $0x54] sm:$0xf]
      %v1671 = vld [vmem:[%s5 + $0x58] sm:$0xf]
      %v1672 = vld [vmem:[%s5 + $0x5c] sm:$0xf]
      %v1673 = vld [vmem:[%s5 + $0x60] sm:$0xf]
      %v1674 = vld [vmem:[%s5 + $0x64] sm:$0xf]
      %v1675 = vld [vmem:[%s5 + $0x68] sm:$0xf]
      %v1676 = vld [vmem:[%s5 + $0x6c] sm:$0xf]
      %v1677 = vld [vmem:[%s5 + $0x70] sm:$0xf]
      %v1678 = vld [vmem:[%s5 + $0x74] sm:$0xf]
      %v1679 = vld [vmem:[%s5 + $0x78] sm:$0xf]
      %v1680 = vld [vmem:[%s5 + $0x7c] sm:$0xf]
      %v1681 = vld [vmem:[%s5 + $0x80] sm:$0xf]
      %v1682 = vld [vmem:[%s5 + $0x84] sm:$0xf]
      %v1683 = vld [vmem:[%s5 + $0x88] sm:$0xf]
      %v1684 = vld [vmem:[%s5 + $0x8c] sm:$0xf]
      %v1685 = vld [vmem:[%s5 + $0x90] sm:$0xf]
      %v1686 = vld [vmem:[%s5 + $0x94] sm:$0xf]
      %v1687 = vld [vmem:[%s5 + $0x98] sm:$0xf]
      %v1688 = vld [vmem:[%s5 + $0x9c] sm:$0xf]
      %v1689 = vld [vmem:[%s5 + $0xa0] sm:$0xf]
      %v1690 = vld [vmem:[%s5 + $0xa4] sm:$0xf]
      %v1691 = vld [vmem:[%s5 + $0xa8] sm:$0xf]
      %v1692 = vld [vmem:[%s5 + $0xac] sm:$0xf]
      %v1693 = vld [vmem:[%s5 + $0xb0] sm:$0xf]
      %v1694 = vld [vmem:[%s5 + $0xb4] sm:$0xf]
      %v1695 = vld [vmem:[%s5 + $0xb8] sm:$0xf]
      %v1696 = vld [vmem:[%s5 + $0xbc] sm:$0xf]
      %v1697 = vld [vmem:[%s5 + $0xc0] sm:$0xf]
      %v1698 = vld [vmem:[%s5 + $0xc4] sm:$0xf]
      %v1699 = vld [vmem:[%s5 + $0xc8] sm:$0xf]
      %v1700 = vld [vmem:[%s5 + $0xcc] sm:$0xf]
      %v1701 = vld [vmem:[%s5 + $0xd0] sm:$0xf]
      %v1702 = vld [vmem:[%s5 + $0xd4] sm:$0xf]
      %v1703 = vld [vmem:[%s5 + $0xd8] sm:$0xf]
      %v1704 = vld [vmem:[%s5 + $0xdc] sm:$0xf]
      %v1705 = vld [vmem:[%s5 + $0xe0] sm:$0xf]
      %v1706 = vld [vmem:[%s5 + $0xe4] sm:$0xf]
      %v1707 = vld [vmem:[%s5 + $0xe8] sm:$0xf]
      %v1708 = vld [vmem:[%s5 + $0xec] sm:$0xf]
      %v1709 = vld [vmem:[%s5 + $0xf0] sm:$0xf]
      %v1710 = vld [vmem:[%s5 + $0xf4] sm:$0xf]
      %v1711 = vld [vmem:[%s5 + $0xf8] sm:$0xf]
      %v1712 = vld [vmem:[%s5 + $0xfc] sm:$0xf]
      %v1713 = vld [vmem:[%s5 + $0x100] sm:$0xf]
      %v1714 = vld [vmem:[%s5 + $0x104] sm:$0xf]
      %v1715 = vld [vmem:[%s5 + $0x108] sm:$0xf]
      %v1716 = vld [vmem:[%s5 + $0x10c] sm:$0xf]
      %v1717 = vld [vmem:[%s5 + $0x110] sm:$0xf]
      %v1718 = vld [vmem:[%s5 + $0x114] sm:$0xf]
      %v1719 = vld [vmem:[%s5 + $0x118] sm:$0xf]
      %v1720 = vld [vmem:[%s5 + $0x11c] sm:$0xf]
      %v1721 = vld [vmem:[%s6] sm:$0x1]
      %v1794 = vunpack.c.l.b16 %v1649
      %v1795 = vunpack.c.l.b16 %v1650
      %v1796 = vunpack.c.l.b16 %v1651
      %v1797 = vunpack.c.l.b16 %v1652
      %v1798 = vunpack.c.l.b16 %v1653
      %v1799 = vunpack.c.l.b16 %v1654
      %v1800 = vunpack.c.l.b16 %v1655
      %v1801 = vunpack.c.l.b16 %v1656
      %v1802 = vunpack.c.l.b16 %v1657
      %v1803 = vunpack.c.l.b16 %v1658
      %v1804 = vunpack.c.l.b16 %v1659
      %v1805 = vunpack.c.l.b16 %v1660
      %v1806 = vunpack.c.l.b16 %v1661
      %v1807 = vunpack.c.l.b16 %v1662
      %v1808 = vunpack.c.l.b16 %v1663
      %v1809 = vunpack.c.l.b16 %v1664
      %v1810 = vunpack.c.l.b16 %v1665
      %v1811 = vunpack.c.l.b16 %v1666
      %v1812 = vunpack.c.l.b16 %v1667
      %v1813 = vunpack.c.l.b16 %v1668
      %v1814 = vunpack.c.l.b16 %v1669
      %v1815 = vunpack.c.l.b16 %v1670
      %v1816 = vunpack.c.l.b16 %v1671
      %v1817 = vunpack.c.l.b16 %v1672
      %v1818 = vunpack.c.l.b16 %v1673
      %v1819 = vunpack.c.l.b16 %v1674
      %v1820 = vunpack.c.l.b16 %v1675
      %v1821 = vunpack.c.l.b16 %v1676
      %v1822 = vunpack.c.l.b16 %v1677
      %v1823 = vunpack.c.l.b16 %v1678
      %v1824 = vunpack.c.l.b16 %v1679
      %v1825 = vunpack.c.l.b16 %v1680
      %v1826 = vunpack.c.l.b16 %v1681
      %v1827 = vunpack.c.l.b16 %v1682
      %v1828 = vunpack.c.l.b16 %v1683
      %v1829 = vunpack.c.l.b16 %v1684
      %v1830 = vunpack.c.l.b16 %v1685
      %v1831 = vunpack.c.l.b16 %v1686
      %v1832 = vunpack.c.l.b16 %v1687
      %v1833 = vunpack.c.l.b16 %v1688
      %v1834 = vunpack.c.l.b16 %v1689
      %v1835 = vunpack.c.l.b16 %v1690
      %v1836 = vunpack.c.l.b16 %v1691
      %v1837 = vunpack.c.l.b16 %v1692
      %v1838 = vunpack.c.l.b16 %v1693
      %v1839 = vunpack.c.l.b16 %v1694
      %v1840 = vunpack.c.l.b16 %v1695
      %v1841 = vunpack.c.l.b16 %v1696
      %v1842 = vunpack.c.l.b16 %v1697
      %v1843 = vunpack.c.l.b16 %v1698
      %v1844 = vunpack.c.l.b16 %v1699
      %v1845 = vunpack.c.l.b16 %v1700
      %v1846 = vunpack.c.l.b16 %v1701
      %v1847 = vunpack.c.l.b16 %v1702
      %v1848 = vunpack.c.l.b16 %v1703
      %v1849 = vunpack.c.l.b16 %v1704
      %v1850 = vunpack.c.l.b16 %v1705
      %v1851 = vunpack.c.l.b16 %v1706
      %v1852 = vunpack.c.l.b16 %v1707
      %v1853 = vunpack.c.l.b16 %v1708
      %v1854 = vunpack.c.l.b16 %v1709
      %v1855 = vunpack.c.l.b16 %v1710
      %v1856 = vunpack.c.l.b16 %v1711
      %v1857 = vunpack.c.l.b16 %v1712
      %v1858 = vunpack.c.l.b16 %v1713
      %v1859 = vunpack.c.l.b16 %v1714
      %v1860 = vunpack.c.l.b16 %v1715
      %v1861 = vunpack.c.l.b16 %v1716
      %v1862 = vunpack.c.l.b16 %v1717
      %v1863 = vunpack.c.l.b16 %v1718
      %v1864 = vunpack.c.l.b16 %v1719
      %v1865 = vunpack.c.l.b16 %v1720
      %v1866 = vpack.c.b16 %v1795, %v1794
      %v1867 = vpack.c.b16 %v1797, %v1796
      %v1868 = vpack.c.b16 %v1799, %v1798
      %v1869 = vpack.c.b16 %v1801, %v1800
      %v1870 = vpack.c.b16 %v1803, %v1802
      %v1871 = vpack.c.b16 %v1805, %v1804
      %v1872 = vpack.c.b16 %v1807, %v1806
      %v1873 = vpack.c.b16 %v1809, %v1808
      %v1874 = vpack.c.b16 %v1811, %v1810
      %v1875 = vpack.c.b16 %v1813, %v1812
      %v1876 = vpack.c.b16 %v1815, %v1814
      %v1877 = vpack.c.b16 %v1817, %v1816
      %v1878 = vpack.c.b16 %v1819, %v1818
      %v1879 = vpack.c.b16 %v1821, %v1820
      %v1880 = vpack.c.b16 %v1823, %v1822
      %v1881 = vpack.c.b16 %v1825, %v1824
      %v1882 = vpack.c.b16 %v1827, %v1826
      %v1883 = vpack.c.b16 %v1829, %v1828
      %v1884 = vpack.c.b16 %v1831, %v1830
      %v1885 = vpack.c.b16 %v1833, %v1832
      %v1886 = vpack.c.b16 %v1835, %v1834
      %v1887 = vpack.c.b16 %v1837, %v1836
      %v1888 = vpack.c.b16 %v1839, %v1838
      %v1889 = vpack.c.b16 %v1841, %v1840
      %v1890 = vpack.c.b16 %v1843, %v1842
      %v1891 = vpack.c.b16 %v1845, %v1844
      %v1892 = vpack.c.b16 %v1847, %v1846
      %v1893 = vpack.c.b16 %v1849, %v1848
      %v1894 = vpack.c.b16 %v1851, %v1850
      %v1895 = vpack.c.b16 %v1853, %v1852
      %v1896 = vpack.c.b16 %v1855, %v1854
      %v1897 = vpack.c.b16 %v1857, %v1856
      %v1898 = vpack.c.b16 %v1859, %v1858
      %v1899 = vpack.c.b16 %v1861, %v1860
      %v1900 = vpack.c.b16 %v1863, %v1862
      %v1901 = vpack.c.b16 %v1865, %v1864
      %vm1938 = vcmask 523264
      %v1940 = vsel %vm1938, %v1648, 0
      %1942 = vmatprep.subr.bf16.mxu0 0
      %1943 = vmatpush1.bf16.msra.mxu0 %v1866
      %1944 = vmatprep.subr.bf16.mxu0 0
      %1945 = vmatpush1.bf16.msra.mxu0 %v1867
      %1946 = vmatprep.subr.bf16.mxu0 0
      %1947 = vmatpush1.bf16.msra.mxu0 %v1868
      %1948 = vmatprep.subr.bf16.mxu0 0
      %1949 = vmatpush1.bf16.msra.mxu0 %v1869
      %1950 = vmatprep.subr.bf16.mxu0 0
      %1951 = vmatpush1.bf16.msra.mxu0 %v1870
      %1952 = vmatprep.subr.bf16.mxu0 0
      %1953 = vmatpush1.bf16.msra.mxu0 %v1871
      %1954 = vmatprep.subr.bf16.mxu0 0
      %1955 = vmatpush1.bf16.msra.mxu0 %v1872
      %1956 = vmatprep.subr.bf16.mxu0 0
      %1957 = vmatpush1.bf16.msra.mxu0 %v1873
      %1958 = vmatprep.subr.bf16.mxu0 0
      %1959 = vmatpush1.bf16.msra.mxu0 %v1874
      %1960 = vmatprep.subr.bf16.mxu0 0
      %1961 = vmatpush1.bf16.msra.mxu0 %v1875
      %1962 = vmatprep.subr.bf16.mxu0 0
      %1963 = vmatpush1.bf16.msra.mxu0 %v1876
      %1964 = vmatprep.subr.bf16.mxu0 0
      %1965 = vmatpush1.bf16.msra.mxu0 %v1877
      %1966 = vmatprep.subr.bf16.mxu0 0
      %1967 = vmatpush1.bf16.msra.mxu0 %v1878
      %1968 = vmatprep.subr.bf16.mxu0 0
      %1969 = vmatpush1.bf16.msra.mxu0 %v1879
      %1970 = vmatprep.subr.bf16.mxu0 0
      %1971 = vmatpush1.bf16.msra.mxu0 %v1880
      %1972 = vmatprep.subr.bf16.mxu0 0
      %1973 = vmatpush1.bf16.msra.mxu0 %v1881
      %1974 = vmatprep.mubr.bf16.mxu0 %v1645
      %1975 = vmatmul.mubr.bf16.gmra.mrb[0].mxu0 %v1644
      %v1976 = vpop.f32.mrb[0].mxu0
      %v1977 = vadd.f32 %v1721, %v1976
      %v1978 = vpop.f32.mrb[0].mxu0
      %v1979 = vpop.f32.mrb[0].mxu0
      %v1980 = vpop.f32.mrb[0].mxu0
      %1981 = vdwg.mxu0
      %1982 = vmatprep.subr.bf16.mxu0 0
      %1983 = vmatpush1.bf16.msra.mxu0 %v1882
      %1984 = vmatprep.subr.bf16.mxu0 0
      %1985 = vmatpush1.bf16.msra.mxu0 %v1883
      %1986 = vmatprep.subr.bf16.mxu0 0
      %1987 = vmatpush1.bf16.msra.mxu0 %v1884
      %1988 = vmatprep.subr.bf16.mxu0 0
      %1989 = vmatpush1.bf16.msra.mxu0 %v1885
      %1990 = vmatprep.subr.bf16.mxu0 0
      %1991 = vmatpush1.bf16.msra.mxu0 %v1886
      %1992 = vmatprep.subr.bf16.mxu0 0
      %1993 = vmatpush1.bf16.msra.mxu0 %v1887
      %1994 = vmatprep.subr.bf16.mxu0 0
      %1995 = vmatpush1.bf16.msra.mxu0 %v1888
      %1996 = vmatprep.subr.bf16.mxu0 0
      %1997 = vmatpush1.bf16.msra.mxu0 %v1889
      %1998 = vmatprep.subr.bf16.mxu0 0
      %1999 = vmatpush1.bf16.msra.mxu0 %v1890
      %2000 = vmatprep.subr.bf16.mxu0 0
      %2001 = vmatpush1.bf16.msra.mxu0 %v1891
      %2002 = vmatprep.subr.bf16.mxu0 0
      %2003 = vmatpush1.bf16.msra.mxu0 %v1892
      %2004 = vmatprep.subr.bf16.mxu0 0
      %2005 = vmatpush1.bf16.msra.mxu0 %v1893
      %2006 = vmatprep.subr.bf16.mxu0 0
      %2007 = vmatpush1.bf16.msra.mxu0 %v1894
      %2008 = vmatprep.subr.bf16.mxu0 0
      %2009 = vmatpush1.bf16.msra.mxu0 %v1895
      %2010 = vmatprep.subr.bf16.mxu0 0
      %2011 = vmatpush1.bf16.msra.mxu0 %v1896
      %2012 = vmatprep.subr.bf16.mxu0 0
      %2013 = vmatpush1.bf16.msra.mxu0 %v1897
      %2014 = vmatprep.mubr.bf16.mxu0 %v1647
      %2015 = vmatmul.mubr.bf16.gmra.mrb[0].mxu0 %v1646
      %v2016 = vpop.f32.mrb[0].mxu0
      %v2017 = vadd.f32 %v1977, %v2016
      %v2018 = vpop.f32.mrb[0].mxu0
      %v2019 = vpop.f32.mrb[0].mxu0
      %v2020 = vpop.f32.mrb[0].mxu0
      %2021 = vdwg.mxu0
      %2022 = vmatprep.subr.bf16.mxu0 0
      %2023 = vmatpush1.bf16.msra.mxu0 %v1898
      %2024 = vmatprep.subr.bf16.mxu0 0
      %2025 = vmatpush1.bf16.msra.mxu0 %v1899
      %2026 = vmatprep.subr.bf16.mxu0 0
      %2027 = vmatpush1.bf16.msra.mxu0 %v1900
      %2028 = vmatprep.subr.bf16.mxu0 0
      %2029 = vmatpush1.bf16.msra.mxu0 %v1901
      %2030 = vmatprep.subr.bf16.mxu0 0
      %2031 = vmatpush1.bf16.msra.mxu0 0
      %2032 = vmatprep.subr.bf16.mxu0 0
      %2033 = vmatpush1.bf16.msra.mxu0 0
      %2034 = vmatprep.subr.bf16.mxu0 0
      %2035 = vmatpush1.bf16.msra.mxu0 0
      %2036 = vmatprep.subr.bf16.mxu0 0
      %2037 = vmatpush1.bf16.msra.mxu0 0
      %2038 = vmatprep.subr.bf16.mxu0 0
      %2039 = vmatpush1.bf16.msra.mxu0 0
      %2040 = vmatprep.subr.bf16.mxu0 0
      %2041 = vmatpush1.bf16.msra.mxu0 0
      %2042 = vmatprep.subr.bf16.mxu0 0
      %2043 = vmatpush1.bf16.msra.mxu0 0
      %2044 = vmatprep.subr.bf16.mxu0 0
      %2045 = vmatpush1.bf16.msra.mxu0 0
      %2046 = vmatprep.subr.bf16.mxu0 0
      %2047 = vmatpush1.bf16.msra.mxu0 0
      %2048 = vmatprep.subr.bf16.mxu0 0
      %2049 = vmatpush1.bf16.msra.mxu0 0
      %2050 = vmatprep.subr.bf16.mxu0 0
      %2051 = vmatpush1.bf16.msra.mxu0 0
      %2052 = vmatprep.subr.bf16.mxu0 0
      %2053 = vmatpush1.bf16.msra.mxu0 0
      %2054 = vmatprep.mubr.bf16.mxu0 0
      %2055 = vmatmul.mubr.bf16.gmra.mrb[0].mxu0 %v1940
      %v2056 = vpop.f32.mrb[0].mxu0
      %v2057 = vadd.f32 %v2017, %v2056
      %v2058 = vpop.f32.mrb[0].mxu0
      %v2059 = vpop.f32.mrb[0].mxu0
      %v2060 = vpop.f32.mrb[0].mxu0
      %2061 = vdwg.mxu0
      %v2062 = vmax.f32 %v2057, 0.0
      %v2063 = vpack.c.bf16 %v2062, %v2062
      %vm2064 = vcmask 516096
      %vm2065 = vsmask.f32 256
      %vm2066 = vmand %vm2064, %vm2065
      %v2067 = vld [vmem:[%s274] sm:$0x1]
      %v2068 = vsel %vm2066, %v2063, %v2067
      %2069 = vst [vmem:[%s274] sm:$0x1] %v2068
      %p2070 = scmp.lt.s32.totalorder %s18, 1
      %s2071 = scalar_select %p2070, %s18, 1
      %s2072 = scalar_lea.vmem %s7, %s2071
      // Predicated region
      $region49: #{atari_a2c_forward.2} parent=47 // pred_check
        %p2073 = pneg %p188
      $region50: #{atari_a2c_forward.2} parent=47 // pred_check_branch
        %2075 = sbr.rel (%p2073) target = $region52
      $region51: #{atari_a2c_forward.2} parent=47 // pred_region
        _
      $region52: #{atari_a2c_forward.2} parent=47 // pred_fallthru
        _
    $region48: #{atari_a2c_forward.2} parent=5 // pred_fallthru
      _
    %p2076 = scmp.le.s32.totalorder 2, %s13
    // Predicated region
    $region53: #{atari_a2c_forward.2} parent=5 // pred_check
      %p2077 = pneg %p2076
    $region54: #{atari_a2c_forward.2} parent=5 // pred_check_branch
      %2079 = sbr.rel (%p2077) target = $region56
    $region55: #{atari_a2c_forward.2} parent=5 // pred_region
      %s2080 = ssub.s32 %s13, 2
      // Predicated region
      $region57: #{atari_a2c_forward.2} parent=55 // pred_check
        %p2081 = pneg %p194
      $region58: #{atari_a2c_forward.2} parent=55 // pred_check_branch
        %2083 = sbr.rel (%p2081) target = $region60
      $region59: #{atari_a2c_forward.2} parent=55 // pred_region
        %p2084 = scmp.lt.s32.totalorder %s19, 1
        %s2085 = scalar_select %p2084, %s19, 1
        %s2086 = scalar_lea.vmem %s7, %s2085
      $region60: #{atari_a2c_forward.2} parent=55 // pred_fallthru
        _
    $region56: #{atari_a2c_forward.2} parent=5 // pred_fallthru
      _
  $region6: #{atari_a2c_forward.2} parent=0 // loop_footer
    %s17 = sadd.s32 1, %s13
  $region7: #{atari_a2c_forward.2} parent=0 // loop_footer_branch
    %12 = sbr.rel target = $region3
  $region8: #{atari_a2c_forward.2} parent=0 // loop_exit
    _

</llo_original>
